<compile_context>
chip_gen: v7x
topology: tpu7x:2x2x1
jax: 0.10.0
libtpu: 0.0.40
codegen_flags: <defaults>
</compile_context>

<pallas_src>
from functools import partial

import jax
import jax.numpy as jnp
from jax.experimental import pallas as pl
from jax.experimental.pallas import tpu as pltpu

# ----------------------------- configuration -------------------------------
N_SIM = 4          # cfg['n_simulations']
HER_STATE = 2      # cfg['her_state_size']
STATE_SIZE = 3
HISTORY = 2        # cfg['history_count']
ACTION_SIZE = 3
ATT_HIDDEN = 32    # cfg['attention_hidden']
AMPLIFIER = 2.0    # cfg['attention_amplifier']

B0 = 8                                                   # rows per problem (divisible by N_SIM)
F_GRAD = 16                                              # per-row gradient feature dim
STATE_DIM = HER_STATE + STATE_SIZE * HISTORY             # 8
D_IN = ACTION_SIZE + STATE_DIM                           # 11 (encoding input)


# ------------------------------- kernel ------------------------------------
def sim_attention_kernel(x_ref, dt_ref, w_ref, out_ref, *,
                         pb, b0, n_sim, n_groups, d_in, hidden, amplifier):
    """One grid step = `pb` independent (b0, feat) problems."""
    f32 = jnp.float32

    x = x_ref[...]                                      # (pb, b0, d_in+1+feat)
    data_t = dt_ref[...]                                # (pb, feat, b0)  = data^T per problem
    w = w_ref[...]                                      # (rows, hidden + 2*b0 + 1)

    enc_in = x[:, :, :d_in + 1]                         # (pb, b0, d_in+1)  [state|action|1]
    data = x[:, :, d_in + 1:]                           # (pb, b0, feat)

    w_enc = w[:d_in + 1, :hidden]                       # (d_in+1, hidden)  [W_enc^T ; b_enc]
    w_a = w[:b0, hidden:hidden + b0]                    # (b0, b0) expanded attn half, perm folded
    w_b = w[:b0, hidden + b0:hidden + 2 * b0]           # (b0, b0) expanded data half, perm folded
    b_o = w[:b0, hidden + 2 * b0:hidden + 2 * b0 + 1]   # (b0, 1)  expanded output bias

    # --- encoder: relu([state|action|1] @ [W_enc^T ; b_enc]) ---
    # M dimension stacked over all problems of this grid step (one MXU push).
    att = jnp.dot(enc_in.reshape(pb * b0, d_in + 1), w_enc,
                  preferred_element_type=f32)
    att = jnp.maximum(att, 0.0).reshape(pb, b0, hidden)

    # --- output layer, "inputs" half + per-group accumulation of the attn half
    #     (no sublane concat of s2 blocks anywhere). Broadcasts hoisted.
    w_a_bc = jnp.broadcast_to(w_a, (pb, b0, b0))
    w_b_bc = jnp.broadcast_to(w_b, (pb, b0, b0))
    z = jnp.einsum('prk,pkf->prf', w_b_bc, data, preferred_element_type=f32)

    # per-group attention, batched over the pb problems of this step.
    # n_groups is tiny (2) so a static loop is fine.
    # TODO(synk): switch to lax.fori_loop(unroll=True) if n_groups ever grows.
    for b in range(n_groups):
        sl = slice(b * n_sim, (b + 1) * n_sim)
        att_b = att[:, sl, :]                           # (pb, n, hidden)
        d_bt = data_t[:, :, sl]                         # (pb, feat, n)
        s1 = jnp.einsum('pfn,pnh->pfh', d_bt, att_b,
                        preferred_element_type=f32)     # (pb, feat, hidden)
        m = jnp.max(s1, axis=1, keepdims=True)
        ls = s1 - (jnp.log(jnp.sum(jnp.exp(s1 - m), axis=1, keepdims=True)) + m)
        s2 = jnp.einsum('pnh,pfh->pnf', att_b, ls,
                        preferred_element_type=f32)     # (pb, n, feat)
        z = z + jnp.einsum('prj,pjf->prf', w_a_bc[:, :, sl], s2,
                           preferred_element_type=f32)

    z = z + b_o                                         # (b0, 1) broadcast add
    out_ref[...] = (jax.nn.sigmoid(z) * data * amplifier).astype(out_ref.dtype)


# --------------------- one-time parameter preparation -----------------------
def prepare_params(w_enc, b_enc, w_out, b_out, *, n_sim, batch_rows):
    """Fold / expand / pack all parameters into ONE weight slab.

    Call this once (e.g. at module init) and reuse the returned slab for every
    forward call: it holds
      * [W_enc^T ; b_enc]  (encoder bias folded via ones-column augmentation),
      * W_out split into attn/data halves, kron-expanded to (b0, b0) and row
        permuted so the torch `output.t().view(data.shape)` reshuffle is
        already applied (fine at b0=8; O(b0^2) -- switch to the native block
        structure if b0 ever grows past ~32),
      * the matching expanded output bias.
    """
    b0 = batch_rows
    n = n_sim
    g = b0 // n
    h, d_in = w_enc.shape
    f32 = jnp.float32

    w_enc_aug = jnp.concatenate([w_enc.T, b_enc[None, :]], axis=0).astype(f32)

    rows = jnp.arange(b0)
    perm = (rows % g) * n + (rows // g)                 # output row r -> block-diag row
    eye_g = jnp.eye(g, dtype=f32)
    w_exp_a = jnp.kron(eye_g, w_out[:, :n].astype(f32))[perm]   # (b0, b0)
    w_exp_b = jnp.kron(eye_g, w_out[:, n:].astype(f32))[perm]   # (b0, b0)
    b_out_exp = b_out.astype(f32)[rows // g]                     # (b0,)

    slab = jnp.zeros((max(d_in + 1, b0), h + 2 * b0 + 1), f32)
    slab = slab.at[:d_in + 1, :h].set(w_enc_aug)
    slab = slab.at[:b0, h:h + b0].set(w_exp_a)
    slab = slab.at[:b0, h + b0:h + 2 * b0].set(w_exp_b)
    slab = slab.at[:b0, h + 2 * b0].set(b_out_exp)
    return slab


# ------------------------------- wrappers -----------------------------------
def simulation_attention_batched(gradients, state, action, w_slab, *,
                                 n_sim=N_SIM, amplifier=AMPLIFIER,
                                 problems_per_step=32):
    """Batched forward: gradients (P,b0,f), state (P,b0,s), action (P,b0,a)."""
    p, b0, feat = gradients.shape
    d_in = state.shape[2] + action.shape[2]
    hidden = w_slab.shape[1] - 2 * b0 - 1
    assert b0 % n_sim == 0, "rows per problem must be divisible by n_simulations"
    g = b0 // n_sim
    pb = min(problems_per_step, max(p, 1))
    f32 = jnp.float32

    # Per-call input packing: ONE lane-concat slab + data^T (so the kernel never
    # transposes and the old separate state/action/data DMAs collapse to two).
    ones = jnp.ones((p, b0, 1), f32)
    x = jnp.concatenate([state.astype(f32), action.astype(f32), ones,
                         gradients.astype(f32)], axis=-1)    # (p, b0, d_in+1+feat)
    data_t = jnp.swapaxes(gradients.astype(f32), 1, 2)       # (p, feat, b0)

    # pad the problem axis up to a multiple of the per-step problem count
    # (zero padding is NaN-safe through the whole pipeline).
    p_pad = ((p + pb - 1) // pb) * pb
    if p_pad != p:
        x = jnp.pad(x, ((0, p_pad - p), (0, 0), (0, 0)))
        data_t = jnp.pad(data_t, ((0, p_pad - p), (0, 0), (0, 0)))
    steps = p_pad // pb

    kernel = partial(sim_attention_kernel, pb=pb, b0=b0, n_sim=n_sim,
                     n_groups=g, d_in=d_in, hidden=hidden, amplifier=amplifier)

    out = pl.pallas_call(
        kernel,
        out_shape=jax.ShapeDtypeStruct((p_pad, b0, feat), gradients.dtype),
        grid_spec=pltpu.PrefetchScalarGridSpec(
            num_scalar_prefetch=0,
            grid=(steps,),
            in_specs=[
                pl.BlockSpec((pb, b0, d_in + 1 + feat), lambda i: (i, 0, 0)),
                pl.BlockSpec((pb, feat, b0), lambda i: (i, 0, 0)),
                pl.BlockSpec(w_slab.shape, lambda i: (0, 0)),   # constant block: fetched once
            ],
            out_specs=pl.BlockSpec((pb, b0, feat), lambda i: (i, 0, 0)),
        ),
        compiler_params=pltpu.CompilerParams(
            # Leading axis is a true problem batch -> both v7x TensorCores split it;
            # harmless no-op on the single-TC v5e/v6e.
            dimension_semantics=("parallel",),
        ),
    )(x, data_t, w_slab)
    return out[:p]


def simulation_attention(gradients, state, action, w_slab, *,
                         n_sim=N_SIM, amplifier=AMPLIFIER):
    """Single-problem forward (original module signature).

    NOTE: for a truly single tiny forward the pallas_call launch overhead
    dominates; prefer simulation_attention_batched for throughput.
    """
    out = simulation_attention_batched(
        gradients[None], state[None], action[None], w_slab,
        n_sim=n_sim, amplifier=amplifier, problems_per_step=1)
    return out[0]


# ---------------------------- pure-JAX reference -----------------------------
def reference(gradients, state, action, params):
    w_enc, b_enc, w_out, b_out = params
    att = jax.nn.relu(jnp.concatenate([state, action], axis=1) @ w_enc.T + b_enc)
    b0, f = gradients.shape
    n = N_SIM
    bg = b0 // n
    inputs = gradients.reshape(bg, n, f)
    attg = att.reshape(bg, n, -1)
    attn = jnp.einsum('bnf,bnh->bfh', inputs, attg)
    attn = jax.nn.log_softmax(attn, axis=1)
    attn = jnp.einsum('bfh,bnh->bfn', attn, attg)
    concat = jnp.concatenate([jnp.swapaxes(attn, 1, 2), inputs], axis=1)
    concat = jnp.swapaxes(concat, 1, 2).reshape(-1, 2 * n)
    output = jax.nn.sigmoid(concat @ w_out.T + b_out)
    return output.T.reshape(gradients.shape) * gradients * AMPLIFIER


# --------------------------------- main --------------------------------------
if __name__ == "__main__":
    P = 16  # number of independent problems (kept small for the demo)

    key = jax.random.PRNGKey(0)
    k_g, k_s, k_a, k_we, k_be, k_wo, k_bo = jax.random.split(key, 7)

    gradients = jax.random.normal(k_g, (P, B0, F_GRAD), dtype=jnp.float32)
    state = jax.random.normal(k_s, (P, B0, STATE_DIM), dtype=jnp.float32)
    action = jax.random.normal(k_a, (P, B0, ACTION_SIZE), dtype=jnp.float32)

    # nn.Linear-shaped parameters: W (out, in), b (out,)
    w_enc = 0.1 * jax.random.normal(k_we, (ATT_HIDDEN, D_IN), dtype=jnp.float32)
    b_enc = 0.1 * jax.random.normal(k_be, (ATT_HIDDEN,), dtype=jnp.float32)
    w_out = 0.1 * jax.random.normal(k_wo, (N_SIM, 2 * N_SIM), dtype=jnp.float32)
    b_out = 0.1 * jax.random.normal(k_bo, (N_SIM,), dtype=jnp.float32)
    params = (w_enc, b_enc, w_out, b_out)

    # one-time (cached) parameter preparation -- reused for every forward call
    w_slab = jax.block_until_ready(
        prepare_params(w_enc, b_enc, w_out, b_out, n_sim=N_SIM, batch_rows=B0))

    # batched forward: 8 problems per grid step -> 2-step "parallel" grid
    fwd = jax.jit(partial(simulation_attention_batched,
                          n_sim=N_SIM, amplifier=AMPLIFIER, problems_per_step=8))
    out = jax.block_until_ready(fwd(gradients, state, action, w_slab))

    ref = jax.vmap(lambda g_, s_, a_: reference(g_, s_, a_, params))(
        gradients, state, action)
    assert out.shape == gradients.shape
    assert jnp.allclose(out, ref, rtol=1e-5, atol=1e-5), (
        f"max abs err {jnp.max(jnp.abs(out - ref))}")

    # single-problem path (original module signature)
    out1 = jax.block_until_ready(
        simulation_attention(gradients[0], state[0], action[0], w_slab))
    assert out1.shape == gradients[0].shape
    assert jnp.allclose(out1, ref[0], rtol=1e-5, atol=1e-5), (
        f"max abs err {jnp.max(jnp.abs(out1 - ref[0]))}")

    print("KERNEL_OK")
</pallas_src>

<mosaic_0001>
module attributes {stable_mosaic.version = 11 : i64} {
  func.func @sim_attention_kernel(%arg0: i32, %arg1: memref<8x8x28xf32, #tpu.memory_space<vmem>>, %arg2: memref<8x16x8xf32, #tpu.memory_space<vmem>>, %arg3: memref<12x49xf32, #tpu.memory_space<vmem>>, %arg4: memref<8x8x16xf32, #tpu.memory_space<vmem>>) attributes {dimension_semantics = [#tpu.dimension_semantics<parallel>], iteration_bounds = array<i64: 2>, scalar_prefetch = 0 : i64, scratch_operands = 0 : i64, tpu.core_type = #tpu.core_type<tc>, window_params = [{transform_indices = @transform_0, window_bounds = array<i64: 8, 8, 28>}, {transform_indices = @transform_1, window_bounds = array<i64: 8, 16, 8>}, {pipeline_mode = #tpu.pipeline_mode<synchronous>, transform_indices = @transform_2, window_bounds = array<i64: 12, 49>}, {transform_indices = @transform_3, window_bounds = array<i64: 8, 8, 16>}]} {
    %c0 = arith.constant 0 : index
    %c0_0 = arith.constant 0 : index
    %c0_1 = arith.constant 0 : index
    %0 = vector.load %arg1[%c0, %c0_0, %c0_1] : memref<8x8x28xf32, #tpu.memory_space<vmem>>, vector<8x8x28xf32>
    %c0_2 = arith.constant 0 : index
    %c0_3 = arith.constant 0 : index
    %c0_4 = arith.constant 0 : index
    %1 = vector.load %arg2[%c0_2, %c0_3, %c0_4] : memref<8x16x8xf32, #tpu.memory_space<vmem>>, vector<8x16x8xf32>
    %c0_5 = arith.constant 0 : index
    %c0_6 = arith.constant 0 : index
    %2 = vector.load %arg3[%c0_5, %c0_6] : memref<12x49xf32, #tpu.memory_space<vmem>>, vector<12x49xf32>
    %3 = vector.extract_strided_slice %0 {offsets = [0, 0, 0], sizes = [8, 8, 12], strides = [1, 1, 1]} : vector<8x8x28xf32> to vector<8x8x12xf32>
    %4 = vector.extract_strided_slice %0 {offsets = [0, 0, 12], sizes = [8, 8, 16], strides = [1, 1, 1]} : vector<8x8x28xf32> to vector<8x8x16xf32>
    %5 = vector.extract_strided_slice %2 {offsets = [0, 0], sizes = [12, 32], strides = [1, 1]} : vector<12x49xf32> to vector<12x32xf32>
    %6 = vector.extract_strided_slice %2 {offsets = [0, 32], sizes = [8, 8], strides = [1, 1]} : vector<12x49xf32> to vector<8x8xf32>
    %7 = vector.extract_strided_slice %2 {offsets = [0, 40], sizes = [8, 8], strides = [1, 1]} : vector<12x49xf32> to vector<8x8xf32>
    %8 = vector.extract_strided_slice %2 {offsets = [0, 48], sizes = [8, 1], strides = [1, 1]} : vector<12x49xf32> to vector<8x1xf32>
    %9 = vector.shape_cast %3 : vector<8x8x12xf32> to vector<64x12xf32>
    %cst = arith.constant dense<0.000000e+00> : vector<64x32xf32>
    %10 = tpu.matmul %9, %5, %cst {dimension_numbers = #tpu.dot_dimension_numbers<[1], [0], [0], [1], [0, 0, 1, 1], [], []>} : vector<64x12xf32>, vector<12x32xf32>, vector<64x32xf32> -> vector<64x32xf32>
    %cst_7 = arith.constant 0.000000e+00 : f32
    %11 = vector.broadcast %cst_7 : f32 to vector<64x32xf32>
    %12 = arith.maximumf %10, %11 : vector<64x32xf32>
    %13 = vector.shape_cast %12 : vector<64x32xf32> to vector<8x8x32xf32>
    %14 = vector.shape_cast %6 : vector<8x8xf32> to vector<1x8x8xf32>
    %15 = vector.broadcast %14 : vector<1x8x8xf32> to vector<8x8x8xf32>
    %16 = vector.shape_cast %7 : vector<8x8xf32> to vector<1x8x8xf32>
    %17 = vector.broadcast %16 : vector<1x8x8xf32> to vector<8x8x8xf32>
    "tpu.trace_start"() <{level = 10 : i32, message = "prk,pkf->prf"}> : () -> ()
    %cst_8 = arith.constant dense<0.000000e+00> : vector<8x8x16xf32>
    %18 = tpu.matmul %17, %4, %cst_8 {dimension_numbers = #tpu.dot_dimension_numbers<[2], [1], [1], [2], [0, 0, 0, 1, 1, 2], [0], [0]>} : vector<8x8x8xf32>, vector<8x8x16xf32>, vector<8x8x16xf32> -> vector<8x8x16xf32>
    "tpu.trace_stop"() : () -> ()
    %19 = vector.extract_strided_slice %13 {offsets = [0, 0, 0], sizes = [8, 4, 32], strides = [1, 1, 1]} : vector<8x8x32xf32> to vector<8x4x32xf32>
    %20 = vector.extract_strided_slice %1 {offsets = [0, 0, 0], sizes = [8, 16, 4], strides = [1, 1, 1]} : vector<8x16x8xf32> to vector<8x16x4xf32>
    "tpu.trace_start"() <{level = 10 : i32, message = "pfn,pnh->pfh"}> : () -> ()
    %cst_9 = arith.constant dense<0.000000e+00> : vector<8x16x32xf32>
    %21 = tpu.matmul %20, %19, %cst_9 {dimension_numbers = #tpu.dot_dimension_numbers<[2], [1], [1], [2], [0, 0, 0, 1, 1, 2], [0], [0]>} : vector<8x16x4xf32>, vector<8x4x32xf32>, vector<8x16x32xf32> -> vector<8x16x32xf32>
    "tpu.trace_stop"() : () -> ()
    %cst_10 = arith.constant dense<0xFF800000> : vector<8x32xf32>
    %22 = vector.multi_reduction <maximumf>, %21, %cst_10 [1] : vector<8x16x32xf32> to vector<8x32xf32>
    %23 = vector.shape_cast %22 : vector<8x32xf32> to vector<8x1x32xf32>
    %24 = vector.broadcast %23 : vector<8x1x32xf32> to vector<8x16x32xf32>
    %25 = arith.subf %21, %24 : vector<8x16x32xf32>
    %26 = math.exp %25 : vector<8x16x32xf32>
    %cst_11 = arith.constant dense<0.000000e+00> : vector<8x32xf32>
    %27 = vector.multi_reduction <add>, %26, %cst_11 [1] : vector<8x16x32xf32> to vector<8x32xf32>
    %28 = vector.shape_cast %27 : vector<8x32xf32> to vector<8x1x32xf32>
    %29 = math.log %28 : vector<8x1x32xf32>
    %30 = arith.addf %29, %23 : vector<8x1x32xf32>
    %31 = vector.broadcast %30 : vector<8x1x32xf32> to vector<8x16x32xf32>
    %32 = arith.subf %21, %31 : vector<8x16x32xf32>
    "tpu.trace_start"() <{level = 10 : i32, message = "pnh,pfh->pnf"}> : () -> ()
    %cst_12 = arith.constant dense<0.000000e+00> : vector<8x4x16xf32>
    %33 = tpu.matmul %19, %32, %cst_12 {dimension_numbers = #tpu.dot_dimension_numbers<[2], [2], [1], [1], [0, 0, 0, 1, 1, 1], [0], [0]>} : vector<8x4x32xf32>, vector<8x16x32xf32>, vector<8x4x16xf32> -> vector<8x4x16xf32>
    "tpu.trace_stop"() : () -> ()
    %34 = vector.extract_strided_slice %15 {offsets = [0, 0, 0], sizes = [8, 8, 4], strides = [1, 1, 1]} : vector<8x8x8xf32> to vector<8x8x4xf32>
    "tpu.trace_start"() <{level = 10 : i32, message = "prj,pjf->prf"}> : () -> ()
    %cst_13 = arith.constant dense<0.000000e+00> : vector<8x8x16xf32>
    %35 = tpu.matmul %34, %33, %cst_13 {dimension_numbers = #tpu.dot_dimension_numbers<[2], [1], [1], [2], [0, 0, 0, 1, 1, 2], [0], [0]>} : vector<8x8x4xf32>, vector<8x4x16xf32>, vector<8x8x16xf32> -> vector<8x8x16xf32>
    "tpu.trace_stop"() : () -> ()
    %36 = arith.addf %18, %35 : vector<8x8x16xf32>
    %37 = vector.extract_strided_slice %13 {offsets = [0, 4, 0], sizes = [8, 4, 32], strides = [1, 1, 1]} : vector<8x8x32xf32> to vector<8x4x32xf32>
    %38 = vector.extract_strided_slice %1 {offsets = [0, 0, 4], sizes = [8, 16, 4], strides = [1, 1, 1]} : vector<8x16x8xf32> to vector<8x16x4xf32>
    "tpu.trace_start"() <{level = 10 : i32, message = "pfn,pnh->pfh"}> : () -> ()
    %cst_14 = arith.constant dense<0.000000e+00> : vector<8x16x32xf32>
    %39 = tpu.matmul %38, %37, %cst_14 {dimension_numbers = #tpu.dot_dimension_numbers<[2], [1], [1], [2], [0, 0, 0, 1, 1, 2], [0], [0]>} : vector<8x16x4xf32>, vector<8x4x32xf32>, vector<8x16x32xf32> -> vector<8x16x32xf32>
    "tpu.trace_stop"() : () -> ()
    %cst_15 = arith.constant dense<0xFF800000> : vector<8x32xf32>
    %40 = vector.multi_reduction <maximumf>, %39, %cst_15 [1] : vector<8x16x32xf32> to vector<8x32xf32>
    %41 = vector.shape_cast %40 : vector<8x32xf32> to vector<8x1x32xf32>
    %42 = vector.broadcast %41 : vector<8x1x32xf32> to vector<8x16x32xf32>
    %43 = arith.subf %39, %42 : vector<8x16x32xf32>
    %44 = math.exp %43 : vector<8x16x32xf32>
    %cst_16 = arith.constant dense<0.000000e+00> : vector<8x32xf32>
    %45 = vector.multi_reduction <add>, %44, %cst_16 [1] : vector<8x16x32xf32> to vector<8x32xf32>
    %46 = vector.shape_cast %45 : vector<8x32xf32> to vector<8x1x32xf32>
    %47 = math.log %46 : vector<8x1x32xf32>
    %48 = arith.addf %47, %41 : vector<8x1x32xf32>
    %49 = vector.broadcast %48 : vector<8x1x32xf32> to vector<8x16x32xf32>
    %50 = arith.subf %39, %49 : vector<8x16x32xf32>
    "tpu.trace_start"() <{level = 10 : i32, message = "pnh,pfh->pnf"}> : () -> ()
    %cst_17 = arith.constant dense<0.000000e+00> : vector<8x4x16xf32>
    %51 = tpu.matmul %37, %50, %cst_17 {dimension_numbers = #tpu.dot_dimension_numbers<[2], [2], [1], [1], [0, 0, 0, 1, 1, 1], [0], [0]>} : vector<8x4x32xf32>, vector<8x16x32xf32>, vector<8x4x16xf32> -> vector<8x4x16xf32>
    "tpu.trace_stop"() : () -> ()
    %52 = vector.extract_strided_slice %15 {offsets = [0, 0, 4], sizes = [8, 8, 4], strides = [1, 1, 1]} : vector<8x8x8xf32> to vector<8x8x4xf32>
    "tpu.trace_start"() <{level = 10 : i32, message = "prj,pjf->prf"}> : () -> ()
    %cst_18 = arith.constant dense<0.000000e+00> : vector<8x8x16xf32>
    %53 = tpu.matmul %52, %51, %cst_18 {dimension_numbers = #tpu.dot_dimension_numbers<[2], [1], [1], [2], [0, 0, 0, 1, 1, 2], [0], [0]>} : vector<8x8x4xf32>, vector<8x4x16xf32>, vector<8x8x16xf32> -> vector<8x8x16xf32>
    "tpu.trace_stop"() : () -> ()
    %54 = arith.addf %36, %53 : vector<8x8x16xf32>
    %55 = vector.shape_cast %8 : vector<8x1xf32> to vector<1x8x1xf32>
    %56 = vector.broadcast %55 : vector<1x8x1xf32> to vector<8x8x16xf32>
    %57 = arith.addf %54, %56 : vector<8x8x16xf32>
    %58 = arith.negf %57 : vector<8x8x16xf32>
    %59 = math.exp %58 : vector<8x8x16xf32>
    %cst_19 = arith.constant 1.000000e+00 : f32
    %60 = vector.broadcast %cst_19 : f32 to vector<8x8x16xf32>
    %61 = arith.addf %60, %59 : vector<8x8x16xf32>
    %62 = arith.divf %60, %61 : vector<8x8x16xf32>
    %63 = arith.mulf %62, %4 : vector<8x8x16xf32>
    %cst_20 = arith.constant 2.000000e+00 : f32
    %64 = vector.broadcast %cst_20 : f32 to vector<8x8x16xf32>
    %65 = arith.mulf %63, %64 : vector<8x8x16xf32>
    %c0_21 = arith.constant 0 : index
    %c0_22 = arith.constant 0 : index
    %c0_23 = arith.constant 0 : index
    %66 = vector.load %arg4[%c0_21, %c0_22, %c0_23] : memref<8x8x16xf32, #tpu.memory_space<vmem>>, vector<8x8x16xf32>
    tpu.vector_store %arg4[%c0_21, %c0_22, %c0_23], %65 {strides = array<i32>} : memref<8x8x16xf32, #tpu.memory_space<vmem>>, vector<8x8x16xf32>,
    return
  }
  func.func @transform_0(%arg0: i32) -> (i32, i32, i32) {
    %c0_i32 = arith.constant 0 : i32
    %c0_i32_0 = arith.constant 0 : i32
    %c0_i32_1 = arith.constant 0 : i32
    return %arg0, %c0_i32, %c0_i32_0 : i32, i32, i32
  }
  func.func @transform_1(%arg0: i32) -> (i32, i32, i32) {
    %c0_i32 = arith.constant 0 : i32
    %c0_i32_0 = arith.constant 0 : i32
    %c0_i32_1 = arith.constant 0 : i32
    return %arg0, %c0_i32, %c0_i32_0 : i32, i32, i32
  }
  func.func @transform_2(%arg0: i32) -> (i32, i32) {
    %c0_i32 = arith.constant 0 : i32
    %c0_i32_0 = arith.constant 0 : i32
    %c0_i32_1 = arith.constant 0 : i32
    return %c0_i32, %c0_i32_0 : i32, i32
  }
  func.func @transform_3(%arg0: i32) -> (i32, i32, i32) {
    %c0_i32 = arith.constant 0 : i32
    %c0_i32_0 = arith.constant 0 : i32
    %c0_i32_1 = arith.constant 0 : i32
    return %arg0, %c0_i32, %c0_i32_0 : i32, i32, i32
  }
}

</mosaic_0001>

<llo_original>
// kernel: simulation_attention_batched.1
$region0: #{simulation_attention_batched.1}
  #allocation0 [shape = 'u32[]', space=smem, size = 0x4, offset = 0x4, fixed_abs, tag = 'smem constant byte address 0x4 - core index']
  #allocation1 [shape = 'u32[144,128]{1,0:T(1,128)}', space=vmem, size = 0x12000, scoped, tag = 'internal scratch']
  %s0 = inlined_call_operand.vmem [shape: f32[16,8,28], index: 0, kind: input, shape index: {}]
  %s1 = inlined_call_operand.vmem [shape: f32[16,16,8], index: 1, kind: input, shape index: {}]
  %s2 = inlined_call_operand.vmem [shape: f32[12,49], index: 2, kind: input, shape index: {}]
  %s3 = inlined_call_operand.hbm [shape: f32[16,8,16], index: 3, kind: output, shape index: {}]
  %s4 = sld [smem:[#allocation0]]
  $region45: #{simulation_attention_batched.1} parent=0
    _
  %s6 = ssub.s32 1, %s4
  %s7 = scalar_select 0, %s6, %s4
  $region1: #{simulation_attention_batched.1} parent=0
    #allocation2 [shape = 'u8[65536]{0}', space=vmem, size = 0x10000, scoped, tag = 'output window, operand 0']
    #allocation3 [shape = 's32[2]{0}', space=sflag, size = 0x8, scoped, tag = 'scoped memory for simulation_attention_batched.1']
    %8 = vsyncpa [#allocation3], 0
    %s9 = scalar_lea.sflag [#allocation3], 1
    %10 = vsyncpa %s9, 0
    loop: start=0, step=1, limit=4
    $region2: #{simulation_attention_batched.1} parent=1 // loop_pre_header
      _
    $region3: #{simulation_attention_batched.1} parent=1 // loop_header
      %s12 = sphi 0, %s16
      %p13 = scmp.ge.s32.totalorder %s12, 4
      %s22 = sphi 0, %s24
      %s25 = sphi 0, %s22
      %s26 = sphi 0, %s25
      %s42 = sphi 0, %s26
      %s48 = sphi 0, %s50
      %s51 = sphi 0, %s48
      %s52 = sphi 0, %s51
      %s68 = sphi 0, %s52
      %s72 = sphi 0, %s72
      %s74 = sphi 0, %s72
      %s75 = sphi 0, %s74
      %s89 = sphi 0, %s75
      %s95 = sphi 0, %s97
      %s98 = sphi 0, %s95
      %s99 = sphi 0, %s98
      %s115 = sphi 0, %s99
    $region4: #{simulation_attention_batched.1} parent=1 // loop_header_branch
      %15 = sbr.rel (%p13) target = $region8
    $region5: #{simulation_attention_batched.1} parent=1 // loop_body
      %s17 = ssub.s32 %s12, 1
      %s18 = ssub.s32 %s12, 2
      %s19 = sadd.s32 %s12, 1
      %s20 = ssub.s32 %s12, %s19
      %p21 = scmp.eq.s32.totalorder %s20, 0
      %s23 = sadd.s32 %s22, 1
      %s24 = scalar_select %p21, %s22, %s23
      %p27 = pneg %p21
      %p28 = scmp.eq.s32.totalorder %s12, 1
      %p29 = por %p27, %p28
      %p30 = scmp.ne.s32.totalorder %s22, %s25
      %p31 = scmp.eq.s32.totalorder %s12, 0
      %p32 = por %p30, %p31
      %p33 = scmp.ne.s32.totalorder %s22, %s25
      %p34 = scmp.eq.s32.totalorder %s17, 1
      %p35 = por %p33, %p34
      %p36 = scmp.ne.s32.totalorder %s25, %s26
      %p37 = scmp.eq.s32.totalorder %s17, 0
      %p38 = por %p36, %p37
      %p39 = scmp.ne.s32.totalorder %s25, %s26
      %p40 = scmp.eq.s32.totalorder %s18, 1
      %p41 = por %p39, %p40
      %p43 = scmp.ne.s32.totalorder %s26, %s42
      %p44 = scmp.eq.s32.totalorder %s18, 0
      %p45 = por %p43, %p44
      %s46 = ssub.s32 %s12, %s19
      %p47 = scmp.eq.s32.totalorder %s46, 0
      %s49 = sadd.s32 %s48, 1
      %s50 = scalar_select %p47, %s48, %s49
      %p53 = pneg %p47
      %p54 = scmp.eq.s32.totalorder %s12, 1
      %p55 = por %p53, %p54
      %p56 = scmp.ne.s32.totalorder %s48, %s51
      %p57 = scmp.eq.s32.totalorder %s12, 0
      %p58 = por %p56, %p57
      %p59 = scmp.ne.s32.totalorder %s48, %s51
      %p60 = scmp.eq.s32.totalorder %s17, 1
      %p61 = por %p59, %p60
      %p62 = scmp.ne.s32.totalorder %s51, %s52
      %p63 = scmp.eq.s32.totalorder %s17, 0
      %p64 = por %p62, %p63
      %p65 = scmp.ne.s32.totalorder %s51, %s52
      %p66 = scmp.eq.s32.totalorder %s18, 1
      %p67 = por %p65, %p66
      %p69 = scmp.ne.s32.totalorder %s52, %s68
      %p70 = scmp.eq.s32.totalorder %s18, 0
      %p71 = por %p69, %p70
      %s73 = sadd.s32 %s72, 1
      %p76 = scmp.eq.s32.totalorder %s12, 1
      %p77 = scmp.ne.s32.totalorder %s72, %s74
      %p78 = scmp.eq.s32.totalorder %s12, 0
      %p79 = por %p77, %p78
      %p80 = scmp.ne.s32.totalorder %s72, %s74
      %p81 = scmp.eq.s32.totalorder %s17, 1
      %p82 = por %p80, %p81
      %p83 = scmp.ne.s32.totalorder %s74, %s75
      %p84 = scmp.eq.s32.totalorder %s17, 0
      %p85 = por %p83, %p84
      %p86 = scmp.ne.s32.totalorder %s74, %s75
      %p87 = scmp.eq.s32.totalorder %s18, 1
      %p88 = por %p86, %p87
      %p90 = scmp.ne.s32.totalorder %s75, %s89
      %p91 = scmp.eq.s32.totalorder %s18, 0
      %p92 = por %p90, %p91
      %s93 = ssub.s32 %s12, %s19
      %p94 = scmp.eq.s32.totalorder %s93, 0
      %s96 = sadd.s32 %s95, 1
      %s97 = scalar_select %p94, %s95, %s96
      %p100 = pneg %p94
      %p101 = scmp.eq.s32.totalorder %s12, 1
      %p102 = por %p100, %p101
      %p103 = scmp.ne.s32.totalorder %s95, %s98
      %p104 = scmp.eq.s32.totalorder %s12, 0
      %p105 = por %p103, %p104
      %p106 = scmp.ne.s32.totalorder %s95, %s98
      %p107 = scmp.eq.s32.totalorder %s17, 1
      %p108 = por %p106, %p107
      %p109 = scmp.ne.s32.totalorder %s98, %s99
      %p110 = scmp.eq.s32.totalorder %s17, 0
      %p111 = por %p109, %p110
      %p112 = scmp.ne.s32.totalorder %s98, %s99
      %p113 = scmp.eq.s32.totalorder %s18, 1
      %p114 = por %p112, %p113
      %p116 = scmp.ne.s32.totalorder %s99, %s115
      %p117 = scmp.eq.s32.totalorder %s18, 0
      %p118 = por %p116, %p117
      %p119 = scmp.le.s32.totalorder 1, %s12
      %p120 = scmp.lt.s32.totalorder %s12, 3
      %p121 = pnand %p119, %p120
      %p122 = pneg %p121
      // Predicated region
      $region9: #{simulation_attention_batched.1} parent=5 // pred_check
        _
      $region10: #{simulation_attention_batched.1} parent=5 // pred_check_branch
        %124 = sbr.rel (%p121) target = $region12
      $region11: #{simulation_attention_batched.1} parent=5 // pred_region
        %s125 = ssub.s32 %s12, 1
        // Predicated region
        $region13: #{simulation_attention_batched.1} parent=11 // pred_check
          %p126 = pneg %p85
        $region14: #{simulation_attention_batched.1} parent=11 // pred_check_branch
          %128 = sbr.rel (%p126) target = $region16
        $region15: #{simulation_attention_batched.1} parent=11 // pred_region
          _
        $region16: #{simulation_attention_batched.1} parent=11 // pred_fallthru
          _
      $region12: #{simulation_attention_batched.1} parent=5 // pred_fallthru
        _
      %p129 = scmp.lt.s32.totalorder %s12, 2
      // Predicated region
      $region17: #{simulation_attention_batched.1} parent=5 // pred_check
        %p130 = pneg %p129
      $region18: #{simulation_attention_batched.1} parent=5 // pred_check_branch
        %132 = sbr.rel (%p130) target = $region20
      $region19: #{simulation_attention_batched.1} parent=5 // pred_region
        // Predicated region
        $region21: #{simulation_attention_batched.1} parent=19 // pred_check
          %p133 = pneg %p32
        $region22: #{simulation_attention_batched.1} parent=19 // pred_check_branch
          %135 = sbr.rel (%p133) target = $region24
        $region23: #{simulation_attention_batched.1} parent=19 // pred_region
          %s136 = smul.u32 8, %s12
          %p137 = scmp.lt.s32.totalorder %s136, 15
          %s138 = scalar_select %p137, %s136, 15
          %s139 = smul.addr %s138, 8
          %s140 = scalar_lea.vmem %s0, %s139
          %s141 = smul.u32 8, %s12
        $region24: #{simulation_attention_batched.1} parent=19 // pred_fallthru
          _
        // Predicated region
        $region25: #{simulation_attention_batched.1} parent=19 // pred_check
          %p142 = pneg %p58
        $region26: #{simulation_attention_batched.1} parent=19 // pred_check_branch
          %144 = sbr.rel (%p142) target = $region28
        $region27: #{simulation_attention_batched.1} parent=19 // pred_region
          %s145 = smul.u32 8, %s12
          %p146 = scmp.lt.s32.totalorder %s145, 15
          %s147 = scalar_select %p146, %s145, 15
          %s148 = smul.addr %s147, 2
          %s149 = smul.addr %s148, 8
          %s150 = scalar_lea.vmem %s1, %s149
          %s151 = smul.u32 8, %s12
        $region28: #{simulation_attention_batched.1} parent=19 // pred_fallthru
          _
      $region20: #{simulation_attention_batched.1} parent=5 // pred_fallthru
        _
      %p152 = scmp.le.s32.totalorder 1, %s12
      %p153 = scmp.lt.s32.totalorder %s12, 3
      %p154 = pnand %p152, %p153
      %p155 = pneg %p154
      // Predicated region
      $region29: #{simulation_attention_batched.1} parent=5 // pred_check
        _
      $region30: #{simulation_attention_batched.1} parent=5 // pred_check_branch
        %157 = sbr.rel (%p154) target = $region32
      $region31: #{simulation_attention_batched.1} parent=5 // pred_region
        %s158 = ssub.s32 %s12, 1
        %s159 = smul.u32 8, %s17
        %p160 = scmp.lt.s32.totalorder %s159, 15
        %s161 = scalar_select %p160, %s159, 15
        %s162 = smul.addr %s161, 8
        %s163 = scalar_lea.vmem %s0, %s162
        %p164 = pneg %p38
        %p165 = pneg %p35
        %s166 = smul.u32 8, %s17
        %p167 = scmp.lt.s32.totalorder %s166, 15
        %s168 = scalar_select %p167, %s166, 15
        %s169 = smul.addr %s168, 2
        %s170 = smul.addr %s169, 8
        %s171 = scalar_lea.vmem %s1, %s170
        %p172 = pneg %p64
        %p173 = pneg %p61
        %p174 = pneg %p85
        %p175 = pneg %p82
        %p176 = pneg %p111
        %p177 = pneg %p108
        %s178 = sand.u32 %s98, 1
        %s179 = scalar_lea.sflag [#allocation3], %s178
        %s180 = sand.u32 %s98, 1
        %s181 = smul.addr %s180, 64
        %s182 = scalar_lea.vmem [#allocation2], %s181
        %s183 = smul.u32 8, %s17
        %p184 = scmp.lt.s32.totalorder %s183, 15
        %s185 = scalar_select %p184, %s183, 15
        %s186 = smul.addr %s185, 8
        %s187 = scalar_lea.vmem %s0, %s186
        %s188 = smul.u32 8, %s17
        %s189 = smul.u32 8, %s17
        %p190 = scmp.lt.s32.totalorder %s189, 15
        %s191 = scalar_select %p190, %s189, 15
        %s192 = smul.addr %s191, 2
        %s193 = smul.addr %s192, 8
        %s194 = scalar_lea.vmem %s1, %s193
        %s195 = smul.u32 8, %s17
        %s196 = smul.u32 8, %s17
        %v197 = vld [vmem:[%s187] sm:$0xff]
        %v198 = vld [vmem:[%s187 + $0x8] sm:$0xff]
        %v199 = vld [vmem:[%s187 + $0x10] sm:$0xff]
        %v200 = vld [vmem:[%s187 + $0x18] sm:$0xff]
        %v201 = vld [vmem:[%s187 + $0x20] sm:$0xff]
        %v202 = vld [vmem:[%s187 + $0x28] sm:$0xff]
        %v203 = vld [vmem:[%s187 + $0x30] sm:$0xff]
        %v204 = vld [vmem:[%s187 + $0x38] sm:$0xff]
        %v205 = vld [vmem:[%s194] sm:$0xff]
        %v206 = vld [vmem:[%s194 + $0x8] sm:$0xff]
        %v207 = vld [vmem:[%s194 + $0x10] sm:$0xff]
        %v208 = vld [vmem:[%s194 + $0x18] sm:$0xff]
        %v209 = vld [vmem:[%s194 + $0x20] sm:$0xff]
        %v210 = vld [vmem:[%s194 + $0x28] sm:$0xff]
        %v211 = vld [vmem:[%s194 + $0x30] sm:$0xff]
        %v212 = vld [vmem:[%s194 + $0x38] sm:$0xff]
        %v213 = vld [vmem:[%s194 + $0x40] sm:$0xff]
        %v214 = vld [vmem:[%s194 + $0x48] sm:$0xff]
        %v215 = vld [vmem:[%s194 + $0x50] sm:$0xff]
        %v216 = vld [vmem:[%s194 + $0x58] sm:$0xff]
        %v217 = vld [vmem:[%s194 + $0x60] sm:$0xff]
        %v218 = vld [vmem:[%s194 + $0x68] sm:$0xff]
        %v219 = vld [vmem:[%s194 + $0x70] sm:$0xff]
        %v220 = vld [vmem:[%s194 + $0x78] sm:$0xff]
        %v221 = vld [vmem:[%s2] sm:$0xff]
        %v222 = vld [vmem:[%s2 + $0x8] sm:$0xf]
        %vm223 = vcmask 97280
        %v225 = vsel %vm223, %v197, 0
        %v228 = vsel %vm223, %v198, 0
        %v231 = vsel %vm223, %v199, 0
        %v234 = vsel %vm223, %v200, 0
        %v237 = vsel %vm223, %v201, 0
        %v240 = vsel %vm223, %v202, 0
        %v243 = vsel %vm223, %v203, 0
        %v246 = vsel %vm223, %v204, 0
        %vm248 = vcmask 1043456
        %v250 = vsel %vm248, %v222, 0
        %252 = vmatprep.subr.mxu0 0.0
        %253 = vmatpush1.msra.mxu0 %v221
        %254 = vmatprep.subr.mxu0 0.0
        %255 = vmatpush1.msra.mxu0 %v250
        %256 = vmatprep.subr.mxu0 0.0
        %257 = vmatpush1.msra.mxu0 0.0
        %258 = vmatprep.subr.mxu0 0.0
        %259 = vmatpush1.msra.mxu0 0.0
        %260 = vmatprep.subr.mxu0 0.0
        %261 = vmatpush1.msra.mxu0 0.0
        %262 = vmatprep.subr.mxu0 0.0
        %263 = vmatpush1.msra.mxu0 0.0
        %264 = vmatprep.subr.mxu0 0.0
        %265 = vmatpush1.msra.mxu0 0.0
        %266 = vmatprep.subr.mxu0 0.0
        %267 = vmatpush1.msra.mxu0 0.0
        %268 = vmatprep.subr.mxu0 0.0
        %269 = vmatpush1.msra.mxu0 0.0
        %270 = vmatprep.subr.mxu0 0.0
        %271 = vmatpush1.msra.mxu0 0.0
        %272 = vmatprep.subr.mxu0 0.0
        %273 = vmatpush1.msra.mxu0 0.0
        %274 = vmatprep.subr.mxu0 0.0
        %275 = vmatpush1.msra.mxu0 0.0
        %276 = vmatprep.subr.mxu0 0.0
        %277 = vmatpush1.msra.mxu0 0.0
        %278 = vmatprep.subr.mxu0 0.0
        %279 = vmatpush1.msra.mxu0 0.0
        %280 = vmatprep.subr.mxu0 0.0
        %281 = vmatpush1.msra.mxu0 0.0
        %282 = vmatprep.subr.mxu0 0.0
        %283 = vmatpush1.msra.mxu0 0.0
        %284 = vmatprep.subr.mxu0 0.0
        %285 = vmatpush1.msra.mxu0 0.0
        %286 = vmatprep.subr.mxu0 0.0
        %287 = vmatpush1.msra.mxu0 0.0
        %288 = vmatprep.subr.mxu0 0.0
        %289 = vmatpush1.msra.mxu0 0.0
        %290 = vmatprep.subr.mxu0 0.0
        %291 = vmatpush1.msra.mxu0 0.0
        %292 = vmatprep.subr.mxu0 0.0
        %293 = vmatpush1.msra.mxu0 0.0
        %294 = vmatprep.subr.mxu0 0.0
        %295 = vmatpush1.msra.mxu0 0.0
        %296 = vmatprep.subr.mxu0 0.0
        %297 = vmatpush1.msra.mxu0 0.0
        %298 = vmatprep.subr.mxu0 0.0
        %299 = vmatpush1.msra.mxu0 0.0
        %300 = vmatprep.subr.mxu0 0.0
        %301 = vmatpush1.msra.mxu0 0.0
        %302 = vmatprep.subr.mxu0 0.0
        %303 = vmatpush1.msra.mxu0 0.0
        %304 = vmatprep.subr.mxu0 0.0
        %305 = vmatpush1.msra.mxu0 0.0
        %306 = vmatprep.subr.mxu0 0.0
        %307 = vmatpush1.msra.mxu0 0.0
        %308 = vmatprep.subr.mxu0 0.0
        %309 = vmatpush1.msra.mxu0 0.0
        %310 = vmatprep.subr.mxu0 0.0
        %311 = vmatpush1.msra.mxu0 0.0
        %312 = vmatprep.subr.mxu0 0.0
        %313 = vmatpush1.msra.mxu0 0.0
        %314 = vmatprep.subr.mxu0 0.0
        %315 = vmatpush1.msra.mxu0 0.0
        %316 = vmatprep.mubr.f32.mxu0 0.0
        %317 = vmatmul.mubr.f32.gmra.mrb[0].mxu0 %v225
        %v318 = vpop.f32.mrb[0].mxu0
        %v319 = vadd.f32 0.0, %v318
        %v320 = vpop.f32.mrb[0].mxu0
        %321 = vmatprep.mubr.f32.mxu0 0.0
        %322 = vmatmul.mubr.f32.gmra.mrb[0].mxu0 %v228
        %v323 = vpop.f32.mrb[0].mxu0
        %v324 = vadd.f32 0.0, %v323
        %v325 = vpop.f32.mrb[0].mxu0
        %326 = vmatprep.mubr.f32.mxu0 0.0
        %327 = vmatmul.mubr.f32.gmra.mrb[0].mxu0 %v231
        %v328 = vpop.f32.mrb[0].mxu0
        %v329 = vadd.f32 0.0, %v328
        %v330 = vpop.f32.mrb[0].mxu0
        %331 = vmatprep.mubr.f32.mxu0 0.0
        %332 = vmatmul.mubr.f32.gmra.mrb[0].mxu0 %v234
        %v333 = vpop.f32.mrb[0].mxu0
        %v334 = vadd.f32 0.0, %v333
        %v335 = vpop.f32.mrb[0].mxu0
        %336 = vmatprep.mubr.f32.mxu0 0.0
        %337 = vmatmul.mubr.f32.gmra.mrb[0].mxu0 %v237
        %v338 = vpop.f32.mrb[0].mxu0
        %v339 = vadd.f32 0.0, %v338
        %v340 = vpop.f32.mrb[0].mxu0
        %341 = vmatprep.mubr.f32.mxu0 0.0
        %342 = vmatmul.mubr.f32.gmra.mrb[0].mxu0 %v240
        %v343 = vpop.f32.mrb[0].mxu0
        %v344 = vadd.f32 0.0, %v343
        %v345 = vpop.f32.mrb[0].mxu0
        %346 = vmatprep.mubr.f32.mxu0 0.0
        %347 = vmatmul.mubr.f32.gmra.mrb[0].mxu0 %v243
        %v348 = vpop.f32.mrb[0].mxu0
        %v349 = vadd.f32 0.0, %v348
        %v350 = vpop.f32.mrb[0].mxu0
        %351 = vmatprep.mubr.f32.mxu0 0.0
        %352 = vmatmul.mubr.f32.gmra.mrb[0].mxu0 %v246
        %v353 = vpop.f32.mrb[0].mxu0
        %v354 = vadd.f32 0.0, %v353
        %v355 = vpop.f32.mrb[0].mxu0
        %356 = vdwg.mxu0
        %v357 = vmax.f32 %v319, 0.0
        %v358 = vmax.f32 %v324, 0.0
        %v359 = vmax.f32 %v329, 0.0
        %v360 = vmax.f32 %v334, 0.0
        %v361 = vmax.f32 %v339, 0.0
        %v362 = vmax.f32 %v344, 0.0
        %v363 = vmax.f32 %v349, 0.0
        %v364 = vmax.f32 %v354, 0.0
        %vm365 = vcmask 31744
        %v367 = vsel %vm365, %v205, 0
        %v370 = vsel %vm365, %v206, 0
        %v373 = vsel %vm248, %v357, 0
        %375 = vmatprep.subr.mxu0 0.0
        %376 = vmatpush1.msra.mxu0 %v373
        %377 = vmatprep.subr.mxu0 0.0
        %378 = vmatpush1.msra.mxu0 0.0
        %379 = vmatprep.subr.mxu0 0.0
        %380 = vmatpush1.msra.mxu0 0.0
        %381 = vmatprep.subr.mxu0 0.0
        %382 = vmatpush1.msra.mxu0 0.0
        %383 = vmatprep.subr.mxu0 0.0
        %384 = vmatpush1.msra.mxu0 0.0
        %385 = vmatprep.subr.mxu0 0.0
        %386 = vmatpush1.msra.mxu0 0.0
        %387 = vmatprep.subr.mxu0 0.0
        %388 = vmatpush1.msra.mxu0 0.0
        %389 = vmatprep.subr.mxu0 0.0
        %390 = vmatpush1.msra.mxu0 0.0
        %391 = vmatprep.subr.mxu0 0.0
        %392 = vmatpush1.msra.mxu0 0.0
        %393 = vmatprep.subr.mxu0 0.0
        %394 = vmatpush1.msra.mxu0 0.0
        %395 = vmatprep.subr.mxu0 0.0
        %396 = vmatpush1.msra.mxu0 0.0
        %397 = vmatprep.subr.mxu0 0.0
        %398 = vmatpush1.msra.mxu0 0.0
        %399 = vmatprep.subr.mxu0 0.0
        %400 = vmatpush1.msra.mxu0 0.0
        %401 = vmatprep.subr.mxu0 0.0
        %402 = vmatpush1.msra.mxu0 0.0
        %403 = vmatprep.subr.mxu0 0.0
        %404 = vmatpush1.msra.mxu0 0.0
        %405 = vmatprep.subr.mxu0 0.0
        %406 = vmatpush1.msra.mxu0 0.0
        %407 = vmatprep.subr.mxu0 0.0
        %408 = vmatpush1.msra.mxu0 0.0
        %409 = vmatprep.subr.mxu0 0.0
        %410 = vmatpush1.msra.mxu0 0.0
        %411 = vmatprep.subr.mxu0 0.0
        %412 = vmatpush1.msra.mxu0 0.0
        %413 = vmatprep.subr.mxu0 0.0
        %414 = vmatpush1.msra.mxu0 0.0
        %415 = vmatprep.subr.mxu0 0.0
        %416 = vmatpush1.msra.mxu0 0.0
        %417 = vmatprep.subr.mxu0 0.0
        %418 = vmatpush1.msra.mxu0 0.0
        %419 = vmatprep.subr.mxu0 0.0
        %420 = vmatpush1.msra.mxu0 0.0
        %421 = vmatprep.subr.mxu0 0.0
        %422 = vmatpush1.msra.mxu0 0.0
        %423 = vmatprep.subr.mxu0 0.0
        %424 = vmatpush1.msra.mxu0 0.0
        %425 = vmatprep.subr.mxu0 0.0
        %426 = vmatpush1.msra.mxu0 0.0
        %427 = vmatprep.subr.mxu0 0.0
        %428 = vmatpush1.msra.mxu0 0.0
        %429 = vmatprep.subr.mxu0 0.0
        %430 = vmatpush1.msra.mxu0 0.0
        %431 = vmatprep.subr.mxu0 0.0
        %432 = vmatpush1.msra.mxu0 0.0
        %433 = vmatprep.subr.mxu0 0.0
        %434 = vmatpush1.msra.mxu0 0.0
        %435 = vmatprep.subr.mxu0 0.0
        %436 = vmatpush1.msra.mxu0 0.0
        %437 = vmatprep.subr.mxu0 0.0
        %438 = vmatpush1.msra.mxu0 0.0
        %439 = vmatprep.mubr.f32.mxu0 0.0
        %440 = vmatmul.mubr.f32.gmra.mrb[0].mxu0 %v367
        %v441 = vpop.f32.mrb[0].mxu0
        %v442 = vadd.f32 0.0, %v441
        %v443 = vpop.f32.mrb[0].mxu0
        %444 = vmatprep.mubr.f32.mxu0 0.0
        %445 = vmatmul.mubr.f32.gmra.mrb[0].mxu0 %v370
        %v446 = vpop.f32.mrb[0].mxu0
        %v447 = vadd.f32 0.0, %v446
        %v448 = vpop.f32.mrb[0].mxu0
        %449 = vdwg.mxu0
        %v451 = vsel %vm365, %v207, 0
        %v454 = vsel %vm365, %v208, 0
        %v457 = vsel %vm248, %v358, 0
        %459 = vmatprep.subr.mxu0 0.0
        %460 = vmatpush1.msra.mxu0 %v457
        %461 = vmatprep.subr.mxu0 0.0
        %462 = vmatpush1.msra.mxu0 0.0
        %463 = vmatprep.subr.mxu0 0.0
        %464 = vmatpush1.msra.mxu0 0.0
        %465 = vmatprep.subr.mxu0 0.0
        %466 = vmatpush1.msra.mxu0 0.0
        %467 = vmatprep.subr.mxu0 0.0
        %468 = vmatpush1.msra.mxu0 0.0
        %469 = vmatprep.subr.mxu0 0.0
        %470 = vmatpush1.msra.mxu0 0.0
        %471 = vmatprep.subr.mxu0 0.0
        %472 = vmatpush1.msra.mxu0 0.0
        %473 = vmatprep.subr.mxu0 0.0
        %474 = vmatpush1.msra.mxu0 0.0
        %475 = vmatprep.subr.mxu0 0.0
        %476 = vmatpush1.msra.mxu0 0.0
        %477 = vmatprep.subr.mxu0 0.0
        %478 = vmatpush1.msra.mxu0 0.0
        %479 = vmatprep.subr.mxu0 0.0
        %480 = vmatpush1.msra.mxu0 0.0
        %481 = vmatprep.subr.mxu0 0.0
        %482 = vmatpush1.msra.mxu0 0.0
        %483 = vmatprep.subr.mxu0 0.0
        %484 = vmatpush1.msra.mxu0 0.0
        %485 = vmatprep.subr.mxu0 0.0
        %486 = vmatpush1.msra.mxu0 0.0
        %487 = vmatprep.subr.mxu0 0.0
        %488 = vmatpush1.msra.mxu0 0.0
        %489 = vmatprep.subr.mxu0 0.0
        %490 = vmatpush1.msra.mxu0 0.0
        %491 = vmatprep.subr.mxu0 0.0
        %492 = vmatpush1.msra.mxu0 0.0
        %493 = vmatprep.subr.mxu0 0.0
        %494 = vmatpush1.msra.mxu0 0.0
        %495 = vmatprep.subr.mxu0 0.0
        %496 = vmatpush1.msra.mxu0 0.0
        %497 = vmatprep.subr.mxu0 0.0
        %498 = vmatpush1.msra.mxu0 0.0
        %499 = vmatprep.subr.mxu0 0.0
        %500 = vmatpush1.msra.mxu0 0.0
        %501 = vmatprep.subr.mxu0 0.0
        %502 = vmatpush1.msra.mxu0 0.0
        %503 = vmatprep.subr.mxu0 0.0
        %504 = vmatpush1.msra.mxu0 0.0
        %505 = vmatprep.subr.mxu0 0.0
        %506 = vmatpush1.msra.mxu0 0.0
        %507 = vmatprep.subr.mxu0 0.0
        %508 = vmatpush1.msra.mxu0 0.0
        %509 = vmatprep.subr.mxu0 0.0
        %510 = vmatpush1.msra.mxu0 0.0
        %511 = vmatprep.subr.mxu0 0.0
        %512 = vmatpush1.msra.mxu0 0.0
        %513 = vmatprep.subr.mxu0 0.0
        %514 = vmatpush1.msra.mxu0 0.0
        %515 = vmatprep.subr.mxu0 0.0
        %516 = vmatpush1.msra.mxu0 0.0
        %517 = vmatprep.subr.mxu0 0.0
        %518 = vmatpush1.msra.mxu0 0.0
        %519 = vmatprep.subr.mxu0 0.0
        %520 = vmatpush1.msra.mxu0 0.0
        %521 = vmatprep.subr.mxu0 0.0
        %522 = vmatpush1.msra.mxu0 0.0
        %523 = vmatprep.mubr.f32.mxu0 0.0
        %524 = vmatmul.mubr.f32.gmra.mrb[0].mxu0 %v451
        %v525 = vpop.f32.mrb[0].mxu0
        %v526 = vadd.f32 0.0, %v525
        %v527 = vpop.f32.mrb[0].mxu0
        %528 = vmatprep.mubr.f32.mxu0 0.0
        %529 = vmatmul.mubr.f32.gmra.mrb[0].mxu0 %v454
        %v530 = vpop.f32.mrb[0].mxu0
        %v531 = vadd.f32 0.0, %v530
        %v532 = vpop.f32.mrb[0].mxu0
        %533 = vdwg.mxu0
        %v535 = vsel %vm365, %v209, 0
        %v538 = vsel %vm365, %v210, 0
        %v541 = vsel %vm248, %v359, 0
        %543 = vmatprep.subr.mxu0 0.0
        %544 = vmatpush1.msra.mxu0 %v541
        %545 = vmatprep.subr.mxu0 0.0
        %546 = vmatpush1.msra.mxu0 0.0
        %547 = vmatprep.subr.mxu0 0.0
        %548 = vmatpush1.msra.mxu0 0.0
        %549 = vmatprep.subr.mxu0 0.0
        %550 = vmatpush1.msra.mxu0 0.0
        %551 = vmatprep.subr.mxu0 0.0
        %552 = vmatpush1.msra.mxu0 0.0
        %553 = vmatprep.subr.mxu0 0.0
        %554 = vmatpush1.msra.mxu0 0.0
        %555 = vmatprep.subr.mxu0 0.0
        %556 = vmatpush1.msra.mxu0 0.0
        %557 = vmatprep.subr.mxu0 0.0
        %558 = vmatpush1.msra.mxu0 0.0
        %559 = vmatprep.subr.mxu0 0.0
        %560 = vmatpush1.msra.mxu0 0.0
        %561 = vmatprep.subr.mxu0 0.0
        %562 = vmatpush1.msra.mxu0 0.0
        %563 = vmatprep.subr.mxu0 0.0
        %564 = vmatpush1.msra.mxu0 0.0
        %565 = vmatprep.subr.mxu0 0.0
        %566 = vmatpush1.msra.mxu0 0.0
        %567 = vmatprep.subr.mxu0 0.0
        %568 = vmatpush1.msra.mxu0 0.0
        %569 = vmatprep.subr.mxu0 0.0
        %570 = vmatpush1.msra.mxu0 0.0
        %571 = vmatprep.subr.mxu0 0.0
        %572 = vmatpush1.msra.mxu0 0.0
        %573 = vmatprep.subr.mxu0 0.0
        %574 = vmatpush1.msra.mxu0 0.0
        %575 = vmatprep.subr.mxu0 0.0
        %576 = vmatpush1.msra.mxu0 0.0
        %577 = vmatprep.subr.mxu0 0.0
        %578 = vmatpush1.msra.mxu0 0.0
        %579 = vmatprep.subr.mxu0 0.0
        %580 = vmatpush1.msra.mxu0 0.0
        %581 = vmatprep.subr.mxu0 0.0
        %582 = vmatpush1.msra.mxu0 0.0
        %583 = vmatprep.subr.mxu0 0.0
        %584 = vmatpush1.msra.mxu0 0.0
        %585 = vmatprep.subr.mxu0 0.0
        %586 = vmatpush1.msra.mxu0 0.0
        %587 = vmatprep.subr.mxu0 0.0
        %588 = vmatpush1.msra.mxu0 0.0
        %589 = vmatprep.subr.mxu0 0.0
        %590 = vmatpush1.msra.mxu0 0.0
        %591 = vmatprep.subr.mxu0 0.0
        %592 = vmatpush1.msra.mxu0 0.0
        %593 = vmatprep.subr.mxu0 0.0
        %594 = vmatpush1.msra.mxu0 0.0
        %595 = vmatprep.subr.mxu0 0.0
        %596 = vmatpush1.msra.mxu0 0.0
        %597 = vmatprep.subr.mxu0 0.0
        %598 = vmatpush1.msra.mxu0 0.0
        %599 = vmatprep.subr.mxu0 0.0
        %600 = vmatpush1.msra.mxu0 0.0
        %601 = vmatprep.subr.mxu0 0.0
        %602 = vmatpush1.msra.mxu0 0.0
        %603 = vmatprep.subr.mxu0 0.0
        %604 = vmatpush1.msra.mxu0 0.0
        %605 = vmatprep.subr.mxu0 0.0
        %606 = vmatpush1.msra.mxu0 0.0
        %607 = vmatprep.mubr.f32.mxu0 0.0
        %608 = vmatmul.mubr.f32.gmra.mrb[0].mxu0 %v535
        %v609 = vpop.f32.mrb[0].mxu0
        %v610 = vadd.f32 0.0, %v609
        %v611 = vpop.f32.mrb[0].mxu0
        %612 = vmatprep.mubr.f32.mxu0 0.0
        %613 = vmatmul.mubr.f32.gmra.mrb[0].mxu0 %v538
        %v614 = vpop.f32.mrb[0].mxu0
        %v615 = vadd.f32 0.0, %v614
        %v616 = vpop.f32.mrb[0].mxu0
        %617 = vdwg.mxu0
        %v619 = vsel %vm365, %v211, 0
        %v622 = vsel %vm365, %v212, 0
        %v625 = vsel %vm248, %v360, 0
        %627 = vmatprep.subr.mxu0 0.0
        %628 = vmatpush1.msra.mxu0 %v625
        %629 = vmatprep.subr.mxu0 0.0
        %630 = vmatpush1.msra.mxu0 0.0
        %631 = vmatprep.subr.mxu0 0.0
        %632 = vmatpush1.msra.mxu0 0.0
        %633 = vmatprep.subr.mxu0 0.0
        %634 = vmatpush1.msra.mxu0 0.0
        %635 = vmatprep.subr.mxu0 0.0
        %636 = vmatpush1.msra.mxu0 0.0
        %637 = vmatprep.subr.mxu0 0.0
        %638 = vmatpush1.msra.mxu0 0.0
        %639 = vmatprep.subr.mxu0 0.0
        %640 = vmatpush1.msra.mxu0 0.0
        %641 = vmatprep.subr.mxu0 0.0
        %642 = vmatpush1.msra.mxu0 0.0
        %643 = vmatprep.subr.mxu0 0.0
        %644 = vmatpush1.msra.mxu0 0.0
        %645 = vmatprep.subr.mxu0 0.0
        %646 = vmatpush1.msra.mxu0 0.0
        %647 = vmatprep.subr.mxu0 0.0
        %648 = vmatpush1.msra.mxu0 0.0
        %649 = vmatprep.subr.mxu0 0.0
        %650 = vmatpush1.msra.mxu0 0.0
        %651 = vmatprep.subr.mxu0 0.0
        %652 = vmatpush1.msra.mxu0 0.0
        %653 = vmatprep.subr.mxu0 0.0
        %654 = vmatpush1.msra.mxu0 0.0
        %655 = vmatprep.subr.mxu0 0.0
        %656 = vmatpush1.msra.mxu0 0.0
        %657 = vmatprep.subr.mxu0 0.0
        %658 = vmatpush1.msra.mxu0 0.0
        %659 = vmatprep.subr.mxu0 0.0
        %660 = vmatpush1.msra.mxu0 0.0
        %661 = vmatprep.subr.mxu0 0.0
        %662 = vmatpush1.msra.mxu0 0.0
        %663 = vmatprep.subr.mxu0 0.0
        %664 = vmatpush1.msra.mxu0 0.0
        %665 = vmatprep.subr.mxu0 0.0
        %666 = vmatpush1.msra.mxu0 0.0
        %667 = vmatprep.subr.mxu0 0.0
        %668 = vmatpush1.msra.mxu0 0.0
        %669 = vmatprep.subr.mxu0 0.0
        %670 = vmatpush1.msra.mxu0 0.0
        %671 = vmatprep.subr.mxu0 0.0
        %672 = vmatpush1.msra.mxu0 0.0
        %673 = vmatprep.subr.mxu0 0.0
        %674 = vmatpush1.msra.mxu0 0.0
        %675 = vmatprep.subr.mxu0 0.0
        %676 = vmatpush1.msra.mxu0 0.0
        %677 = vmatprep.subr.mxu0 0.0
        %678 = vmatpush1.msra.mxu0 0.0
        %679 = vmatprep.subr.mxu0 0.0
        %680 = vmatpush1.msra.mxu0 0.0
        %681 = vmatprep.subr.mxu0 0.0
        %682 = vmatpush1.msra.mxu0 0.0
        %683 = vmatprep.subr.mxu0 0.0
        %684 = vmatpush1.msra.mxu0 0.0
        %685 = vmatprep.subr.mxu0 0.0
        %686 = vmatpush1.msra.mxu0 0.0
        %687 = vmatprep.subr.mxu0 0.0
        %688 = vmatpush1.msra.mxu0 0.0
        %689 = vmatprep.subr.mxu0 0.0
        %690 = vmatpush1.msra.mxu0 0.0
        %691 = vmatprep.mubr.f32.mxu0 0.0
        %692 = vmatmul.mubr.f32.gmra.mrb[0].mxu0 %v619
        %v693 = vpop.f32.mrb[0].mxu0
        %v694 = vadd.f32 0.0, %v693
        %v695 = vpop.f32.mrb[0].mxu0
        %696 = vmatprep.mubr.f32.mxu0 0.0
        %697 = vmatmul.mubr.f32.gmra.mrb[0].mxu0 %v622
        %v698 = vpop.f32.mrb[0].mxu0
        %v699 = vadd.f32 0.0, %v698
        %v700 = vpop.f32.mrb[0].mxu0
        %701 = vdwg.mxu0
        %v703 = vsel %vm365, %v213, 0
        %v706 = vsel %vm365, %v214, 0
        %v709 = vsel %vm248, %v361, 0
        %711 = vmatprep.subr.mxu0 0.0
        %712 = vmatpush1.msra.mxu0 %v709
        %713 = vmatprep.subr.mxu0 0.0
        %714 = vmatpush1.msra.mxu0 0.0
        %715 = vmatprep.subr.mxu0 0.0
        %716 = vmatpush1.msra.mxu0 0.0
        %717 = vmatprep.subr.mxu0 0.0
        %718 = vmatpush1.msra.mxu0 0.0
        %719 = vmatprep.subr.mxu0 0.0
        %720 = vmatpush1.msra.mxu0 0.0
        %721 = vmatprep.subr.mxu0 0.0
        %722 = vmatpush1.msra.mxu0 0.0
        %723 = vmatprep.subr.mxu0 0.0
        %724 = vmatpush1.msra.mxu0 0.0
        %725 = vmatprep.subr.mxu0 0.0
        %726 = vmatpush1.msra.mxu0 0.0
        %727 = vmatprep.subr.mxu0 0.0
        %728 = vmatpush1.msra.mxu0 0.0
        %729 = vmatprep.subr.mxu0 0.0
        %730 = vmatpush1.msra.mxu0 0.0
        %731 = vmatprep.subr.mxu0 0.0
        %732 = vmatpush1.msra.mxu0 0.0
        %733 = vmatprep.subr.mxu0 0.0
        %734 = vmatpush1.msra.mxu0 0.0
        %735 = vmatprep.subr.mxu0 0.0
        %736 = vmatpush1.msra.mxu0 0.0
        %737 = vmatprep.subr.mxu0 0.0
        %738 = vmatpush1.msra.mxu0 0.0
        %739 = vmatprep.subr.mxu0 0.0
        %740 = vmatpush1.msra.mxu0 0.0
        %741 = vmatprep.subr.mxu0 0.0
        %742 = vmatpush1.msra.mxu0 0.0
        %743 = vmatprep.subr.mxu0 0.0
        %744 = vmatpush1.msra.mxu0 0.0
        %745 = vmatprep.subr.mxu0 0.0
        %746 = vmatpush1.msra.mxu0 0.0
        %747 = vmatprep.subr.mxu0 0.0
        %748 = vmatpush1.msra.mxu0 0.0
        %749 = vmatprep.subr.mxu0 0.0
        %750 = vmatpush1.msra.mxu0 0.0
        %751 = vmatprep.subr.mxu0 0.0
        %752 = vmatpush1.msra.mxu0 0.0
        %753 = vmatprep.subr.mxu0 0.0
        %754 = vmatpush1.msra.mxu0 0.0
        %755 = vmatprep.subr.mxu0 0.0
        %756 = vmatpush1.msra.mxu0 0.0
        %757 = vmatprep.subr.mxu0 0.0
        %758 = vmatpush1.msra.mxu0 0.0
        %759 = vmatprep.subr.mxu0 0.0
        %760 = vmatpush1.msra.mxu0 0.0
        %761 = vmatprep.subr.mxu0 0.0
        %762 = vmatpush1.msra.mxu0 0.0
        %763 = vmatprep.subr.mxu0 0.0
        %764 = vmatpush1.msra.mxu0 0.0
        %765 = vmatprep.subr.mxu0 0.0
        %766 = vmatpush1.msra.mxu0 0.0
        %767 = vmatprep.subr.mxu0 0.0
        %768 = vmatpush1.msra.mxu0 0.0
        %769 = vmatprep.subr.mxu0 0.0
        %770 = vmatpush1.msra.mxu0 0.0
        %771 = vmatprep.subr.mxu0 0.0
        %772 = vmatpush1.msra.mxu0 0.0
        %773 = vmatprep.subr.mxu0 0.0
        %774 = vmatpush1.msra.mxu0 0.0
        %775 = vmatprep.mubr.f32.mxu0 0.0
        %776 = vmatmul.mubr.f32.gmra.mrb[0].mxu0 %v703
        %v777 = vpop.f32.mrb[0].mxu0
        %v778 = vadd.f32 0.0, %v777
        %v779 = vpop.f32.mrb[0].mxu0
        %780 = vmatprep.mubr.f32.mxu0 0.0
        %781 = vmatmul.mubr.f32.gmra.mrb[0].mxu0 %v706
        %v782 = vpop.f32.mrb[0].mxu0
        %v783 = vadd.f32 0.0, %v782
        %v784 = vpop.f32.mrb[0].mxu0
        %785 = vdwg.mxu0
        %v787 = vsel %vm365, %v215, 0
        %v790 = vsel %vm365, %v216, 0
        %v793 = vsel %vm248, %v362, 0
        %795 = vmatprep.subr.mxu0 0.0
        %796 = vmatpush1.msra.mxu0 %v793
        %797 = vmatprep.subr.mxu0 0.0
        %798 = vmatpush1.msra.mxu0 0.0
        %799 = vmatprep.subr.mxu0 0.0
        %800 = vmatpush1.msra.mxu0 0.0
        %801 = vmatprep.subr.mxu0 0.0
        %802 = vmatpush1.msra.mxu0 0.0
        %803 = vmatprep.subr.mxu0 0.0
        %804 = vmatpush1.msra.mxu0 0.0
        %805 = vmatprep.subr.mxu0 0.0
        %806 = vmatpush1.msra.mxu0 0.0
        %807 = vmatprep.subr.mxu0 0.0
        %808 = vmatpush1.msra.mxu0 0.0
        %809 = vmatprep.subr.mxu0 0.0
        %810 = vmatpush1.msra.mxu0 0.0
        %811 = vmatprep.subr.mxu0 0.0
        %812 = vmatpush1.msra.mxu0 0.0
        %813 = vmatprep.subr.mxu0 0.0
        %814 = vmatpush1.msra.mxu0 0.0
        %815 = vmatprep.subr.mxu0 0.0
        %816 = vmatpush1.msra.mxu0 0.0
        %817 = vmatprep.subr.mxu0 0.0
        %818 = vmatpush1.msra.mxu0 0.0
        %819 = vmatprep.subr.mxu0 0.0
        %820 = vmatpush1.msra.mxu0 0.0
        %821 = vmatprep.subr.mxu0 0.0
        %822 = vmatpush1.msra.mxu0 0.0
        %823 = vmatprep.subr.mxu0 0.0
        %824 = vmatpush1.msra.mxu0 0.0
        %825 = vmatprep.subr.mxu0 0.0
        %826 = vmatpush1.msra.mxu0 0.0
        %827 = vmatprep.subr.mxu0 0.0
        %828 = vmatpush1.msra.mxu0 0.0
        %829 = vmatprep.subr.mxu0 0.0
        %830 = vmatpush1.msra.mxu0 0.0
        %831 = vmatprep.subr.mxu0 0.0
        %832 = vmatpush1.msra.mxu0 0.0
        %833 = vmatprep.subr.mxu0 0.0
        %834 = vmatpush1.msra.mxu0 0.0
        %835 = vmatprep.subr.mxu0 0.0
        %836 = vmatpush1.msra.mxu0 0.0
        %837 = vmatprep.subr.mxu0 0.0
        %838 = vmatpush1.msra.mxu0 0.0
        %839 = vmatprep.subr.mxu0 0.0
        %840 = vmatpush1.msra.mxu0 0.0
        %841 = vmatprep.subr.mxu0 0.0
        %842 = vmatpush1.msra.mxu0 0.0
        %843 = vmatprep.subr.mxu0 0.0
        %844 = vmatpush1.msra.mxu0 0.0
        %845 = vmatprep.subr.mxu0 0.0
        %846 = vmatpush1.msra.mxu0 0.0
        %847 = vmatprep.subr.mxu0 0.0
        %848 = vmatpush1.msra.mxu0 0.0
        %849 = vmatprep.subr.mxu0 0.0
        %850 = vmatpush1.msra.mxu0 0.0
        %851 = vmatprep.subr.mxu0 0.0
        %852 = vmatpush1.msra.mxu0 0.0
        %853 = vmatprep.subr.mxu0 0.0
        %854 = vmatpush1.msra.mxu0 0.0
        %855 = vmatprep.subr.mxu0 0.0
        %856 = vmatpush1.msra.mxu0 0.0
        %857 = vmatprep.subr.mxu0 0.0
        %858 = vmatpush1.msra.mxu0 0.0
        %859 = vmatprep.mubr.f32.mxu0 0.0
        %860 = vmatmul.mubr.f32.gmra.mrb[0].mxu0 %v787
        %v861 = vpop.f32.mrb[0].mxu0
        %v862 = vadd.f32 0.0, %v861
        %v863 = vpop.f32.mrb[0].mxu0
        %864 = vmatprep.mubr.f32.mxu0 0.0
        %865 = vmatmul.mubr.f32.gmra.mrb[0].mxu0 %v790
        %v866 = vpop.f32.mrb[0].mxu0
        %v867 = vadd.f32 0.0, %v866
        %v868 = vpop.f32.mrb[0].mxu0
        %869 = vdwg.mxu0
        %v871 = vsel %vm365, %v217, 0
        %v874 = vsel %vm365, %v218, 0
        %v877 = vsel %vm248, %v363, 0
        %879 = vmatprep.subr.mxu0 0.0
        %880 = vmatpush1.msra.mxu0 %v877
        %881 = vmatprep.subr.mxu0 0.0
        %882 = vmatpush1.msra.mxu0 0.0
        %883 = vmatprep.subr.mxu0 0.0
        %884 = vmatpush1.msra.mxu0 0.0
        %885 = vmatprep.subr.mxu0 0.0
        %886 = vmatpush1.msra.mxu0 0.0
        %887 = vmatprep.subr.mxu0 0.0
        %888 = vmatpush1.msra.mxu0 0.0
        %889 = vmatprep.subr.mxu0 0.0
        %890 = vmatpush1.msra.mxu0 0.0
        %891 = vmatprep.subr.mxu0 0.0
        %892 = vmatpush1.msra.mxu0 0.0
        %893 = vmatprep.subr.mxu0 0.0
        %894 = vmatpush1.msra.mxu0 0.0
        %895 = vmatprep.subr.mxu0 0.0
        %896 = vmatpush1.msra.mxu0 0.0
        %897 = vmatprep.subr.mxu0 0.0
        %898 = vmatpush1.msra.mxu0 0.0
        %899 = vmatprep.subr.mxu0 0.0
        %900 = vmatpush1.msra.mxu0 0.0
        %901 = vmatprep.subr.mxu0 0.0
        %902 = vmatpush1.msra.mxu0 0.0
        %903 = vmatprep.subr.mxu0 0.0
        %904 = vmatpush1.msra.mxu0 0.0
        %905 = vmatprep.subr.mxu0 0.0
        %906 = vmatpush1.msra.mxu0 0.0
        %907 = vmatprep.subr.mxu0 0.0
        %908 = vmatpush1.msra.mxu0 0.0
        %909 = vmatprep.subr.mxu0 0.0
        %910 = vmatpush1.msra.mxu0 0.0
        %911 = vmatprep.subr.mxu0 0.0
        %912 = vmatpush1.msra.mxu0 0.0
        %913 = vmatprep.subr.mxu0 0.0
        %914 = vmatpush1.msra.mxu0 0.0
        %915 = vmatprep.subr.mxu0 0.0
        %916 = vmatpush1.msra.mxu0 0.0
        %917 = vmatprep.subr.mxu0 0.0
        %918 = vmatpush1.msra.mxu0 0.0
        %919 = vmatprep.subr.mxu0 0.0
        %920 = vmatpush1.msra.mxu0 0.0
        %921 = vmatprep.subr.mxu0 0.0
        %922 = vmatpush1.msra.mxu0 0.0
        %923 = vmatprep.subr.mxu0 0.0
        %924 = vmatpush1.msra.mxu0 0.0
        %925 = vmatprep.subr.mxu0 0.0
        %926 = vmatpush1.msra.mxu0 0.0
        %927 = vmatprep.subr.mxu0 0.0
        %928 = vmatpush1.msra.mxu0 0.0
        %929 = vmatprep.subr.mxu0 0.0
        %930 = vmatpush1.msra.mxu0 0.0
        %931 = vmatprep.subr.mxu0 0.0
        %932 = vmatpush1.msra.mxu0 0.0
        %933 = vmatprep.subr.mxu0 0.0
        %934 = vmatpush1.msra.mxu0 0.0
        %935 = vmatprep.subr.mxu0 0.0
        %936 = vmatpush1.msra.mxu0 0.0
        %937 = vmatprep.subr.mxu0 0.0
        %938 = vmatpush1.msra.mxu0 0.0
        %939 = vmatprep.subr.mxu0 0.0
        %940 = vmatpush1.msra.mxu0 0.0
        %941 = vmatprep.subr.mxu0 0.0
        %942 = vmatpush1.msra.mxu0 0.0
        %943 = vmatprep.mubr.f32.mxu0 0.0
        %944 = vmatmul.mubr.f32.gmra.mrb[0].mxu0 %v871
        %v945 = vpop.f32.mrb[0].mxu0
        %v946 = vadd.f32 0.0, %v945
        %v947 = vpop.f32.mrb[0].mxu0
        %948 = vmatprep.mubr.f32.mxu0 0.0
        %949 = vmatmul.mubr.f32.gmra.mrb[0].mxu0 %v874
        %v950 = vpop.f32.mrb[0].mxu0
        %v951 = vadd.f32 0.0, %v950
        %v952 = vpop.f32.mrb[0].mxu0
        %953 = vdwg.mxu0
        %v955 = vsel %vm365, %v219, 0
        %v958 = vsel %vm365, %v220, 0
        %v961 = vsel %vm248, %v364, 0
        %963 = vmatprep.subr.mxu0 0.0
        %964 = vmatpush1.msra.mxu0 %v961
        %965 = vmatprep.subr.mxu0 0.0
        %966 = vmatpush1.msra.mxu0 0.0
        %967 = vmatprep.subr.mxu0 0.0
        %968 = vmatpush1.msra.mxu0 0.0
        %969 = vmatprep.subr.mxu0 0.0
        %970 = vmatpush1.msra.mxu0 0.0
        %971 = vmatprep.subr.mxu0 0.0
        %972 = vmatpush1.msra.mxu0 0.0
        %973 = vmatprep.subr.mxu0 0.0
        %974 = vmatpush1.msra.mxu0 0.0
        %975 = vmatprep.subr.mxu0 0.0
        %976 = vmatpush1.msra.mxu0 0.0
        %977 = vmatprep.subr.mxu0 0.0
        %978 = vmatpush1.msra.mxu0 0.0
        %979 = vmatprep.subr.mxu0 0.0
        %980 = vmatpush1.msra.mxu0 0.0
        %981 = vmatprep.subr.mxu0 0.0
        %982 = vmatpush1.msra.mxu0 0.0
        %983 = vmatprep.subr.mxu0 0.0
        %984 = vmatpush1.msra.mxu0 0.0
        %985 = vmatprep.subr.mxu0 0.0
        %986 = vmatpush1.msra.mxu0 0.0
        %987 = vmatprep.subr.mxu0 0.0
        %988 = vmatpush1.msra.mxu0 0.0
        %989 = vmatprep.subr.mxu0 0.0
        %990 = vmatpush1.msra.mxu0 0.0
        %991 = vmatprep.subr.mxu0 0.0
        %992 = vmatpush1.msra.mxu0 0.0
        %993 = vmatprep.subr.mxu0 0.0
        %994 = vmatpush1.msra.mxu0 0.0
        %995 = vmatprep.subr.mxu0 0.0
        %996 = vmatpush1.msra.mxu0 0.0
        %997 = vmatprep.subr.mxu0 0.0
        %998 = vmatpush1.msra.mxu0 0.0
        %999 = vmatprep.subr.mxu0 0.0
        %1000 = vmatpush1.msra.mxu0 0.0
        %1001 = vmatprep.subr.mxu0 0.0
        %1002 = vmatpush1.msra.mxu0 0.0
        %1003 = vmatprep.subr.mxu0 0.0
        %1004 = vmatpush1.msra.mxu0 0.0
        %1005 = vmatprep.subr.mxu0 0.0
        %1006 = vmatpush1.msra.mxu0 0.0
        %1007 = vmatprep.subr.mxu0 0.0
        %1008 = vmatpush1.msra.mxu0 0.0
        %1009 = vmatprep.subr.mxu0 0.0
        %1010 = vmatpush1.msra.mxu0 0.0
        %1011 = vmatprep.subr.mxu0 0.0
        %1012 = vmatpush1.msra.mxu0 0.0
        %1013 = vmatprep.subr.mxu0 0.0
        %1014 = vmatpush1.msra.mxu0 0.0
        %1015 = vmatprep.subr.mxu0 0.0
        %1016 = vmatpush1.msra.mxu0 0.0
        %1017 = vmatprep.subr.mxu0 0.0
        %1018 = vmatpush1.msra.mxu0 0.0
        %1019 = vmatprep.subr.mxu0 0.0
        %1020 = vmatpush1.msra.mxu0 0.0
        %1021 = vmatprep.subr.mxu0 0.0
        %1022 = vmatpush1.msra.mxu0 0.0
        %1023 = vmatprep.subr.mxu0 0.0
        %1024 = vmatpush1.msra.mxu0 0.0
        %1025 = vmatprep.subr.mxu0 0.0
        %1026 = vmatpush1.msra.mxu0 0.0
        %1027 = vmatprep.mubr.f32.mxu0 0.0
        %1028 = vmatmul.mubr.f32.gmra.mrb[0].mxu0 %v955
        %v1029 = vpop.f32.mrb[0].mxu0
        %v1030 = vadd.f32 0.0, %v1029
        %v1031 = vpop.f32.mrb[0].mxu0
        %1032 = vmatprep.mubr.f32.mxu0 0.0
        %1033 = vmatmul.mubr.f32.gmra.mrb[0].mxu0 %v958
        %v1034 = vpop.f32.mrb[0].mxu0
        %v1035 = vadd.f32 0.0, %v1034
        %v1036 = vpop.f32.mrb[0].mxu0
        %1037 = vdwg.mxu0
        %vm1038 = vcmask 261120
        %v1039 = vsel %vm1038, %v442, -inf
        %v1040 = vsel %vm1038, %v447, -inf
        %v1041 = vmax.f32 %v1039, %v1040
        %v1042 = vrot.slane %v1041, 4
        %v1043 = vmax.f32 %v1041, %v1042
        %v1044 = vrot.slane %v1043, 2
        %v1045 = vmax.f32 %v1043, %v1044
        %v1046 = vrot.slane %v1045, 1
        %v1047 = vmax.f32 %v1045, %v1046
        %v1048 = vsel %vm1038, %v526, -inf
        %v1049 = vsel %vm1038, %v531, -inf
        %v1050 = vmax.f32 %v1048, %v1049
        %v1051 = vrot.slane %v1050, 4
        %v1052 = vmax.f32 %v1050, %v1051
        %v1053 = vrot.slane %v1052, 2
        %v1054 = vmax.f32 %v1052, %v1053
        %v1055 = vrot.slane %v1054, 1
        %v1056 = vmax.f32 %v1054, %v1055
        %v1057 = vsel %vm1038, %v610, -inf
        %v1058 = vsel %vm1038, %v615, -inf
        %v1059 = vmax.f32 %v1057, %v1058
        %v1060 = vrot.slane %v1059, 4
        %v1061 = vmax.f32 %v1059, %v1060
        %v1062 = vrot.slane %v1061, 2
        %v1063 = vmax.f32 %v1061, %v1062
        %v1064 = vrot.slane %v1063, 1
        %v1065 = vmax.f32 %v1063, %v1064
        %v1066 = vsel %vm1038, %v694, -inf
        %v1067 = vsel %vm1038, %v699, -inf
        %v1068 = vmax.f32 %v1066, %v1067
        %v1069 = vrot.slane %v1068, 4
        %v1070 = vmax.f32 %v1068, %v1069
        %v1071 = vrot.slane %v1070, 2
        %v1072 = vmax.f32 %v1070, %v1071
        %v1073 = vrot.slane %v1072, 1
        %v1074 = vmax.f32 %v1072, %v1073
        %v1075 = vsel %vm1038, %v778, -inf
        %v1076 = vsel %vm1038, %v783, -inf
        %v1077 = vmax.f32 %v1075, %v1076
        %v1078 = vrot.slane %v1077, 4
        %v1079 = vmax.f32 %v1077, %v1078
        %v1080 = vrot.slane %v1079, 2
        %v1081 = vmax.f32 %v1079, %v1080
        %v1082 = vrot.slane %v1081, 1
        %v1083 = vmax.f32 %v1081, %v1082
        %v1084 = vsel %vm1038, %v862, -inf
        %v1085 = vsel %vm1038, %v867, -inf
        %v1086 = vmax.f32 %v1084, %v1085
        %v1087 = vrot.slane %v1086, 4
        %v1088 = vmax.f32 %v1086, %v1087
        %v1089 = vrot.slane %v1088, 2
        %v1090 = vmax.f32 %v1088, %v1089
        %v1091 = vrot.slane %v1090, 1
        %v1092 = vmax.f32 %v1090, %v1091
        %v1093 = vsel %vm1038, %v946, -inf
        %v1094 = vsel %vm1038, %v951, -inf
        %v1095 = vmax.f32 %v1093, %v1094
        %v1096 = vrot.slane %v1095, 4
        %v1097 = vmax.f32 %v1095, %v1096
        %v1098 = vrot.slane %v1097, 2
        %v1099 = vmax.f32 %v1097, %v1098
        %v1100 = vrot.slane %v1099, 1
        %v1101 = vmax.f32 %v1099, %v1100
        %v1102 = vsel %vm1038, %v1030, -inf
        %v1103 = vsel %vm1038, %v1035, -inf
        %v1104 = vmax.f32 %v1102, %v1103
        %v1105 = vrot.slane %v1104, 4
        %v1106 = vmax.f32 %v1104, %v1105
        %v1107 = vrot.slane %v1106, 2
        %v1108 = vmax.f32 %v1106, %v1107
        %v1109 = vrot.slane %v1108, 1
        %v1110 = vmax.f32 %v1108, %v1109
        %v1111 = vsub.f32 %v442, %v1047
        %v1112 = vsub.f32 %v447, %v1047
        %v1113 = vsub.f32 %v526, %v1056
        %v1114 = vsub.f32 %v531, %v1056
        %v1115 = vsub.f32 %v610, %v1065
        %v1116 = vsub.f32 %v615, %v1065
        %v1117 = vsub.f32 %v694, %v1074
        %v1118 = vsub.f32 %v699, %v1074
        %v1119 = vsub.f32 %v778, %v1083
        %v1120 = vsub.f32 %v783, %v1083
        %v1121 = vsub.f32 %v862, %v1092
        %v1122 = vsub.f32 %v867, %v1092
        %v1123 = vsub.f32 %v946, %v1101
        %v1124 = vsub.f32 %v951, %v1101
        %v1125 = vsub.f32 %v1030, %v1110
        %v1126 = vsub.f32 %v1035, %v1110
        %v1127 = vmul.f32 %v1111, 1.442695
        %v1128 = vpow.pop %v1127
        %v1129 = vmul.f32 %v1112, 1.442695
        %v1130 = vpow.pop %v1129
        %v1131 = vmul.f32 %v1113, 1.442695
        %v1132 = vpow.pop %v1131
        %v1133 = vmul.f32 %v1114, 1.442695
        %v1134 = vpow.pop %v1133
        %v1135 = vmul.f32 %v1115, 1.442695
        %v1136 = vpow.pop %v1135
        %v1137 = vmul.f32 %v1116, 1.442695
        %v1138 = vpow.pop %v1137
        %v1139 = vmul.f32 %v1117, 1.442695
        %v1140 = vpow.pop %v1139
        %v1141 = vmul.f32 %v1118, 1.442695
        %v1142 = vpow.pop %v1141
        %v1143 = vmul.f32 %v1119, 1.442695
        %v1144 = vpow.pop %v1143
        %v1145 = vmul.f32 %v1120, 1.442695
        %v1146 = vpow.pop %v1145
        %v1147 = vmul.f32 %v1121, 1.442695
        %v1148 = vpow.pop %v1147
        %v1149 = vmul.f32 %v1122, 1.442695
        %v1150 = vpow.pop %v1149
        %v1151 = vmul.f32 %v1123, 1.442695
        %v1152 = vpow.pop %v1151
        %v1153 = vmul.f32 %v1124, 1.442695
        %v1154 = vpow.pop %v1153
        %v1155 = vmul.f32 %v1125, 1.442695
        %v1156 = vpow.pop %v1155
        %v1157 = vmul.f32 %v1126, 1.442695
        %v1158 = vpow.pop %v1157
        %v1159 = vsel %vm1038, %v1128, 0.0
        %v1160 = vsel %vm1038, %v1130, 0.0
        %v1161 = vadd.f32 %v1159, %v1160
        %v1162 = vrot.slane %v1161, 4
        %v1163 = vadd.f32 %v1161, %v1162
        %v1164 = vrot.slane %v1163, 2
        %v1165 = vadd.f32 %v1163, %v1164
        %v1166 = vrot.slane %v1165, 1
        %v1167 = vadd.f32 %v1165, %v1166
        %v1168 = vsel %vm1038, %v1132, 0.0
        %v1169 = vsel %vm1038, %v1134, 0.0
        %v1170 = vadd.f32 %v1168, %v1169
        %v1171 = vrot.slane %v1170, 4
        %v1172 = vadd.f32 %v1170, %v1171
        %v1173 = vrot.slane %v1172, 2
        %v1174 = vadd.f32 %v1172, %v1173
        %v1175 = vrot.slane %v1174, 1
        %v1176 = vadd.f32 %v1174, %v1175
        %v1177 = vsel %vm1038, %v1136, 0.0
        %v1178 = vsel %vm1038, %v1138, 0.0
        %v1179 = vadd.f32 %v1177, %v1178
        %v1180 = vrot.slane %v1179, 4
        %v1181 = vadd.f32 %v1179, %v1180
        %v1182 = vrot.slane %v1181, 2
        %v1183 = vadd.f32 %v1181, %v1182
        %v1184 = vrot.slane %v1183, 1
        %v1185 = vadd.f32 %v1183, %v1184
        %v1186 = vsel %vm1038, %v1140, 0.0
        %v1187 = vsel %vm1038, %v1142, 0.0
        %v1188 = vadd.f32 %v1186, %v1187
        %v1189 = vrot.slane %v1188, 4
        %v1190 = vadd.f32 %v1188, %v1189
        %v1191 = vrot.slane %v1190, 2
        %v1192 = vadd.f32 %v1190, %v1191
        %v1193 = vrot.slane %v1192, 1
        %v1194 = vadd.f32 %v1192, %v1193
        %v1195 = vsel %vm1038, %v1144, 0.0
        %v1196 = vsel %vm1038, %v1146, 0.0
        %v1197 = vadd.f32 %v1195, %v1196
        %v1198 = vrot.slane %v1197, 4
        %v1199 = vadd.f32 %v1197, %v1198
        %v1200 = vrot.slane %v1199, 2
        %v1201 = vadd.f32 %v1199, %v1200
        %v1202 = vrot.slane %v1201, 1
        %v1203 = vadd.f32 %v1201, %v1202
        %v1204 = vsel %vm1038, %v1148, 0.0
        %v1205 = vsel %vm1038, %v1150, 0.0
        %v1206 = vadd.f32 %v1204, %v1205
        %v1207 = vrot.slane %v1206, 4
        %v1208 = vadd.f32 %v1206, %v1207
        %v1209 = vrot.slane %v1208, 2
        %v1210 = vadd.f32 %v1208, %v1209
        %v1211 = vrot.slane %v1210, 1
        %v1212 = vadd.f32 %v1210, %v1211
        %v1213 = vsel %vm1038, %v1152, 0.0
        %v1214 = vsel %vm1038, %v1154, 0.0
        %v1215 = vadd.f32 %v1213, %v1214
        %v1216 = vrot.slane %v1215, 4
        %v1217 = vadd.f32 %v1215, %v1216
        %v1218 = vrot.slane %v1217, 2
        %v1219 = vadd.f32 %v1217, %v1218
        %v1220 = vrot.slane %v1219, 1
        %v1221 = vadd.f32 %v1219, %v1220
        %v1222 = vsel %vm1038, %v1156, 0.0
        %v1223 = vsel %vm1038, %v1158, 0.0
        %v1224 = vadd.f32 %v1222, %v1223
        %v1225 = vrot.slane %v1224, 4
        %v1226 = vadd.f32 %v1224, %v1225
        %v1227 = vrot.slane %v1226, 2
        %v1228 = vadd.f32 %v1226, %v1227
        %v1229 = vrot.slane %v1228, 1
        %v1230 = vadd.f32 %v1228, %v1229
        %v1231 = vlog2.pop %v1167
        %v1232 = vmul.f32 %v1231, 0.6931472
        %v1233 = vlog2.pop %v1176
        %v1234 = vmul.f32 %v1233, 0.6931472
        %v1235 = vlog2.pop %v1185
        %v1236 = vmul.f32 %v1235, 0.6931472
        %v1237 = vlog2.pop %v1194
        %v1238 = vmul.f32 %v1237, 0.6931472
        %v1239 = vlog2.pop %v1203
        %v1240 = vmul.f32 %v1239, 0.6931472
        %v1241 = vlog2.pop %v1212
        %v1242 = vmul.f32 %v1241, 0.6931472
        %v1243 = vlog2.pop %v1221
        %v1244 = vmul.f32 %v1243, 0.6931472
        %v1245 = vlog2.pop %v1230
        %v1246 = vmul.f32 %v1245, 0.6931472
        %v1247 = vadd.f32 %v1232, %v1047
        %v1248 = vadd.f32 %v1234, %v1056
        %v1249 = vadd.f32 %v1236, %v1065
        %v1250 = vadd.f32 %v1238, %v1074
        %v1251 = vadd.f32 %v1240, %v1083
        %v1252 = vadd.f32 %v1242, %v1092
        %v1253 = vadd.f32 %v1244, %v1101
        %v1254 = vadd.f32 %v1246, %v1110
        %v1255 = vsub.f32 %v442, %v1247
        %v1256 = vsub.f32 %v447, %v1247
        %v1257 = vsub.f32 %v526, %v1248
        %v1258 = vsub.f32 %v531, %v1248
        %v1259 = vsub.f32 %v610, %v1249
        %v1260 = vsub.f32 %v615, %v1249
        %v1261 = vsub.f32 %v694, %v1250
        %v1262 = vsub.f32 %v699, %v1250
        %v1263 = vsub.f32 %v778, %v1251
        %v1264 = vsub.f32 %v783, %v1251
        %v1265 = vsub.f32 %v862, %v1252
        %v1266 = vsub.f32 %v867, %v1252
        %v1267 = vsub.f32 %v946, %v1253
        %v1268 = vsub.f32 %v951, %v1253
        %v1269 = vsub.f32 %v1030, %v1254
        %v1270 = vsub.f32 %v1035, %v1254
        %v1271 = vsel %vm1038, %v357, 0
        %v1274 = vsel %vm1038, %v1255, 0
        %v1277 = vsel %vm1038, %v1256, 0
        %1279 = vmatprep.subr.mxu0 0.0
        %1280 = vmatpush1.xpose.msra.mxu0 %v1274
        %1281 = vmatprep.subr.mxu0 0.0
        %1282 = vmatpush1.xpose.msra.mxu0 %v1277
        %1283 = vmatprep.subr.mxu0 0.0
        %1284 = vmatpush1.xpose.msra.mxu0 0.0
        %1285 = vmatprep.subr.mxu0 0.0
        %1286 = vmatpush1.xpose.msra.mxu0 0.0
        %1287 = vmatprep.subr.mxu0 0.0
        %1288 = vmatpush1.xpose.msra.mxu0 0.0
        %1289 = vmatprep.subr.mxu0 0.0
        %1290 = vmatpush1.xpose.msra.mxu0 0.0
        %1291 = vmatprep.subr.mxu0 0.0
        %1292 = vmatpush1.xpose.msra.mxu0 0.0
        %1293 = vmatprep.subr.mxu0 0.0
        %1294 = vmatpush1.xpose.msra.mxu0 0.0
        %1295 = vmatprep.subr.mxu0 0.0
        %1296 = vmatpush1.xpose.msra.mxu0 0.0
        %1297 = vmatprep.subr.mxu0 0.0
        %1298 = vmatpush1.xpose.msra.mxu0 0.0
        %1299 = vmatprep.subr.mxu0 0.0
        %1300 = vmatpush1.xpose.msra.mxu0 0.0
        %1301 = vmatprep.subr.mxu0 0.0
        %1302 = vmatpush1.xpose.msra.mxu0 0.0
        %1303 = vmatprep.subr.mxu0 0.0
        %1304 = vmatpush1.xpose.msra.mxu0 0.0
        %1305 = vmatprep.subr.mxu0 0.0
        %1306 = vmatpush1.xpose.msra.mxu0 0.0
        %1307 = vmatprep.subr.mxu0 0.0
        %1308 = vmatpush1.xpose.msra.mxu0 0.0
        %1309 = vmatprep.subr.mxu0 0.0
        %1310 = vmatpush1.xpose.msra.mxu0 0.0
        %1311 = vmatprep.subr.mxu0 0.0
        %1312 = vmatpush1.xpose.msra.mxu0 0.0
        %1313 = vmatprep.subr.mxu0 0.0
        %1314 = vmatpush1.xpose.msra.mxu0 0.0
        %1315 = vmatprep.subr.mxu0 0.0
        %1316 = vmatpush1.xpose.msra.mxu0 0.0
        %1317 = vmatprep.subr.mxu0 0.0
        %1318 = vmatpush1.xpose.msra.mxu0 0.0
        %1319 = vmatprep.subr.mxu0 0.0
        %1320 = vmatpush1.xpose.msra.mxu0 0.0
        %1321 = vmatprep.subr.mxu0 0.0
        %1322 = vmatpush1.xpose.msra.mxu0 0.0
        %1323 = vmatprep.subr.mxu0 0.0
        %1324 = vmatpush1.xpose.msra.mxu0 0.0
        %1325 = vmatprep.subr.mxu0 0.0
        %1326 = vmatpush1.xpose.msra.mxu0 0.0
        %1327 = vmatprep.subr.mxu0 0.0
        %1328 = vmatpush1.xpose.msra.mxu0 0.0
        %1329 = vmatprep.subr.mxu0 0.0
        %1330 = vmatpush1.xpose.msra.mxu0 0.0
        %1331 = vmatprep.subr.mxu0 0.0
        %1332 = vmatpush1.xpose.msra.mxu0 0.0
        %1333 = vmatprep.subr.mxu0 0.0
        %1334 = vmatpush1.xpose.msra.mxu0 0.0
        %1335 = vmatprep.subr.mxu0 0.0
        %1336 = vmatpush1.xpose.msra.mxu0 0.0
        %1337 = vmatprep.subr.mxu0 0.0
        %1338 = vmatpush1.xpose.msra.mxu0 0.0
        %1339 = vmatprep.subr.mxu0 0.0
        %1340 = vmatpush1.xpose.msra.mxu0 0.0
        %1341 = vmatprep.subr.mxu0 0.0
        %1342 = vmatpush1.xpose.msra.mxu0 0.0
        %1343 = vmatprep.mubr.f32.mxu0 0.0
        %1344 = vmatmul.mubr.f32.gmra.mrb[0].mxu0 %v1271
        %v1345 = vpop.f32.mrb[0].mxu0
        %v1346 = vadd.f32 0.0, %v1345
        %v1347 = vpop.f32.mrb[0].mxu0
        %1348 = vdwg.mxu0
        %v1349 = vsel %vm1038, %v358, 0
        %v1352 = vsel %vm1038, %v1257, 0
        %v1355 = vsel %vm1038, %v1258, 0
        %1357 = vmatprep.subr.mxu0 0.0
        %1358 = vmatpush1.xpose.msra.mxu0 %v1352
        %1359 = vmatprep.subr.mxu0 0.0
        %1360 = vmatpush1.xpose.msra.mxu0 %v1355
        %1361 = vmatprep.subr.mxu0 0.0
        %1362 = vmatpush1.xpose.msra.mxu0 0.0
        %1363 = vmatprep.subr.mxu0 0.0
        %1364 = vmatpush1.xpose.msra.mxu0 0.0
        %1365 = vmatprep.subr.mxu0 0.0
        %1366 = vmatpush1.xpose.msra.mxu0 0.0
        %1367 = vmatprep.subr.mxu0 0.0
        %1368 = vmatpush1.xpose.msra.mxu0 0.0
        %1369 = vmatprep.subr.mxu0 0.0
        %1370 = vmatpush1.xpose.msra.mxu0 0.0
        %1371 = vmatprep.subr.mxu0 0.0
        %1372 = vmatpush1.xpose.msra.mxu0 0.0
        %1373 = vmatprep.subr.mxu0 0.0
        %1374 = vmatpush1.xpose.msra.mxu0 0.0
        %1375 = vmatprep.subr.mxu0 0.0
        %1376 = vmatpush1.xpose.msra.mxu0 0.0
        %1377 = vmatprep.subr.mxu0 0.0
        %1378 = vmatpush1.xpose.msra.mxu0 0.0
        %1379 = vmatprep.subr.mxu0 0.0
        %1380 = vmatpush1.xpose.msra.mxu0 0.0
        %1381 = vmatprep.subr.mxu0 0.0
        %1382 = vmatpush1.xpose.msra.mxu0 0.0
        %1383 = vmatprep.subr.mxu0 0.0
        %1384 = vmatpush1.xpose.msra.mxu0 0.0
        %1385 = vmatprep.subr.mxu0 0.0
        %1386 = vmatpush1.xpose.msra.mxu0 0.0
        %1387 = vmatprep.subr.mxu0 0.0
        %1388 = vmatpush1.xpose.msra.mxu0 0.0
        %1389 = vmatprep.subr.mxu0 0.0
        %1390 = vmatpush1.xpose.msra.mxu0 0.0
        %1391 = vmatprep.subr.mxu0 0.0
        %1392 = vmatpush1.xpose.msra.mxu0 0.0
        %1393 = vmatprep.subr.mxu0 0.0
        %1394 = vmatpush1.xpose.msra.mxu0 0.0
        %1395 = vmatprep.subr.mxu0 0.0
        %1396 = vmatpush1.xpose.msra.mxu0 0.0
        %1397 = vmatprep.subr.mxu0 0.0
        %1398 = vmatpush1.xpose.msra.mxu0 0.0
        %1399 = vmatprep.subr.mxu0 0.0
        %1400 = vmatpush1.xpose.msra.mxu0 0.0
        %1401 = vmatprep.subr.mxu0 0.0
        %1402 = vmatpush1.xpose.msra.mxu0 0.0
        %1403 = vmatprep.subr.mxu0 0.0
        %1404 = vmatpush1.xpose.msra.mxu0 0.0
        %1405 = vmatprep.subr.mxu0 0.0
        %1406 = vmatpush1.xpose.msra.mxu0 0.0
        %1407 = vmatprep.subr.mxu0 0.0
        %1408 = vmatpush1.xpose.msra.mxu0 0.0
        %1409 = vmatprep.subr.mxu0 0.0
        %1410 = vmatpush1.xpose.msra.mxu0 0.0
        %1411 = vmatprep.subr.mxu0 0.0
        %1412 = vmatpush1.xpose.msra.mxu0 0.0
        %1413 = vmatprep.subr.mxu0 0.0
        %1414 = vmatpush1.xpose.msra.mxu0 0.0
        %1415 = vmatprep.subr.mxu0 0.0
        %1416 = vmatpush1.xpose.msra.mxu0 0.0
        %1417 = vmatprep.subr.mxu0 0.0
        %1418 = vmatpush1.xpose.msra.mxu0 0.0
        %1419 = vmatprep.subr.mxu0 0.0
        %1420 = vmatpush1.xpose.msra.mxu0 0.0
        %1421 = vmatprep.mubr.f32.mxu0 0.0
        %1422 = vmatmul.mubr.f32.gmra.mrb[0].mxu0 %v1349
        %v1423 = vpop.f32.mrb[0].mxu0
        %v1424 = vadd.f32 0.0, %v1423
        %v1425 = vpop.f32.mrb[0].mxu0
        %1426 = vdwg.mxu0
        %v1427 = vsel %vm1038, %v359, 0
        %v1430 = vsel %vm1038, %v1259, 0
        %v1433 = vsel %vm1038, %v1260, 0
        %1435 = vmatprep.subr.mxu0 0.0
        %1436 = vmatpush1.xpose.msra.mxu0 %v1430
        %1437 = vmatprep.subr.mxu0 0.0
        %1438 = vmatpush1.xpose.msra.mxu0 %v1433
        %1439 = vmatprep.subr.mxu0 0.0
        %1440 = vmatpush1.xpose.msra.mxu0 0.0
        %1441 = vmatprep.subr.mxu0 0.0
        %1442 = vmatpush1.xpose.msra.mxu0 0.0
        %1443 = vmatprep.subr.mxu0 0.0
        %1444 = vmatpush1.xpose.msra.mxu0 0.0
        %1445 = vmatprep.subr.mxu0 0.0
        %1446 = vmatpush1.xpose.msra.mxu0 0.0
        %1447 = vmatprep.subr.mxu0 0.0
        %1448 = vmatpush1.xpose.msra.mxu0 0.0
        %1449 = vmatprep.subr.mxu0 0.0
        %1450 = vmatpush1.xpose.msra.mxu0 0.0
        %1451 = vmatprep.subr.mxu0 0.0
        %1452 = vmatpush1.xpose.msra.mxu0 0.0
        %1453 = vmatprep.subr.mxu0 0.0
        %1454 = vmatpush1.xpose.msra.mxu0 0.0
        %1455 = vmatprep.subr.mxu0 0.0
        %1456 = vmatpush1.xpose.msra.mxu0 0.0
        %1457 = vmatprep.subr.mxu0 0.0
        %1458 = vmatpush1.xpose.msra.mxu0 0.0
        %1459 = vmatprep.subr.mxu0 0.0
        %1460 = vmatpush1.xpose.msra.mxu0 0.0
        %1461 = vmatprep.subr.mxu0 0.0
        %1462 = vmatpush1.xpose.msra.mxu0 0.0
        %1463 = vmatprep.subr.mxu0 0.0
        %1464 = vmatpush1.xpose.msra.mxu0 0.0
        %1465 = vmatprep.subr.mxu0 0.0
        %1466 = vmatpush1.xpose.msra.mxu0 0.0
        %1467 = vmatprep.subr.mxu0 0.0
        %1468 = vmatpush1.xpose.msra.mxu0 0.0
        %1469 = vmatprep.subr.mxu0 0.0
        %1470 = vmatpush1.xpose.msra.mxu0 0.0
        %1471 = vmatprep.subr.mxu0 0.0
        %1472 = vmatpush1.xpose.msra.mxu0 0.0
        %1473 = vmatprep.subr.mxu0 0.0
        %1474 = vmatpush1.xpose.msra.mxu0 0.0
        %1475 = vmatprep.subr.mxu0 0.0
        %1476 = vmatpush1.xpose.msra.mxu0 0.0
        %1477 = vmatprep.subr.mxu0 0.0
        %1478 = vmatpush1.xpose.msra.mxu0 0.0
        %1479 = vmatprep.subr.mxu0 0.0
        %1480 = vmatpush1.xpose.msra.mxu0 0.0
        %1481 = vmatprep.subr.mxu0 0.0
        %1482 = vmatpush1.xpose.msra.mxu0 0.0
        %1483 = vmatprep.subr.mxu0 0.0
        %1484 = vmatpush1.xpose.msra.mxu0 0.0
        %1485 = vmatprep.subr.mxu0 0.0
        %1486 = vmatpush1.xpose.msra.mxu0 0.0
        %1487 = vmatprep.subr.mxu0 0.0
        %1488 = vmatpush1.xpose.msra.mxu0 0.0
        %1489 = vmatprep.subr.mxu0 0.0
        %1490 = vmatpush1.xpose.msra.mxu0 0.0
        %1491 = vmatprep.subr.mxu0 0.0
        %1492 = vmatpush1.xpose.msra.mxu0 0.0
        %1493 = vmatprep.subr.mxu0 0.0
        %1494 = vmatpush1.xpose.msra.mxu0 0.0
        %1495 = vmatprep.subr.mxu0 0.0
        %1496 = vmatpush1.xpose.msra.mxu0 0.0
        %1497 = vmatprep.subr.mxu0 0.0
        %1498 = vmatpush1.xpose.msra.mxu0 0.0
        %1499 = vmatprep.mubr.f32.mxu0 0.0
        %1500 = vmatmul.mubr.f32.gmra.mrb[0].mxu0 %v1427
        %v1501 = vpop.f32.mrb[0].mxu0
        %v1502 = vadd.f32 0.0, %v1501
        %v1503 = vpop.f32.mrb[0].mxu0
        %1504 = vdwg.mxu0
        %v1505 = vsel %vm1038, %v360, 0
        %v1508 = vsel %vm1038, %v1261, 0
        %v1511 = vsel %vm1038, %v1262, 0
        %1513 = vmatprep.subr.mxu0 0.0
        %1514 = vmatpush1.xpose.msra.mxu0 %v1508
        %1515 = vmatprep.subr.mxu0 0.0
        %1516 = vmatpush1.xpose.msra.mxu0 %v1511
        %1517 = vmatprep.subr.mxu0 0.0
        %1518 = vmatpush1.xpose.msra.mxu0 0.0
        %1519 = vmatprep.subr.mxu0 0.0
        %1520 = vmatpush1.xpose.msra.mxu0 0.0
        %1521 = vmatprep.subr.mxu0 0.0
        %1522 = vmatpush1.xpose.msra.mxu0 0.0
        %1523 = vmatprep.subr.mxu0 0.0
        %1524 = vmatpush1.xpose.msra.mxu0 0.0
        %1525 = vmatprep.subr.mxu0 0.0
        %1526 = vmatpush1.xpose.msra.mxu0 0.0
        %1527 = vmatprep.subr.mxu0 0.0
        %1528 = vmatpush1.xpose.msra.mxu0 0.0
        %1529 = vmatprep.subr.mxu0 0.0
        %1530 = vmatpush1.xpose.msra.mxu0 0.0
        %1531 = vmatprep.subr.mxu0 0.0
        %1532 = vmatpush1.xpose.msra.mxu0 0.0
        %1533 = vmatprep.subr.mxu0 0.0
        %1534 = vmatpush1.xpose.msra.mxu0 0.0
        %1535 = vmatprep.subr.mxu0 0.0
        %1536 = vmatpush1.xpose.msra.mxu0 0.0
        %1537 = vmatprep.subr.mxu0 0.0
        %1538 = vmatpush1.xpose.msra.mxu0 0.0
        %1539 = vmatprep.subr.mxu0 0.0
        %1540 = vmatpush1.xpose.msra.mxu0 0.0
        %1541 = vmatprep.subr.mxu0 0.0
        %1542 = vmatpush1.xpose.msra.mxu0 0.0
        %1543 = vmatprep.subr.mxu0 0.0
        %1544 = vmatpush1.xpose.msra.mxu0 0.0
        %1545 = vmatprep.subr.mxu0 0.0
        %1546 = vmatpush1.xpose.msra.mxu0 0.0
        %1547 = vmatprep.subr.mxu0 0.0
        %1548 = vmatpush1.xpose.msra.mxu0 0.0
        %1549 = vmatprep.subr.mxu0 0.0
        %1550 = vmatpush1.xpose.msra.mxu0 0.0
        %1551 = vmatprep.subr.mxu0 0.0
        %1552 = vmatpush1.xpose.msra.mxu0 0.0
        %1553 = vmatprep.subr.mxu0 0.0
        %1554 = vmatpush1.xpose.msra.mxu0 0.0
        %1555 = vmatprep.subr.mxu0 0.0
        %1556 = vmatpush1.xpose.msra.mxu0 0.0
        %1557 = vmatprep.subr.mxu0 0.0
        %1558 = vmatpush1.xpose.msra.mxu0 0.0
        %1559 = vmatprep.subr.mxu0 0.0
        %1560 = vmatpush1.xpose.msra.mxu0 0.0
        %1561 = vmatprep.subr.mxu0 0.0
        %1562 = vmatpush1.xpose.msra.mxu0 0.0
        %1563 = vmatprep.subr.mxu0 0.0
        %1564 = vmatpush1.xpose.msra.mxu0 0.0
        %1565 = vmatprep.subr.mxu0 0.0
        %1566 = vmatpush1.xpose.msra.mxu0 0.0
        %1567 = vmatprep.subr.mxu0 0.0
        %1568 = vmatpush1.xpose.msra.mxu0 0.0
        %1569 = vmatprep.subr.mxu0 0.0
        %1570 = vmatpush1.xpose.msra.mxu0 0.0
        %1571 = vmatprep.subr.mxu0 0.0
        %1572 = vmatpush1.xpose.msra.mxu0 0.0
        %1573 = vmatprep.subr.mxu0 0.0
        %1574 = vmatpush1.xpose.msra.mxu0 0.0
        %1575 = vmatprep.subr.mxu0 0.0
        %1576 = vmatpush1.xpose.msra.mxu0 0.0
        %1577 = vmatprep.mubr.f32.mxu0 0.0
        %1578 = vmatmul.mubr.f32.gmra.mrb[0].mxu0 %v1505
        %v1579 = vpop.f32.mrb[0].mxu0
        %v1580 = vadd.f32 0.0, %v1579
        %v1581 = vpop.f32.mrb[0].mxu0
        %1582 = vdwg.mxu0
        %v1583 = vsel %vm1038, %v361, 0
        %v1586 = vsel %vm1038, %v1263, 0
        %v1589 = vsel %vm1038, %v1264, 0
        %1591 = vmatprep.subr.mxu0 0.0
        %1592 = vmatpush1.xpose.msra.mxu0 %v1586
        %1593 = vmatprep.subr.mxu0 0.0
        %1594 = vmatpush1.xpose.msra.mxu0 %v1589
        %1595 = vmatprep.subr.mxu0 0.0
        %1596 = vmatpush1.xpose.msra.mxu0 0.0
        %1597 = vmatprep.subr.mxu0 0.0
        %1598 = vmatpush1.xpose.msra.mxu0 0.0
        %1599 = vmatprep.subr.mxu0 0.0
        %1600 = vmatpush1.xpose.msra.mxu0 0.0
        %1601 = vmatprep.subr.mxu0 0.0
        %1602 = vmatpush1.xpose.msra.mxu0 0.0
        %1603 = vmatprep.subr.mxu0 0.0
        %1604 = vmatpush1.xpose.msra.mxu0 0.0
        %1605 = vmatprep.subr.mxu0 0.0
        %1606 = vmatpush1.xpose.msra.mxu0 0.0
        %1607 = vmatprep.subr.mxu0 0.0
        %1608 = vmatpush1.xpose.msra.mxu0 0.0
        %1609 = vmatprep.subr.mxu0 0.0
        %1610 = vmatpush1.xpose.msra.mxu0 0.0
        %1611 = vmatprep.subr.mxu0 0.0
        %1612 = vmatpush1.xpose.msra.mxu0 0.0
        %1613 = vmatprep.subr.mxu0 0.0
        %1614 = vmatpush1.xpose.msra.mxu0 0.0
        %1615 = vmatprep.subr.mxu0 0.0
        %1616 = vmatpush1.xpose.msra.mxu0 0.0
        %1617 = vmatprep.subr.mxu0 0.0
        %1618 = vmatpush1.xpose.msra.mxu0 0.0
        %1619 = vmatprep.subr.mxu0 0.0
        %1620 = vmatpush1.xpose.msra.mxu0 0.0
        %1621 = vmatprep.subr.mxu0 0.0
        %1622 = vmatpush1.xpose.msra.mxu0 0.0
        %1623 = vmatprep.subr.mxu0 0.0
        %1624 = vmatpush1.xpose.msra.mxu0 0.0
        %1625 = vmatprep.subr.mxu0 0.0
        %1626 = vmatpush1.xpose.msra.mxu0 0.0
        %1627 = vmatprep.subr.mxu0 0.0
        %1628 = vmatpush1.xpose.msra.mxu0 0.0
        %1629 = vmatprep.subr.mxu0 0.0
        %1630 = vmatpush1.xpose.msra.mxu0 0.0
        %1631 = vmatprep.subr.mxu0 0.0
        %1632 = vmatpush1.xpose.msra.mxu0 0.0
        %1633 = vmatprep.subr.mxu0 0.0
        %1634 = vmatpush1.xpose.msra.mxu0 0.0
        %1635 = vmatprep.subr.mxu0 0.0
        %1636 = vmatpush1.xpose.msra.mxu0 0.0
        %1637 = vmatprep.subr.mxu0 0.0
        %1638 = vmatpush1.xpose.msra.mxu0 0.0
        %1639 = vmatprep.subr.mxu0 0.0
        %1640 = vmatpush1.xpose.msra.mxu0 0.0
        %1641 = vmatprep.subr.mxu0 0.0
        %1642 = vmatpush1.xpose.msra.mxu0 0.0
        %1643 = vmatprep.subr.mxu0 0.0
        %1644 = vmatpush1.xpose.msra.mxu0 0.0
        %1645 = vmatprep.subr.mxu0 0.0
        %1646 = vmatpush1.xpose.msra.mxu0 0.0
        %1647 = vmatprep.subr.mxu0 0.0
        %1648 = vmatpush1.xpose.msra.mxu0 0.0
        %1649 = vmatprep.subr.mxu0 0.0
        %1650 = vmatpush1.xpose.msra.mxu0 0.0
        %1651 = vmatprep.subr.mxu0 0.0
        %1652 = vmatpush1.xpose.msra.mxu0 0.0
        %1653 = vmatprep.subr.mxu0 0.0
        %1654 = vmatpush1.xpose.msra.mxu0 0.0
        %1655 = vmatprep.mubr.f32.mxu0 0.0
        %1656 = vmatmul.mubr.f32.gmra.mrb[0].mxu0 %v1583
        %v1657 = vpop.f32.mrb[0].mxu0
        %v1658 = vadd.f32 0.0, %v1657
        %v1659 = vpop.f32.mrb[0].mxu0
        %1660 = vdwg.mxu0
        %v1661 = vsel %vm1038, %v362, 0
        %v1664 = vsel %vm1038, %v1265, 0
        %v1667 = vsel %vm1038, %v1266, 0
        %1669 = vmatprep.subr.mxu0 0.0
        %1670 = vmatpush1.xpose.msra.mxu0 %v1664
        %1671 = vmatprep.subr.mxu0 0.0
        %1672 = vmatpush1.xpose.msra.mxu0 %v1667
        %1673 = vmatprep.subr.mxu0 0.0
        %1674 = vmatpush1.xpose.msra.mxu0 0.0
        %1675 = vmatprep.subr.mxu0 0.0
        %1676 = vmatpush1.xpose.msra.mxu0 0.0
        %1677 = vmatprep.subr.mxu0 0.0
        %1678 = vmatpush1.xpose.msra.mxu0 0.0
        %1679 = vmatprep.subr.mxu0 0.0
        %1680 = vmatpush1.xpose.msra.mxu0 0.0
        %1681 = vmatprep.subr.mxu0 0.0
        %1682 = vmatpush1.xpose.msra.mxu0 0.0
        %1683 = vmatprep.subr.mxu0 0.0
        %1684 = vmatpush1.xpose.msra.mxu0 0.0
        %1685 = vmatprep.subr.mxu0 0.0
        %1686 = vmatpush1.xpose.msra.mxu0 0.0
        %1687 = vmatprep.subr.mxu0 0.0
        %1688 = vmatpush1.xpose.msra.mxu0 0.0
        %1689 = vmatprep.subr.mxu0 0.0
        %1690 = vmatpush1.xpose.msra.mxu0 0.0
        %1691 = vmatprep.subr.mxu0 0.0
        %1692 = vmatpush1.xpose.msra.mxu0 0.0
        %1693 = vmatprep.subr.mxu0 0.0
        %1694 = vmatpush1.xpose.msra.mxu0 0.0
        %1695 = vmatprep.subr.mxu0 0.0
        %1696 = vmatpush1.xpose.msra.mxu0 0.0
        %1697 = vmatprep.subr.mxu0 0.0
        %1698 = vmatpush1.xpose.msra.mxu0 0.0
        %1699 = vmatprep.subr.mxu0 0.0
        %1700 = vmatpush1.xpose.msra.mxu0 0.0
        %1701 = vmatprep.subr.mxu0 0.0
        %1702 = vmatpush1.xpose.msra.mxu0 0.0
        %1703 = vmatprep.subr.mxu0 0.0
        %1704 = vmatpush1.xpose.msra.mxu0 0.0
        %1705 = vmatprep.subr.mxu0 0.0
        %1706 = vmatpush1.xpose.msra.mxu0 0.0
        %1707 = vmatprep.subr.mxu0 0.0
        %1708 = vmatpush1.xpose.msra.mxu0 0.0
        %1709 = vmatprep.subr.mxu0 0.0
        %1710 = vmatpush1.xpose.msra.mxu0 0.0
        %1711 = vmatprep.subr.mxu0 0.0
        %1712 = vmatpush1.xpose.msra.mxu0 0.0
        %1713 = vmatprep.subr.mxu0 0.0
        %1714 = vmatpush1.xpose.msra.mxu0 0.0
        %1715 = vmatprep.subr.mxu0 0.0
        %1716 = vmatpush1.xpose.msra.mxu0 0.0
        %1717 = vmatprep.subr.mxu0 0.0
        %1718 = vmatpush1.xpose.msra.mxu0 0.0
        %1719 = vmatprep.subr.mxu0 0.0
        %1720 = vmatpush1.xpose.msra.mxu0 0.0
        %1721 = vmatprep.subr.mxu0 0.0
        %1722 = vmatpush1.xpose.msra.mxu0 0.0
        %1723 = vmatprep.subr.mxu0 0.0
        %1724 = vmatpush1.xpose.msra.mxu0 0.0
        %1725 = vmatprep.subr.mxu0 0.0
        %1726 = vmatpush1.xpose.msra.mxu0 0.0
        %1727 = vmatprep.subr.mxu0 0.0
        %1728 = vmatpush1.xpose.msra.mxu0 0.0
        %1729 = vmatprep.subr.mxu0 0.0
        %1730 = vmatpush1.xpose.msra.mxu0 0.0
        %1731 = vmatprep.subr.mxu0 0.0
        %1732 = vmatpush1.xpose.msra.mxu0 0.0
        %1733 = vmatprep.mubr.f32.mxu0 0.0
        %1734 = vmatmul.mubr.f32.gmra.mrb[0].mxu0 %v1661
        %v1735 = vpop.f32.mrb[0].mxu0
        %v1736 = vadd.f32 0.0, %v1735
        %v1737 = vpop.f32.mrb[0].mxu0
        %1738 = vdwg.mxu0
        %v1739 = vsel %vm1038, %v363, 0
        %v1742 = vsel %vm1038, %v1267, 0
        %v1745 = vsel %vm1038, %v1268, 0
        %1747 = vmatprep.subr.mxu0 0.0
        %1748 = vmatpush1.xpose.msra.mxu0 %v1742
        %1749 = vmatprep.subr.mxu0 0.0
        %1750 = vmatpush1.xpose.msra.mxu0 %v1745
        %1751 = vmatprep.subr.mxu0 0.0
        %1752 = vmatpush1.xpose.msra.mxu0 0.0
        %1753 = vmatprep.subr.mxu0 0.0
        %1754 = vmatpush1.xpose.msra.mxu0 0.0
        %1755 = vmatprep.subr.mxu0 0.0
        %1756 = vmatpush1.xpose.msra.mxu0 0.0
        %1757 = vmatprep.subr.mxu0 0.0
        %1758 = vmatpush1.xpose.msra.mxu0 0.0
        %1759 = vmatprep.subr.mxu0 0.0
        %1760 = vmatpush1.xpose.msra.mxu0 0.0
        %1761 = vmatprep.subr.mxu0 0.0
        %1762 = vmatpush1.xpose.msra.mxu0 0.0
        %1763 = vmatprep.subr.mxu0 0.0
        %1764 = vmatpush1.xpose.msra.mxu0 0.0
        %1765 = vmatprep.subr.mxu0 0.0
        %1766 = vmatpush1.xpose.msra.mxu0 0.0
        %1767 = vmatprep.subr.mxu0 0.0
        %1768 = vmatpush1.xpose.msra.mxu0 0.0
        %1769 = vmatprep.subr.mxu0 0.0
        %1770 = vmatpush1.xpose.msra.mxu0 0.0
        %1771 = vmatprep.subr.mxu0 0.0
        %1772 = vmatpush1.xpose.msra.mxu0 0.0
        %1773 = vmatprep.subr.mxu0 0.0
        %1774 = vmatpush1.xpose.msra.mxu0 0.0
        %1775 = vmatprep.subr.mxu0 0.0
        %1776 = vmatpush1.xpose.msra.mxu0 0.0
        %1777 = vmatprep.subr.mxu0 0.0
        %1778 = vmatpush1.xpose.msra.mxu0 0.0
        %1779 = vmatprep.subr.mxu0 0.0
        %1780 = vmatpush1.xpose.msra.mxu0 0.0
        %1781 = vmatprep.subr.mxu0 0.0
        %1782 = vmatpush1.xpose.msra.mxu0 0.0
        %1783 = vmatprep.subr.mxu0 0.0
        %1784 = vmatpush1.xpose.msra.mxu0 0.0
        %1785 = vmatprep.subr.mxu0 0.0
        %1786 = vmatpush1.xpose.msra.mxu0 0.0
        %1787 = vmatprep.subr.mxu0 0.0
        %1788 = vmatpush1.xpose.msra.mxu0 0.0
        %1789 = vmatprep.subr.mxu0 0.0
        %1790 = vmatpush1.xpose.msra.mxu0 0.0
        %1791 = vmatprep.subr.mxu0 0.0
        %1792 = vmatpush1.xpose.msra.mxu0 0.0
        %1793 = vmatprep.subr.mxu0 0.0
        %1794 = vmatpush1.xpose.msra.mxu0 0.0
        %1795 = vmatprep.subr.mxu0 0.0
        %1796 = vmatpush1.xpose.msra.mxu0 0.0
        %1797 = vmatprep.subr.mxu0 0.0
        %1798 = vmatpush1.xpose.msra.mxu0 0.0
        %1799 = vmatprep.subr.mxu0 0.0
        %1800 = vmatpush1.xpose.msra.mxu0 0.0
        %1801 = vmatprep.subr.mxu0 0.0
        %1802 = vmatpush1.xpose.msra.mxu0 0.0
        %1803 = vmatprep.subr.mxu0 0.0
        %1804 = vmatpush1.xpose.msra.mxu0 0.0
        %1805 = vmatprep.subr.mxu0 0.0
        %1806 = vmatpush1.xpose.msra.mxu0 0.0
        %1807 = vmatprep.subr.mxu0 0.0
        %1808 = vmatpush1.xpose.msra.mxu0 0.0
        %1809 = vmatprep.subr.mxu0 0.0
        %1810 = vmatpush1.xpose.msra.mxu0 0.0
        %1811 = vmatprep.mubr.f32.mxu0 0.0
        %1812 = vmatmul.mubr.f32.gmra.mrb[0].mxu0 %v1739
        %v1813 = vpop.f32.mrb[0].mxu0
        %v1814 = vadd.f32 0.0, %v1813
        %v1815 = vpop.f32.mrb[0].mxu0
        %1816 = vdwg.mxu0
        %v1817 = vsel %vm1038, %v364, 0
        %v1820 = vsel %vm1038, %v1269, 0
        %v1823 = vsel %vm1038, %v1270, 0
        %1825 = vmatprep.subr.mxu0 0.0
        %1826 = vmatpush1.xpose.msra.mxu0 %v1820
        %1827 = vmatprep.subr.mxu0 0.0
        %1828 = vmatpush1.xpose.msra.mxu0 %v1823
        %1829 = vmatprep.subr.mxu0 0.0
        %1830 = vmatpush1.xpose.msra.mxu0 0.0
        %1831 = vmatprep.subr.mxu0 0.0
        %1832 = vmatpush1.xpose.msra.mxu0 0.0
        %1833 = vmatprep.subr.mxu0 0.0
        %1834 = vmatpush1.xpose.msra.mxu0 0.0
        %1835 = vmatprep.subr.mxu0 0.0
        %1836 = vmatpush1.xpose.msra.mxu0 0.0
        %1837 = vmatprep.subr.mxu0 0.0
        %1838 = vmatpush1.xpose.msra.mxu0 0.0
        %1839 = vmatprep.subr.mxu0 0.0
        %1840 = vmatpush1.xpose.msra.mxu0 0.0
        %1841 = vmatprep.subr.mxu0 0.0
        %1842 = vmatpush1.xpose.msra.mxu0 0.0
        %1843 = vmatprep.subr.mxu0 0.0
        %1844 = vmatpush1.xpose.msra.mxu0 0.0
        %1845 = vmatprep.subr.mxu0 0.0
        %1846 = vmatpush1.xpose.msra.mxu0 0.0
        %1847 = vmatprep.subr.mxu0 0.0
        %1848 = vmatpush1.xpose.msra.mxu0 0.0
        %1849 = vmatprep.subr.mxu0 0.0
        %1850 = vmatpush1.xpose.msra.mxu0 0.0
        %1851 = vmatprep.subr.mxu0 0.0
        %1852 = vmatpush1.xpose.msra.mxu0 0.0
        %1853 = vmatprep.subr.mxu0 0.0
        %1854 = vmatpush1.xpose.msra.mxu0 0.0
        %1855 = vmatprep.subr.mxu0 0.0
        %1856 = vmatpush1.xpose.msra.mxu0 0.0
        %1857 = vmatprep.subr.mxu0 0.0
        %1858 = vmatpush1.xpose.msra.mxu0 0.0
        %1859 = vmatprep.subr.mxu0 0.0
        %1860 = vmatpush1.xpose.msra.mxu0 0.0
        %1861 = vmatprep.subr.mxu0 0.0
        %1862 = vmatpush1.xpose.msra.mxu0 0.0
        %1863 = vmatprep.subr.mxu0 0.0
        %1864 = vmatpush1.xpose.msra.mxu0 0.0
        %1865 = vmatprep.subr.mxu0 0.0
        %1866 = vmatpush1.xpose.msra.mxu0 0.0
        %1867 = vmatprep.subr.mxu0 0.0
        %1868 = vmatpush1.xpose.msra.mxu0 0.0
        %1869 = vmatprep.subr.mxu0 0.0
        %1870 = vmatpush1.xpose.msra.mxu0 0.0
        %1871 = vmatprep.subr.mxu0 0.0
        %1872 = vmatpush1.xpose.msra.mxu0 0.0
        %1873 = vmatprep.subr.mxu0 0.0
        %1874 = vmatpush1.xpose.msra.mxu0 0.0
        %1875 = vmatprep.subr.mxu0 0.0
        %1876 = vmatpush1.xpose.msra.mxu0 0.0
        %1877 = vmatprep.subr.mxu0 0.0
        %1878 = vmatpush1.xpose.msra.mxu0 0.0
        %1879 = vmatprep.subr.mxu0 0.0
        %1880 = vmatpush1.xpose.msra.mxu0 0.0
        %1881 = vmatprep.subr.mxu0 0.0
        %1882 = vmatpush1.xpose.msra.mxu0 0.0
        %1883 = vmatprep.subr.mxu0 0.0
        %1884 = vmatpush1.xpose.msra.mxu0 0.0
        %1885 = vmatprep.subr.mxu0 0.0
        %1886 = vmatpush1.xpose.msra.mxu0 0.0
        %1887 = vmatprep.subr.mxu0 0.0
        %1888 = vmatpush1.xpose.msra.mxu0 0.0
        %1889 = vmatprep.mubr.f32.mxu0 0.0
        %1890 = vmatmul.mubr.f32.gmra.mrb[0].mxu0 %v1817
        %v1891 = vpop.f32.mrb[0].mxu0
        %v1892 = vadd.f32 0.0, %v1891
        %v1893 = vpop.f32.mrb[0].mxu0
        %1894 = vdwg.mxu0
        %1896 = vrot.lane.b32.xlu0 %v221, 96
        %v1897 = vpop.permute.xlu0 %1896
        %v1898 = vsel %vm365, %v1897, 0
        %v1901 = vsel %vm248, %v1346, 0
        %1903 = vmatprep.subr.mxu0 0.0
        %1904 = vmatpush1.msra.mxu0 %v1901
        %1905 = vmatprep.subr.mxu0 0.0
        %1906 = vmatpush1.msra.mxu0 0.0
        %1907 = vmatprep.subr.mxu0 0.0
        %1908 = vmatpush1.msra.mxu0 0.0
        %1909 = vmatprep.subr.mxu0 0.0
        %1910 = vmatpush1.msra.mxu0 0.0
        %1911 = vmatprep.subr.mxu0 0.0
        %1912 = vmatpush1.msra.mxu0 0.0
        %1913 = vmatprep.subr.mxu0 0.0
        %1914 = vmatpush1.msra.mxu0 0.0
        %1915 = vmatprep.subr.mxu0 0.0
        %1916 = vmatpush1.msra.mxu0 0.0
        %1917 = vmatprep.subr.mxu0 0.0
        %1918 = vmatpush1.msra.mxu0 0.0
        %1919 = vmatprep.subr.mxu0 0.0
        %1920 = vmatpush1.msra.mxu0 0.0
        %1921 = vmatprep.subr.mxu0 0.0
        %1922 = vmatpush1.msra.mxu0 0.0
        %1923 = vmatprep.subr.mxu0 0.0
        %1924 = vmatpush1.msra.mxu0 0.0
        %1925 = vmatprep.subr.mxu0 0.0
        %1926 = vmatpush1.msra.mxu0 0.0
        %1927 = vmatprep.subr.mxu0 0.0
        %1928 = vmatpush1.msra.mxu0 0.0
        %1929 = vmatprep.subr.mxu0 0.0
        %1930 = vmatpush1.msra.mxu0 0.0
        %1931 = vmatprep.subr.mxu0 0.0
        %1932 = vmatpush1.msra.mxu0 0.0
        %1933 = vmatprep.subr.mxu0 0.0
        %1934 = vmatpush1.msra.mxu0 0.0
        %1935 = vmatprep.subr.mxu0 0.0
        %1936 = vmatpush1.msra.mxu0 0.0
        %1937 = vmatprep.subr.mxu0 0.0
        %1938 = vmatpush1.msra.mxu0 0.0
        %1939 = vmatprep.subr.mxu0 0.0
        %1940 = vmatpush1.msra.mxu0 0.0
        %1941 = vmatprep.subr.mxu0 0.0
        %1942 = vmatpush1.msra.mxu0 0.0
        %1943 = vmatprep.subr.mxu0 0.0
        %1944 = vmatpush1.msra.mxu0 0.0
        %1945 = vmatprep.subr.mxu0 0.0
        %1946 = vmatpush1.msra.mxu0 0.0
        %1947 = vmatprep.subr.mxu0 0.0
        %1948 = vmatpush1.msra.mxu0 0.0
        %1949 = vmatprep.subr.mxu0 0.0
        %1950 = vmatpush1.msra.mxu0 0.0
        %1951 = vmatprep.subr.mxu0 0.0
        %1952 = vmatpush1.msra.mxu0 0.0
        %1953 = vmatprep.subr.mxu0 0.0
        %1954 = vmatpush1.msra.mxu0 0.0
        %1955 = vmatprep.subr.mxu0 0.0
        %1956 = vmatpush1.msra.mxu0 0.0
        %1957 = vmatprep.subr.mxu0 0.0
        %1958 = vmatpush1.msra.mxu0 0.0
        %1959 = vmatprep.subr.mxu0 0.0
        %1960 = vmatpush1.msra.mxu0 0.0
        %1961 = vmatprep.subr.mxu0 0.0
        %1962 = vmatpush1.msra.mxu0 0.0
        %1963 = vmatprep.subr.mxu0 0.0
        %1964 = vmatpush1.msra.mxu0 0.0
        %1965 = vmatprep.subr.mxu0 0.0
        %1966 = vmatpush1.msra.mxu0 0.0
        %1967 = vmatprep.mubr.f32.mxu0 0.0
        %1968 = vmatmul.mubr.f32.gmra.mrb[0].mxu0 %v1898
        %v1969 = vpop.f32.mrb[0].mxu0
        %v1970 = vadd.f32 0.0, %v1969
        %v1971 = vpop.f32.mrb[0].mxu0
        %1972 = vdwg.mxu0
        %v1974 = vsel %vm248, %v1424, 0
        %1976 = vmatprep.subr.mxu0 0.0
        %1977 = vmatpush1.msra.mxu0 %v1974
        %1978 = vmatprep.subr.mxu0 0.0
        %1979 = vmatpush1.msra.mxu0 0.0
        %1980 = vmatprep.subr.mxu0 0.0
        %1981 = vmatpush1.msra.mxu0 0.0
        %1982 = vmatprep.subr.mxu0 0.0
        %1983 = vmatpush1.msra.mxu0 0.0
        %1984 = vmatprep.subr.mxu0 0.0
        %1985 = vmatpush1.msra.mxu0 0.0
        %1986 = vmatprep.subr.mxu0 0.0
        %1987 = vmatpush1.msra.mxu0 0.0
        %1988 = vmatprep.subr.mxu0 0.0
        %1989 = vmatpush1.msra.mxu0 0.0
        %1990 = vmatprep.subr.mxu0 0.0
        %1991 = vmatpush1.msra.mxu0 0.0
        %1992 = vmatprep.subr.mxu0 0.0
        %1993 = vmatpush1.msra.mxu0 0.0
        %1994 = vmatprep.subr.mxu0 0.0
        %1995 = vmatpush1.msra.mxu0 0.0
        %1996 = vmatprep.subr.mxu0 0.0
        %1997 = vmatpush1.msra.mxu0 0.0
        %1998 = vmatprep.subr.mxu0 0.0
        %1999 = vmatpush1.msra.mxu0 0.0
        %2000 = vmatprep.subr.mxu0 0.0
        %2001 = vmatpush1.msra.mxu0 0.0
        %2002 = vmatprep.subr.mxu0 0.0
        %2003 = vmatpush1.msra.mxu0 0.0
        %2004 = vmatprep.subr.mxu0 0.0
        %2005 = vmatpush1.msra.mxu0 0.0
        %2006 = vmatprep.subr.mxu0 0.0
        %2007 = vmatpush1.msra.mxu0 0.0
        %2008 = vmatprep.subr.mxu0 0.0
        %2009 = vmatpush1.msra.mxu0 0.0
        %2010 = vmatprep.subr.mxu0 0.0
        %2011 = vmatpush1.msra.mxu0 0.0
        %2012 = vmatprep.subr.mxu0 0.0
        %2013 = vmatpush1.msra.mxu0 0.0
        %2014 = vmatprep.subr.mxu0 0.0
        %2015 = vmatpush1.msra.mxu0 0.0
        %2016 = vmatprep.subr.mxu0 0.0
        %2017 = vmatpush1.msra.mxu0 0.0
        %2018 = vmatprep.subr.mxu0 0.0
        %2019 = vmatpush1.msra.mxu0 0.0
        %2020 = vmatprep.subr.mxu0 0.0
        %2021 = vmatpush1.msra.mxu0 0.0
        %2022 = vmatprep.subr.mxu0 0.0
        %2023 = vmatpush1.msra.mxu0 0.0
        %2024 = vmatprep.subr.mxu0 0.0
        %2025 = vmatpush1.msra.mxu0 0.0
        %2026 = vmatprep.subr.mxu0 0.0
        %2027 = vmatpush1.msra.mxu0 0.0
        %2028 = vmatprep.subr.mxu0 0.0
        %2029 = vmatpush1.msra.mxu0 0.0
        %2030 = vmatprep.subr.mxu0 0.0
        %2031 = vmatpush1.msra.mxu0 0.0
        %2032 = vmatprep.subr.mxu0 0.0
        %2033 = vmatpush1.msra.mxu0 0.0
        %2034 = vmatprep.subr.mxu0 0.0
        %2035 = vmatpush1.msra.mxu0 0.0
        %2036 = vmatprep.subr.mxu0 0.0
        %2037 = vmatpush1.msra.mxu0 0.0
        %2038 = vmatprep.subr.mxu0 0.0
        %2039 = vmatpush1.msra.mxu0 0.0
        %2040 = vmatprep.mubr.f32.mxu0 0.0
        %2041 = vmatmul.mubr.f32.gmra.mrb[0].mxu0 %v1898
        %v2042 = vpop.f32.mrb[0].mxu0
        %v2043 = vadd.f32 0.0, %v2042
        %v2044 = vpop.f32.mrb[0].mxu0
        %2045 = vdwg.mxu0
        %v2047 = vsel %vm248, %v1502, 0
        %2049 = vmatprep.subr.mxu0 0.0
        %2050 = vmatpush1.msra.mxu0 %v2047
        %2051 = vmatprep.subr.mxu0 0.0
        %2052 = vmatpush1.msra.mxu0 0.0
        %2053 = vmatprep.subr.mxu0 0.0
        %2054 = vmatpush1.msra.mxu0 0.0
        %2055 = vmatprep.subr.mxu0 0.0
        %2056 = vmatpush1.msra.mxu0 0.0
        %2057 = vmatprep.subr.mxu0 0.0
        %2058 = vmatpush1.msra.mxu0 0.0
        %2059 = vmatprep.subr.mxu0 0.0
        %2060 = vmatpush1.msra.mxu0 0.0
        %2061 = vmatprep.subr.mxu0 0.0
        %2062 = vmatpush1.msra.mxu0 0.0
        %2063 = vmatprep.subr.mxu0 0.0
        %2064 = vmatpush1.msra.mxu0 0.0
        %2065 = vmatprep.subr.mxu0 0.0
        %2066 = vmatpush1.msra.mxu0 0.0
        %2067 = vmatprep.subr.mxu0 0.0
        %2068 = vmatpush1.msra.mxu0 0.0
        %2069 = vmatprep.subr.mxu0 0.0
        %2070 = vmatpush1.msra.mxu0 0.0
        %2071 = vmatprep.subr.mxu0 0.0
        %2072 = vmatpush1.msra.mxu0 0.0
        %2073 = vmatprep.subr.mxu0 0.0
        %2074 = vmatpush1.msra.mxu0 0.0
        %2075 = vmatprep.subr.mxu0 0.0
        %2076 = vmatpush1.msra.mxu0 0.0
        %2077 = vmatprep.subr.mxu0 0.0
        %2078 = vmatpush1.msra.mxu0 0.0
        %2079 = vmatprep.subr.mxu0 0.0
        %2080 = vmatpush1.msra.mxu0 0.0
        %2081 = vmatprep.subr.mxu0 0.0
        %2082 = vmatpush1.msra.mxu0 0.0
        %2083 = vmatprep.subr.mxu0 0.0
        %2084 = vmatpush1.msra.mxu0 0.0
        %2085 = vmatprep.subr.mxu0 0.0
        %2086 = vmatpush1.msra.mxu0 0.0
        %2087 = vmatprep.subr.mxu0 0.0
        %2088 = vmatpush1.msra.mxu0 0.0
        %2089 = vmatprep.subr.mxu0 0.0
        %2090 = vmatpush1.msra.mxu0 0.0
        %2091 = vmatprep.subr.mxu0 0.0
        %2092 = vmatpush1.msra.mxu0 0.0
        %2093 = vmatprep.subr.mxu0 0.0
        %2094 = vmatpush1.msra.mxu0 0.0
        %2095 = vmatprep.subr.mxu0 0.0
        %2096 = vmatpush1.msra.mxu0 0.0
        %2097 = vmatprep.subr.mxu0 0.0
        %2098 = vmatpush1.msra.mxu0 0.0
        %2099 = vmatprep.subr.mxu0 0.0
        %2100 = vmatpush1.msra.mxu0 0.0
        %2101 = vmatprep.subr.mxu0 0.0
        %2102 = vmatpush1.msra.mxu0 0.0
        %2103 = vmatprep.subr.mxu0 0.0
        %2104 = vmatpush1.msra.mxu0 0.0
        %2105 = vmatprep.subr.mxu0 0.0
        %2106 = vmatpush1.msra.mxu0 0.0
        %2107 = vmatprep.subr.mxu0 0.0
        %2108 = vmatpush1.msra.mxu0 0.0
        %2109 = vmatprep.subr.mxu0 0.0
        %2110 = vmatpush1.msra.mxu0 0.0
        %2111 = vmatprep.subr.mxu0 0.0
        %2112 = vmatpush1.msra.mxu0 0.0
        %2113 = vmatprep.mubr.f32.mxu0 0.0
        %2114 = vmatmul.mubr.f32.gmra.mrb[0].mxu0 %v1898
        %v2115 = vpop.f32.mrb[0].mxu0
        %v2116 = vadd.f32 0.0, %v2115
        %v2117 = vpop.f32.mrb[0].mxu0
        %2118 = vdwg.mxu0
        %v2120 = vsel %vm248, %v1580, 0
        %2122 = vmatprep.subr.mxu0 0.0
        %2123 = vmatpush1.msra.mxu0 %v2120
        %2124 = vmatprep.subr.mxu0 0.0
        %2125 = vmatpush1.msra.mxu0 0.0
        %2126 = vmatprep.subr.mxu0 0.0
        %2127 = vmatpush1.msra.mxu0 0.0
        %2128 = vmatprep.subr.mxu0 0.0
        %2129 = vmatpush1.msra.mxu0 0.0
        %2130 = vmatprep.subr.mxu0 0.0
        %2131 = vmatpush1.msra.mxu0 0.0
        %2132 = vmatprep.subr.mxu0 0.0
        %2133 = vmatpush1.msra.mxu0 0.0
        %2134 = vmatprep.subr.mxu0 0.0
        %2135 = vmatpush1.msra.mxu0 0.0
        %2136 = vmatprep.subr.mxu0 0.0
        %2137 = vmatpush1.msra.mxu0 0.0
        %2138 = vmatprep.subr.mxu0 0.0
        %2139 = vmatpush1.msra.mxu0 0.0
        %2140 = vmatprep.subr.mxu0 0.0
        %2141 = vmatpush1.msra.mxu0 0.0
        %2142 = vmatprep.subr.mxu0 0.0
        %2143 = vmatpush1.msra.mxu0 0.0
        %2144 = vmatprep.subr.mxu0 0.0
        %2145 = vmatpush1.msra.mxu0 0.0
        %2146 = vmatprep.subr.mxu0 0.0
        %2147 = vmatpush1.msra.mxu0 0.0
        %2148 = vmatprep.subr.mxu0 0.0
        %2149 = vmatpush1.msra.mxu0 0.0
        %2150 = vmatprep.subr.mxu0 0.0
        %2151 = vmatpush1.msra.mxu0 0.0
        %2152 = vmatprep.subr.mxu0 0.0
        %2153 = vmatpush1.msra.mxu0 0.0
        %2154 = vmatprep.subr.mxu0 0.0
        %2155 = vmatpush1.msra.mxu0 0.0
        %2156 = vmatprep.subr.mxu0 0.0
        %2157 = vmatpush1.msra.mxu0 0.0
        %2158 = vmatprep.subr.mxu0 0.0
        %2159 = vmatpush1.msra.mxu0 0.0
        %2160 = vmatprep.subr.mxu0 0.0
        %2161 = vmatpush1.msra.mxu0 0.0
        %2162 = vmatprep.subr.mxu0 0.0
        %2163 = vmatpush1.msra.mxu0 0.0
        %2164 = vmatprep.subr.mxu0 0.0
        %2165 = vmatpush1.msra.mxu0 0.0
        %2166 = vmatprep.subr.mxu0 0.0
        %2167 = vmatpush1.msra.mxu0 0.0
        %2168 = vmatprep.subr.mxu0 0.0
        %2169 = vmatpush1.msra.mxu0 0.0
        %2170 = vmatprep.subr.mxu0 0.0
        %2171 = vmatpush1.msra.mxu0 0.0
        %2172 = vmatprep.subr.mxu0 0.0
        %2173 = vmatpush1.msra.mxu0 0.0
        %2174 = vmatprep.subr.mxu0 0.0
        %2175 = vmatpush1.msra.mxu0 0.0
        %2176 = vmatprep.subr.mxu0 0.0
        %2177 = vmatpush1.msra.mxu0 0.0
        %2178 = vmatprep.subr.mxu0 0.0
        %2179 = vmatpush1.msra.mxu0 0.0
        %2180 = vmatprep.subr.mxu0 0.0
        %2181 = vmatpush1.msra.mxu0 0.0
        %2182 = vmatprep.subr.mxu0 0.0
        %2183 = vmatpush1.msra.mxu0 0.0
        %2184 = vmatprep.subr.mxu0 0.0
        %2185 = vmatpush1.msra.mxu0 0.0
        %2186 = vmatprep.mubr.f32.mxu0 0.0
        %2187 = vmatmul.mubr.f32.gmra.mrb[0].mxu0 %v1898
        %v2188 = vpop.f32.mrb[0].mxu0
        %v2189 = vadd.f32 0.0, %v2188
        %v2190 = vpop.f32.mrb[0].mxu0
        %2191 = vdwg.mxu0
        %v2193 = vsel %vm248, %v1658, 0
        %2195 = vmatprep.subr.mxu0 0.0
        %2196 = vmatpush1.msra.mxu0 %v2193
        %2197 = vmatprep.subr.mxu0 0.0
        %2198 = vmatpush1.msra.mxu0 0.0
        %2199 = vmatprep.subr.mxu0 0.0
        %2200 = vmatpush1.msra.mxu0 0.0
        %2201 = vmatprep.subr.mxu0 0.0
        %2202 = vmatpush1.msra.mxu0 0.0
        %2203 = vmatprep.subr.mxu0 0.0
        %2204 = vmatpush1.msra.mxu0 0.0
        %2205 = vmatprep.subr.mxu0 0.0
        %2206 = vmatpush1.msra.mxu0 0.0
        %2207 = vmatprep.subr.mxu0 0.0
        %2208 = vmatpush1.msra.mxu0 0.0
        %2209 = vmatprep.subr.mxu0 0.0
        %2210 = vmatpush1.msra.mxu0 0.0
        %2211 = vmatprep.subr.mxu0 0.0
        %2212 = vmatpush1.msra.mxu0 0.0
        %2213 = vmatprep.subr.mxu0 0.0
        %2214 = vmatpush1.msra.mxu0 0.0
        %2215 = vmatprep.subr.mxu0 0.0
        %2216 = vmatpush1.msra.mxu0 0.0
        %2217 = vmatprep.subr.mxu0 0.0
        %2218 = vmatpush1.msra.mxu0 0.0
        %2219 = vmatprep.subr.mxu0 0.0
        %2220 = vmatpush1.msra.mxu0 0.0
        %2221 = vmatprep.subr.mxu0 0.0
        %2222 = vmatpush1.msra.mxu0 0.0
        %2223 = vmatprep.subr.mxu0 0.0
        %2224 = vmatpush1.msra.mxu0 0.0
        %2225 = vmatprep.subr.mxu0 0.0
        %2226 = vmatpush1.msra.mxu0 0.0
        %2227 = vmatprep.subr.mxu0 0.0
        %2228 = vmatpush1.msra.mxu0 0.0
        %2229 = vmatprep.subr.mxu0 0.0
        %2230 = vmatpush1.msra.mxu0 0.0
        %2231 = vmatprep.subr.mxu0 0.0
        %2232 = vmatpush1.msra.mxu0 0.0
        %2233 = vmatprep.subr.mxu0 0.0
        %2234 = vmatpush1.msra.mxu0 0.0
        %2235 = vmatprep.subr.mxu0 0.0
        %2236 = vmatpush1.msra.mxu0 0.0
        %2237 = vmatprep.subr.mxu0 0.0
        %2238 = vmatpush1.msra.mxu0 0.0
        %2239 = vmatprep.subr.mxu0 0.0
        %2240 = vmatpush1.msra.mxu0 0.0
        %2241 = vmatprep.subr.mxu0 0.0
        %2242 = vmatpush1.msra.mxu0 0.0
        %2243 = vmatprep.subr.mxu0 0.0
        %2244 = vmatpush1.msra.mxu0 0.0
        %2245 = vmatprep.subr.mxu0 0.0
        %2246 = vmatpush1.msra.mxu0 0.0
        %2247 = vmatprep.subr.mxu0 0.0
        %2248 = vmatpush1.msra.mxu0 0.0
        %2249 = vmatprep.subr.mxu0 0.0
        %2250 = vmatpush1.msra.mxu0 0.0
        %2251 = vmatprep.subr.mxu0 0.0
        %2252 = vmatpush1.msra.mxu0 0.0
        %2253 = vmatprep.subr.mxu0 0.0
        %2254 = vmatpush1.msra.mxu0 0.0
        %2255 = vmatprep.subr.mxu0 0.0
        %2256 = vmatpush1.msra.mxu0 0.0
        %2257 = vmatprep.subr.mxu0 0.0
        %2258 = vmatpush1.msra.mxu0 0.0
        %2259 = vmatprep.mubr.f32.mxu0 0.0
        %2260 = vmatmul.mubr.f32.gmra.mrb[0].mxu0 %v1898
        %v2261 = vpop.f32.mrb[0].mxu0
        %v2262 = vadd.f32 0.0, %v2261
        %v2263 = vpop.f32.mrb[0].mxu0
        %2264 = vdwg.mxu0
        %v2266 = vsel %vm248, %v1736, 0
        %2268 = vmatprep.subr.mxu0 0.0
        %2269 = vmatpush1.msra.mxu0 %v2266
        %2270 = vmatprep.subr.mxu0 0.0
        %2271 = vmatpush1.msra.mxu0 0.0
        %2272 = vmatprep.subr.mxu0 0.0
        %2273 = vmatpush1.msra.mxu0 0.0
        %2274 = vmatprep.subr.mxu0 0.0
        %2275 = vmatpush1.msra.mxu0 0.0
        %2276 = vmatprep.subr.mxu0 0.0
        %2277 = vmatpush1.msra.mxu0 0.0
        %2278 = vmatprep.subr.mxu0 0.0
        %2279 = vmatpush1.msra.mxu0 0.0
        %2280 = vmatprep.subr.mxu0 0.0
        %2281 = vmatpush1.msra.mxu0 0.0
        %2282 = vmatprep.subr.mxu0 0.0
        %2283 = vmatpush1.msra.mxu0 0.0
        %2284 = vmatprep.subr.mxu0 0.0
        %2285 = vmatpush1.msra.mxu0 0.0
        %2286 = vmatprep.subr.mxu0 0.0
        %2287 = vmatpush1.msra.mxu0 0.0
        %2288 = vmatprep.subr.mxu0 0.0
        %2289 = vmatpush1.msra.mxu0 0.0
        %2290 = vmatprep.subr.mxu0 0.0
        %2291 = vmatpush1.msra.mxu0 0.0
        %2292 = vmatprep.subr.mxu0 0.0
        %2293 = vmatpush1.msra.mxu0 0.0
        %2294 = vmatprep.subr.mxu0 0.0
        %2295 = vmatpush1.msra.mxu0 0.0
        %2296 = vmatprep.subr.mxu0 0.0
        %2297 = vmatpush1.msra.mxu0 0.0
        %2298 = vmatprep.subr.mxu0 0.0
        %2299 = vmatpush1.msra.mxu0 0.0
        %2300 = vmatprep.subr.mxu0 0.0
        %2301 = vmatpush1.msra.mxu0 0.0
        %2302 = vmatprep.subr.mxu0 0.0
        %2303 = vmatpush1.msra.mxu0 0.0
        %2304 = vmatprep.subr.mxu0 0.0
        %2305 = vmatpush1.msra.mxu0 0.0
        %2306 = vmatprep.subr.mxu0 0.0
        %2307 = vmatpush1.msra.mxu0 0.0
        %2308 = vmatprep.subr.mxu0 0.0
        %2309 = vmatpush1.msra.mxu0 0.0
        %2310 = vmatprep.subr.mxu0 0.0
        %2311 = vmatpush1.msra.mxu0 0.0
        %2312 = vmatprep.subr.mxu0 0.0
        %2313 = vmatpush1.msra.mxu0 0.0
        %2314 = vmatprep.subr.mxu0 0.0
        %2315 = vmatpush1.msra.mxu0 0.0
        %2316 = vmatprep.subr.mxu0 0.0
        %2317 = vmatpush1.msra.mxu0 0.0
        %2318 = vmatprep.subr.mxu0 0.0
        %2319 = vmatpush1.msra.mxu0 0.0
        %2320 = vmatprep.subr.mxu0 0.0
        %2321 = vmatpush1.msra.mxu0 0.0
        %2322 = vmatprep.subr.mxu0 0.0
        %2323 = vmatpush1.msra.mxu0 0.0
        %2324 = vmatprep.subr.mxu0 0.0
        %2325 = vmatpush1.msra.mxu0 0.0
        %2326 = vmatprep.subr.mxu0 0.0
        %2327 = vmatpush1.msra.mxu0 0.0
        %2328 = vmatprep.subr.mxu0 0.0
        %2329 = vmatpush1.msra.mxu0 0.0
        %2330 = vmatprep.subr.mxu0 0.0
        %2331 = vmatpush1.msra.mxu0 0.0
        %2332 = vmatprep.mubr.f32.mxu0 0.0
        %2333 = vmatmul.mubr.f32.gmra.mrb[0].mxu0 %v1898
        %v2334 = vpop.f32.mrb[0].mxu0
        %v2335 = vadd.f32 0.0, %v2334
        %v2336 = vpop.f32.mrb[0].mxu0
        %2337 = vdwg.mxu0
        %v2339 = vsel %vm248, %v1814, 0
        %2341 = vmatprep.subr.mxu0 0.0
        %2342 = vmatpush1.msra.mxu0 %v2339
        %2343 = vmatprep.subr.mxu0 0.0
        %2344 = vmatpush1.msra.mxu0 0.0
        %2345 = vmatprep.subr.mxu0 0.0
        %2346 = vmatpush1.msra.mxu0 0.0
        %2347 = vmatprep.subr.mxu0 0.0
        %2348 = vmatpush1.msra.mxu0 0.0
        %2349 = vmatprep.subr.mxu0 0.0
        %2350 = vmatpush1.msra.mxu0 0.0
        %2351 = vmatprep.subr.mxu0 0.0
        %2352 = vmatpush1.msra.mxu0 0.0
        %2353 = vmatprep.subr.mxu0 0.0
        %2354 = vmatpush1.msra.mxu0 0.0
        %2355 = vmatprep.subr.mxu0 0.0
        %2356 = vmatpush1.msra.mxu0 0.0
        %2357 = vmatprep.subr.mxu0 0.0
        %2358 = vmatpush1.msra.mxu0 0.0
        %2359 = vmatprep.subr.mxu0 0.0
        %2360 = vmatpush1.msra.mxu0 0.0
        %2361 = vmatprep.subr.mxu0 0.0
        %2362 = vmatpush1.msra.mxu0 0.0
        %2363 = vmatprep.subr.mxu0 0.0
        %2364 = vmatpush1.msra.mxu0 0.0
        %2365 = vmatprep.subr.mxu0 0.0
        %2366 = vmatpush1.msra.mxu0 0.0
        %2367 = vmatprep.subr.mxu0 0.0
        %2368 = vmatpush1.msra.mxu0 0.0
        %2369 = vmatprep.subr.mxu0 0.0
        %2370 = vmatpush1.msra.mxu0 0.0
        %2371 = vmatprep.subr.mxu0 0.0
        %2372 = vmatpush1.msra.mxu0 0.0
        %2373 = vmatprep.subr.mxu0 0.0
        %2374 = vmatpush1.msra.mxu0 0.0
        %2375 = vmatprep.subr.mxu0 0.0
        %2376 = vmatpush1.msra.mxu0 0.0
        %2377 = vmatprep.subr.mxu0 0.0
        %2378 = vmatpush1.msra.mxu0 0.0
        %2379 = vmatprep.subr.mxu0 0.0
        %2380 = vmatpush1.msra.mxu0 0.0
        %2381 = vmatprep.subr.mxu0 0.0
        %2382 = vmatpush1.msra.mxu0 0.0
        %2383 = vmatprep.subr.mxu0 0.0
        %2384 = vmatpush1.msra.mxu0 0.0
        %2385 = vmatprep.subr.mxu0 0.0
        %2386 = vmatpush1.msra.mxu0 0.0
        %2387 = vmatprep.subr.mxu0 0.0
        %2388 = vmatpush1.msra.mxu0 0.0
        %2389 = vmatprep.subr.mxu0 0.0
        %2390 = vmatpush1.msra.mxu0 0.0
        %2391 = vmatprep.subr.mxu0 0.0
        %2392 = vmatpush1.msra.mxu0 0.0
        %2393 = vmatprep.subr.mxu0 0.0
        %2394 = vmatpush1.msra.mxu0 0.0
        %2395 = vmatprep.subr.mxu0 0.0
        %2396 = vmatpush1.msra.mxu0 0.0
        %2397 = vmatprep.subr.mxu0 0.0
        %2398 = vmatpush1.msra.mxu0 0.0
        %2399 = vmatprep.subr.mxu0 0.0
        %2400 = vmatpush1.msra.mxu0 0.0
        %2401 = vmatprep.subr.mxu0 0.0
        %2402 = vmatpush1.msra.mxu0 0.0
        %2403 = vmatprep.subr.mxu0 0.0
        %2404 = vmatpush1.msra.mxu0 0.0
        %2405 = vmatprep.mubr.f32.mxu0 0.0
        %2406 = vmatmul.mubr.f32.gmra.mrb[0].mxu0 %v1898
        %v2407 = vpop.f32.mrb[0].mxu0
        %v2408 = vadd.f32 0.0, %v2407
        %v2409 = vpop.f32.mrb[0].mxu0
        %2410 = vdwg.mxu0
        %v2412 = vsel %vm248, %v1892, 0
        %2414 = vmatprep.subr.mxu0 0.0
        %2415 = vmatpush1.msra.mxu0 %v2412
        %2416 = vmatprep.subr.mxu0 0.0
        %2417 = vmatpush1.msra.mxu0 0.0
        %2418 = vmatprep.subr.mxu0 0.0
        %2419 = vmatpush1.msra.mxu0 0.0
        %2420 = vmatprep.subr.mxu0 0.0
        %2421 = vmatpush1.msra.mxu0 0.0
        %2422 = vmatprep.subr.mxu0 0.0
        %2423 = vmatpush1.msra.mxu0 0.0
        %2424 = vmatprep.subr.mxu0 0.0
        %2425 = vmatpush1.msra.mxu0 0.0
        %2426 = vmatprep.subr.mxu0 0.0
        %2427 = vmatpush1.msra.mxu0 0.0
        %2428 = vmatprep.subr.mxu0 0.0
        %2429 = vmatpush1.msra.mxu0 0.0
        %2430 = vmatprep.subr.mxu0 0.0
        %2431 = vmatpush1.msra.mxu0 0.0
        %2432 = vmatprep.subr.mxu0 0.0
        %2433 = vmatpush1.msra.mxu0 0.0
        %2434 = vmatprep.subr.mxu0 0.0
        %2435 = vmatpush1.msra.mxu0 0.0
        %2436 = vmatprep.subr.mxu0 0.0
        %2437 = vmatpush1.msra.mxu0 0.0
        %2438 = vmatprep.subr.mxu0 0.0
        %2439 = vmatpush1.msra.mxu0 0.0
        %2440 = vmatprep.subr.mxu0 0.0
        %2441 = vmatpush1.msra.mxu0 0.0
        %2442 = vmatprep.subr.mxu0 0.0
        %2443 = vmatpush1.msra.mxu0 0.0
        %2444 = vmatprep.subr.mxu0 0.0
        %2445 = vmatpush1.msra.mxu0 0.0
        %2446 = vmatprep.subr.mxu0 0.0
        %2447 = vmatpush1.msra.mxu0 0.0
        %2448 = vmatprep.subr.mxu0 0.0
        %2449 = vmatpush1.msra.mxu0 0.0
        %2450 = vmatprep.subr.mxu0 0.0
        %2451 = vmatpush1.msra.mxu0 0.0
        %2452 = vmatprep.subr.mxu0 0.0
        %2453 = vmatpush1.msra.mxu0 0.0
        %2454 = vmatprep.subr.mxu0 0.0
        %2455 = vmatpush1.msra.mxu0 0.0
        %2456 = vmatprep.subr.mxu0 0.0
        %2457 = vmatpush1.msra.mxu0 0.0
        %2458 = vmatprep.subr.mxu0 0.0
        %2459 = vmatpush1.msra.mxu0 0.0
        %2460 = vmatprep.subr.mxu0 0.0
        %2461 = vmatpush1.msra.mxu0 0.0
        %2462 = vmatprep.subr.mxu0 0.0
        %2463 = vmatpush1.msra.mxu0 0.0
        %2464 = vmatprep.subr.mxu0 0.0
        %2465 = vmatpush1.msra.mxu0 0.0
        %2466 = vmatprep.subr.mxu0 0.0
        %2467 = vmatpush1.msra.mxu0 0.0
        %2468 = vmatprep.subr.mxu0 0.0
        %2469 = vmatpush1.msra.mxu0 0.0
        %2470 = vmatprep.subr.mxu0 0.0
        %2471 = vmatpush1.msra.mxu0 0.0
        %2472 = vmatprep.subr.mxu0 0.0
        %2473 = vmatpush1.msra.mxu0 0.0
        %2474 = vmatprep.subr.mxu0 0.0
        %2475 = vmatpush1.msra.mxu0 0.0
        %2476 = vmatprep.subr.mxu0 0.0
        %2477 = vmatpush1.msra.mxu0 0.0
        %2478 = vmatprep.mubr.f32.mxu0 0.0
        %2479 = vmatmul.mubr.f32.gmra.mrb[0].mxu0 %v1898
        %v2480 = vpop.f32.mrb[0].mxu0
        %v2481 = vadd.f32 0.0, %v2480
        %v2482 = vpop.f32.mrb[0].mxu0
        %2483 = vdwg.mxu0
        %2484 = vrot.lane.b32.xlu0 %v221, 88
        %v2485 = vpop.permute.xlu0 %2484
        %2486 = vrot.lane.b32.xlu0 %v197, 116
        %v2487 = vpop.permute.xlu0 %2486
        %vm2489 = vcmask 64512
        %v2490 = vsel %vm2489, %v2485, 0
        %2492 = vmatprep.subr.mxu0 0.0
        %2493 = vmatpush1.msra.mxu0 %v2487
        %2494 = vmatprep.subr.mxu0 0.0
        %2495 = vmatpush1.msra.mxu0 0.0
        %2496 = vmatprep.subr.mxu0 0.0
        %2497 = vmatpush1.msra.mxu0 0.0
        %2498 = vmatprep.subr.mxu0 0.0
        %2499 = vmatpush1.msra.mxu0 0.0
        %2500 = vmatprep.subr.mxu0 0.0
        %2501 = vmatpush1.msra.mxu0 0.0
        %2502 = vmatprep.subr.mxu0 0.0
        %2503 = vmatpush1.msra.mxu0 0.0
        %2504 = vmatprep.subr.mxu0 0.0
        %2505 = vmatpush1.msra.mxu0 0.0
        %2506 = vmatprep.subr.mxu0 0.0
        %2507 = vmatpush1.msra.mxu0 0.0
        %2508 = vmatprep.subr.mxu0 0.0
        %2509 = vmatpush1.msra.mxu0 0.0
        %2510 = vmatprep.subr.mxu0 0.0
        %2511 = vmatpush1.msra.mxu0 0.0
        %2512 = vmatprep.subr.mxu0 0.0
        %2513 = vmatpush1.msra.mxu0 0.0
        %2514 = vmatprep.subr.mxu0 0.0
        %2515 = vmatpush1.msra.mxu0 0.0
        %2516 = vmatprep.subr.mxu0 0.0
        %2517 = vmatpush1.msra.mxu0 0.0
        %2518 = vmatprep.subr.mxu0 0.0
        %2519 = vmatpush1.msra.mxu0 0.0
        %2520 = vmatprep.subr.mxu0 0.0
        %2521 = vmatpush1.msra.mxu0 0.0
        %2522 = vmatprep.subr.mxu0 0.0
        %2523 = vmatpush1.msra.mxu0 0.0
        %2524 = vmatprep.subr.mxu0 0.0
        %2525 = vmatpush1.msra.mxu0 0.0
        %2526 = vmatprep.subr.mxu0 0.0
        %2527 = vmatpush1.msra.mxu0 0.0
        %2528 = vmatprep.subr.mxu0 0.0
        %2529 = vmatpush1.msra.mxu0 0.0
        %2530 = vmatprep.subr.mxu0 0.0
        %2531 = vmatpush1.msra.mxu0 0.0
        %2532 = vmatprep.subr.mxu0 0.0
        %2533 = vmatpush1.msra.mxu0 0.0
        %2534 = vmatprep.subr.mxu0 0.0
        %2535 = vmatpush1.msra.mxu0 0.0
        %2536 = vmatprep.subr.mxu0 0.0
        %2537 = vmatpush1.msra.mxu0 0.0
        %2538 = vmatprep.subr.mxu0 0.0
        %2539 = vmatpush1.msra.mxu0 0.0
        %2540 = vmatprep.subr.mxu0 0.0
        %2541 = vmatpush1.msra.mxu0 0.0
        %2542 = vmatprep.subr.mxu0 0.0
        %2543 = vmatpush1.msra.mxu0 0.0
        %2544 = vmatprep.subr.mxu0 0.0
        %2545 = vmatpush1.msra.mxu0 0.0
        %2546 = vmatprep.subr.mxu0 0.0
        %2547 = vmatpush1.msra.mxu0 0.0
        %2548 = vmatprep.subr.mxu0 0.0
        %2549 = vmatpush1.msra.mxu0 0.0
        %2550 = vmatprep.subr.mxu0 0.0
        %2551 = vmatpush1.msra.mxu0 0.0
        %2552 = vmatprep.subr.mxu0 0.0
        %2553 = vmatpush1.msra.mxu0 0.0
        %2554 = vmatprep.subr.mxu0 0.0
        %2555 = vmatpush1.msra.mxu0 0.0
        %2556 = vmatprep.mubr.f32.mxu0 0.0
        %2557 = vmatmul.mubr.f32.gmra.mrb[0].mxu0 %v2490
        %v2558 = vpop.f32.mrb[0].mxu0
        %v2559 = vadd.f32 %v1970, %v2558
        %v2560 = vpop.f32.mrb[0].mxu0
        %2561 = vdwg.mxu0
        %2562 = vrot.lane.b32.xlu0 %v198, 116
        %v2563 = vpop.permute.xlu0 %2562
        %2565 = vmatprep.subr.mxu0 0.0
        %2566 = vmatpush1.msra.mxu0 %v2563
        %2567 = vmatprep.subr.mxu0 0.0
        %2568 = vmatpush1.msra.mxu0 0.0
        %2569 = vmatprep.subr.mxu0 0.0
        %2570 = vmatpush1.msra.mxu0 0.0
        %2571 = vmatprep.subr.mxu0 0.0
        %2572 = vmatpush1.msra.mxu0 0.0
        %2573 = vmatprep.subr.mxu0 0.0
        %2574 = vmatpush1.msra.mxu0 0.0
        %2575 = vmatprep.subr.mxu0 0.0
        %2576 = vmatpush1.msra.mxu0 0.0
        %2577 = vmatprep.subr.mxu0 0.0
        %2578 = vmatpush1.msra.mxu0 0.0
        %2579 = vmatprep.subr.mxu0 0.0
        %2580 = vmatpush1.msra.mxu0 0.0
        %2581 = vmatprep.subr.mxu0 0.0
        %2582 = vmatpush1.msra.mxu0 0.0
        %2583 = vmatprep.subr.mxu0 0.0
        %2584 = vmatpush1.msra.mxu0 0.0
        %2585 = vmatprep.subr.mxu0 0.0
        %2586 = vmatpush1.msra.mxu0 0.0
        %2587 = vmatprep.subr.mxu0 0.0
        %2588 = vmatpush1.msra.mxu0 0.0
        %2589 = vmatprep.subr.mxu0 0.0
        %2590 = vmatpush1.msra.mxu0 0.0
        %2591 = vmatprep.subr.mxu0 0.0
        %2592 = vmatpush1.msra.mxu0 0.0
        %2593 = vmatprep.subr.mxu0 0.0
        %2594 = vmatpush1.msra.mxu0 0.0
        %2595 = vmatprep.subr.mxu0 0.0
        %2596 = vmatpush1.msra.mxu0 0.0
        %2597 = vmatprep.subr.mxu0 0.0
        %2598 = vmatpush1.msra.mxu0 0.0
        %2599 = vmatprep.subr.mxu0 0.0
        %2600 = vmatpush1.msra.mxu0 0.0
        %2601 = vmatprep.subr.mxu0 0.0
        %2602 = vmatpush1.msra.mxu0 0.0
        %2603 = vmatprep.subr.mxu0 0.0
        %2604 = vmatpush1.msra.mxu0 0.0
        %2605 = vmatprep.subr.mxu0 0.0
        %2606 = vmatpush1.msra.mxu0 0.0
        %2607 = vmatprep.subr.mxu0 0.0
        %2608 = vmatpush1.msra.mxu0 0.0
        %2609 = vmatprep.subr.mxu0 0.0
        %2610 = vmatpush1.msra.mxu0 0.0
        %2611 = vmatprep.subr.mxu0 0.0
        %2612 = vmatpush1.msra.mxu0 0.0
        %2613 = vmatprep.subr.mxu0 0.0
        %2614 = vmatpush1.msra.mxu0 0.0
        %2615 = vmatprep.subr.mxu0 0.0
        %2616 = vmatpush1.msra.mxu0 0.0
        %2617 = vmatprep.subr.mxu0 0.0
        %2618 = vmatpush1.msra.mxu0 0.0
        %2619 = vmatprep.subr.mxu0 0.0
        %2620 = vmatpush1.msra.mxu0 0.0
        %2621 = vmatprep.subr.mxu0 0.0
        %2622 = vmatpush1.msra.mxu0 0.0
        %2623 = vmatprep.subr.mxu0 0.0
        %2624 = vmatpush1.msra.mxu0 0.0
        %2625 = vmatprep.subr.mxu0 0.0
        %2626 = vmatpush1.msra.mxu0 0.0
        %2627 = vmatprep.subr.mxu0 0.0
        %2628 = vmatpush1.msra.mxu0 0.0
        %2629 = vmatprep.mubr.f32.mxu0 0.0
        %2630 = vmatmul.mubr.f32.gmra.mrb[0].mxu0 %v2490
        %v2631 = vpop.f32.mrb[0].mxu0
        %v2632 = vadd.f32 %v2043, %v2631
        %v2633 = vpop.f32.mrb[0].mxu0
        %2634 = vdwg.mxu0
        %2635 = vrot.lane.b32.xlu0 %v199, 116
        %v2636 = vpop.permute.xlu0 %2635
        %2638 = vmatprep.subr.mxu0 0.0
        %2639 = vmatpush1.msra.mxu0 %v2636
        %2640 = vmatprep.subr.mxu0 0.0
        %2641 = vmatpush1.msra.mxu0 0.0
        %2642 = vmatprep.subr.mxu0 0.0
        %2643 = vmatpush1.msra.mxu0 0.0
        %2644 = vmatprep.subr.mxu0 0.0
        %2645 = vmatpush1.msra.mxu0 0.0
        %2646 = vmatprep.subr.mxu0 0.0
        %2647 = vmatpush1.msra.mxu0 0.0
        %2648 = vmatprep.subr.mxu0 0.0
        %2649 = vmatpush1.msra.mxu0 0.0
        %2650 = vmatprep.subr.mxu0 0.0
        %2651 = vmatpush1.msra.mxu0 0.0
        %2652 = vmatprep.subr.mxu0 0.0
        %2653 = vmatpush1.msra.mxu0 0.0
        %2654 = vmatprep.subr.mxu0 0.0
        %2655 = vmatpush1.msra.mxu0 0.0
        %2656 = vmatprep.subr.mxu0 0.0
        %2657 = vmatpush1.msra.mxu0 0.0
        %2658 = vmatprep.subr.mxu0 0.0
        %2659 = vmatpush1.msra.mxu0 0.0
        %2660 = vmatprep.subr.mxu0 0.0
        %2661 = vmatpush1.msra.mxu0 0.0
        %2662 = vmatprep.subr.mxu0 0.0
        %2663 = vmatpush1.msra.mxu0 0.0
        %2664 = vmatprep.subr.mxu0 0.0
        %2665 = vmatpush1.msra.mxu0 0.0
        %2666 = vmatprep.subr.mxu0 0.0
        %2667 = vmatpush1.msra.mxu0 0.0
        %2668 = vmatprep.subr.mxu0 0.0
        %2669 = vmatpush1.msra.mxu0 0.0
        %2670 = vmatprep.subr.mxu0 0.0
        %2671 = vmatpush1.msra.mxu0 0.0
        %2672 = vmatprep.subr.mxu0 0.0
        %2673 = vmatpush1.msra.mxu0 0.0
        %2674 = vmatprep.subr.mxu0 0.0
        %2675 = vmatpush1.msra.mxu0 0.0
        %2676 = vmatprep.subr.mxu0 0.0
        %2677 = vmatpush1.msra.mxu0 0.0
        %2678 = vmatprep.subr.mxu0 0.0
        %2679 = vmatpush1.msra.mxu0 0.0
        %2680 = vmatprep.subr.mxu0 0.0
        %2681 = vmatpush1.msra.mxu0 0.0
        %2682 = vmatprep.subr.mxu0 0.0
        %2683 = vmatpush1.msra.mxu0 0.0
        %2684 = vmatprep.subr.mxu0 0.0
        %2685 = vmatpush1.msra.mxu0 0.0
        %2686 = vmatprep.subr.mxu0 0.0
        %2687 = vmatpush1.msra.mxu0 0.0
        %2688 = vmatprep.subr.mxu0 0.0
        %2689 = vmatpush1.msra.mxu0 0.0
        %2690 = vmatprep.subr.mxu0 0.0
        %2691 = vmatpush1.msra.mxu0 0.0
        %2692 = vmatprep.subr.mxu0 0.0
        %2693 = vmatpush1.msra.mxu0 0.0
        %2694 = vmatprep.subr.mxu0 0.0
        %2695 = vmatpush1.msra.mxu0 0.0
        %2696 = vmatprep.subr.mxu0 0.0
        %2697 = vmatpush1.msra.mxu0 0.0
        %2698 = vmatprep.subr.mxu0 0.0
        %2699 = vmatpush1.msra.mxu0 0.0
        %2700 = vmatprep.subr.mxu0 0.0
        %2701 = vmatpush1.msra.mxu0 0.0
        %2702 = vmatprep.mubr.f32.mxu0 0.0
        %2703 = vmatmul.mubr.f32.gmra.mrb[0].mxu0 %v2490
        %v2704 = vpop.f32.mrb[0].mxu0
        %v2705 = vadd.f32 %v2116, %v2704
        %v2706 = vpop.f32.mrb[0].mxu0
        %2707 = vdwg.mxu0
        %2708 = vrot.lane.b32.xlu0 %v200, 116
        %v2709 = vpop.permute.xlu0 %2708
        %2711 = vmatprep.subr.mxu0 0.0
        %2712 = vmatpush1.msra.mxu0 %v2709
        %2713 = vmatprep.subr.mxu0 0.0
        %2714 = vmatpush1.msra.mxu0 0.0
        %2715 = vmatprep.subr.mxu0 0.0
        %2716 = vmatpush1.msra.mxu0 0.0
        %2717 = vmatprep.subr.mxu0 0.0
        %2718 = vmatpush1.msra.mxu0 0.0
        %2719 = vmatprep.subr.mxu0 0.0
        %2720 = vmatpush1.msra.mxu0 0.0
        %2721 = vmatprep.subr.mxu0 0.0
        %2722 = vmatpush1.msra.mxu0 0.0
        %2723 = vmatprep.subr.mxu0 0.0
        %2724 = vmatpush1.msra.mxu0 0.0
        %2725 = vmatprep.subr.mxu0 0.0
        %2726 = vmatpush1.msra.mxu0 0.0
        %2727 = vmatprep.subr.mxu0 0.0
        %2728 = vmatpush1.msra.mxu0 0.0
        %2729 = vmatprep.subr.mxu0 0.0
        %2730 = vmatpush1.msra.mxu0 0.0
        %2731 = vmatprep.subr.mxu0 0.0
        %2732 = vmatpush1.msra.mxu0 0.0
        %2733 = vmatprep.subr.mxu0 0.0
        %2734 = vmatpush1.msra.mxu0 0.0
        %2735 = vmatprep.subr.mxu0 0.0
        %2736 = vmatpush1.msra.mxu0 0.0
        %2737 = vmatprep.subr.mxu0 0.0
        %2738 = vmatpush1.msra.mxu0 0.0
        %2739 = vmatprep.subr.mxu0 0.0
        %2740 = vmatpush1.msra.mxu0 0.0
        %2741 = vmatprep.subr.mxu0 0.0
        %2742 = vmatpush1.msra.mxu0 0.0
        %2743 = vmatprep.subr.mxu0 0.0
        %2744 = vmatpush1.msra.mxu0 0.0
        %2745 = vmatprep.subr.mxu0 0.0
        %2746 = vmatpush1.msra.mxu0 0.0
        %2747 = vmatprep.subr.mxu0 0.0
        %2748 = vmatpush1.msra.mxu0 0.0
        %2749 = vmatprep.subr.mxu0 0.0
        %2750 = vmatpush1.msra.mxu0 0.0
        %2751 = vmatprep.subr.mxu0 0.0
        %2752 = vmatpush1.msra.mxu0 0.0
        %2753 = vmatprep.subr.mxu0 0.0
        %2754 = vmatpush1.msra.mxu0 0.0
        %2755 = vmatprep.subr.mxu0 0.0
        %2756 = vmatpush1.msra.mxu0 0.0
        %2757 = vmatprep.subr.mxu0 0.0
        %2758 = vmatpush1.msra.mxu0 0.0
        %2759 = vmatprep.subr.mxu0 0.0
        %2760 = vmatpush1.msra.mxu0 0.0
        %2761 = vmatprep.subr.mxu0 0.0
        %2762 = vmatpush1.msra.mxu0 0.0
        %2763 = vmatprep.subr.mxu0 0.0
        %2764 = vmatpush1.msra.mxu0 0.0
        %2765 = vmatprep.subr.mxu0 0.0
        %2766 = vmatpush1.msra.mxu0 0.0
        %2767 = vmatprep.subr.mxu0 0.0
        %2768 = vmatpush1.msra.mxu0 0.0
        %2769 = vmatprep.subr.mxu0 0.0
        %2770 = vmatpush1.msra.mxu0 0.0
        %2771 = vmatprep.subr.mxu0 0.0
        %2772 = vmatpush1.msra.mxu0 0.0
        %2773 = vmatprep.subr.mxu0 0.0
        %2774 = vmatpush1.msra.mxu0 0.0
        %2775 = vmatprep.mubr.f32.mxu0 0.0
        %2776 = vmatmul.mubr.f32.gmra.mrb[0].mxu0 %v2490
        %v2777 = vpop.f32.mrb[0].mxu0
        %v2778 = vadd.f32 %v2189, %v2777
        %v2779 = vpop.f32.mrb[0].mxu0
        %2780 = vdwg.mxu0
        %2781 = vrot.lane.b32.xlu0 %v201, 116
        %v2782 = vpop.permute.xlu0 %2781
        %2784 = vmatprep.subr.mxu0 0.0
        %2785 = vmatpush1.msra.mxu0 %v2782
        %2786 = vmatprep.subr.mxu0 0.0
        %2787 = vmatpush1.msra.mxu0 0.0
        %2788 = vmatprep.subr.mxu0 0.0
        %2789 = vmatpush1.msra.mxu0 0.0
        %2790 = vmatprep.subr.mxu0 0.0
        %2791 = vmatpush1.msra.mxu0 0.0
        %2792 = vmatprep.subr.mxu0 0.0
        %2793 = vmatpush1.msra.mxu0 0.0
        %2794 = vmatprep.subr.mxu0 0.0
        %2795 = vmatpush1.msra.mxu0 0.0
        %2796 = vmatprep.subr.mxu0 0.0
        %2797 = vmatpush1.msra.mxu0 0.0
        %2798 = vmatprep.subr.mxu0 0.0
        %2799 = vmatpush1.msra.mxu0 0.0
        %2800 = vmatprep.subr.mxu0 0.0
        %2801 = vmatpush1.msra.mxu0 0.0
        %2802 = vmatprep.subr.mxu0 0.0
        %2803 = vmatpush1.msra.mxu0 0.0
        %2804 = vmatprep.subr.mxu0 0.0
        %2805 = vmatpush1.msra.mxu0 0.0
        %2806 = vmatprep.subr.mxu0 0.0
        %2807 = vmatpush1.msra.mxu0 0.0
        %2808 = vmatprep.subr.mxu0 0.0
        %2809 = vmatpush1.msra.mxu0 0.0
        %2810 = vmatprep.subr.mxu0 0.0
        %2811 = vmatpush1.msra.mxu0 0.0
        %2812 = vmatprep.subr.mxu0 0.0
        %2813 = vmatpush1.msra.mxu0 0.0
        %2814 = vmatprep.subr.mxu0 0.0
        %2815 = vmatpush1.msra.mxu0 0.0
        %2816 = vmatprep.subr.mxu0 0.0
        %2817 = vmatpush1.msra.mxu0 0.0
        %2818 = vmatprep.subr.mxu0 0.0
        %2819 = vmatpush1.msra.mxu0 0.0
        %2820 = vmatprep.subr.mxu0 0.0
        %2821 = vmatpush1.msra.mxu0 0.0
        %2822 = vmatprep.subr.mxu0 0.0
        %2823 = vmatpush1.msra.mxu0 0.0
        %2824 = vmatprep.subr.mxu0 0.0
        %2825 = vmatpush1.msra.mxu0 0.0
        %2826 = vmatprep.subr.mxu0 0.0
        %2827 = vmatpush1.msra.mxu0 0.0
        %2828 = vmatprep.subr.mxu0 0.0
        %2829 = vmatpush1.msra.mxu0 0.0
        %2830 = vmatprep.subr.mxu0 0.0
        %2831 = vmatpush1.msra.mxu0 0.0
        %2832 = vmatprep.subr.mxu0 0.0
        %2833 = vmatpush1.msra.mxu0 0.0
        %2834 = vmatprep.subr.mxu0 0.0
        %2835 = vmatpush1.msra.mxu0 0.0
        %2836 = vmatprep.subr.mxu0 0.0
        %2837 = vmatpush1.msra.mxu0 0.0
        %2838 = vmatprep.subr.mxu0 0.0
        %2839 = vmatpush1.msra.mxu0 0.0
        %2840 = vmatprep.subr.mxu0 0.0
        %2841 = vmatpush1.msra.mxu0 0.0
        %2842 = vmatprep.subr.mxu0 0.0
        %2843 = vmatpush1.msra.mxu0 0.0
        %2844 = vmatprep.subr.mxu0 0.0
        %2845 = vmatpush1.msra.mxu0 0.0
        %2846 = vmatprep.subr.mxu0 0.0
        %2847 = vmatpush1.msra.mxu0 0.0
        %2848 = vmatprep.mubr.f32.mxu0 0.0
        %2849 = vmatmul.mubr.f32.gmra.mrb[0].mxu0 %v2490
        %v2850 = vpop.f32.mrb[0].mxu0
        %v2851 = vadd.f32 %v2262, %v2850
        %v2852 = vpop.f32.mrb[0].mxu0
        %2853 = vdwg.mxu0
        %2854 = vrot.lane.b32.xlu0 %v202, 116
        %v2855 = vpop.permute.xlu0 %2854
        %2857 = vmatprep.subr.mxu0 0.0
        %2858 = vmatpush1.msra.mxu0 %v2855
        %2859 = vmatprep.subr.mxu0 0.0
        %2860 = vmatpush1.msra.mxu0 0.0
        %2861 = vmatprep.subr.mxu0 0.0
        %2862 = vmatpush1.msra.mxu0 0.0
        %2863 = vmatprep.subr.mxu0 0.0
        %2864 = vmatpush1.msra.mxu0 0.0
        %2865 = vmatprep.subr.mxu0 0.0
        %2866 = vmatpush1.msra.mxu0 0.0
        %2867 = vmatprep.subr.mxu0 0.0
        %2868 = vmatpush1.msra.mxu0 0.0
        %2869 = vmatprep.subr.mxu0 0.0
        %2870 = vmatpush1.msra.mxu0 0.0
        %2871 = vmatprep.subr.mxu0 0.0
        %2872 = vmatpush1.msra.mxu0 0.0
        %2873 = vmatprep.subr.mxu0 0.0
        %2874 = vmatpush1.msra.mxu0 0.0
        %2875 = vmatprep.subr.mxu0 0.0
        %2876 = vmatpush1.msra.mxu0 0.0
        %2877 = vmatprep.subr.mxu0 0.0
        %2878 = vmatpush1.msra.mxu0 0.0
        %2879 = vmatprep.subr.mxu0 0.0
        %2880 = vmatpush1.msra.mxu0 0.0
        %2881 = vmatprep.subr.mxu0 0.0
        %2882 = vmatpush1.msra.mxu0 0.0
        %2883 = vmatprep.subr.mxu0 0.0
        %2884 = vmatpush1.msra.mxu0 0.0
        %2885 = vmatprep.subr.mxu0 0.0
        %2886 = vmatpush1.msra.mxu0 0.0
        %2887 = vmatprep.subr.mxu0 0.0
        %2888 = vmatpush1.msra.mxu0 0.0
        %2889 = vmatprep.subr.mxu0 0.0
        %2890 = vmatpush1.msra.mxu0 0.0
        %2891 = vmatprep.subr.mxu0 0.0
        %2892 = vmatpush1.msra.mxu0 0.0
        %2893 = vmatprep.subr.mxu0 0.0
        %2894 = vmatpush1.msra.mxu0 0.0
        %2895 = vmatprep.subr.mxu0 0.0
        %2896 = vmatpush1.msra.mxu0 0.0
        %2897 = vmatprep.subr.mxu0 0.0
        %2898 = vmatpush1.msra.mxu0 0.0
        %2899 = vmatprep.subr.mxu0 0.0
        %2900 = vmatpush1.msra.mxu0 0.0
        %2901 = vmatprep.subr.mxu0 0.0
        %2902 = vmatpush1.msra.mxu0 0.0
        %2903 = vmatprep.subr.mxu0 0.0
        %2904 = vmatpush1.msra.mxu0 0.0
        %2905 = vmatprep.subr.mxu0 0.0
        %2906 = vmatpush1.msra.mxu0 0.0
        %2907 = vmatprep.subr.mxu0 0.0
        %2908 = vmatpush1.msra.mxu0 0.0
        %2909 = vmatprep.subr.mxu0 0.0
        %2910 = vmatpush1.msra.mxu0 0.0
        %2911 = vmatprep.subr.mxu0 0.0
        %2912 = vmatpush1.msra.mxu0 0.0
        %2913 = vmatprep.subr.mxu0 0.0
        %2914 = vmatpush1.msra.mxu0 0.0
        %2915 = vmatprep.subr.mxu0 0.0
        %2916 = vmatpush1.msra.mxu0 0.0
        %2917 = vmatprep.subr.mxu0 0.0
        %2918 = vmatpush1.msra.mxu0 0.0
        %2919 = vmatprep.subr.mxu0 0.0
        %2920 = vmatpush1.msra.mxu0 0.0
        %2921 = vmatprep.mubr.f32.mxu0 0.0
        %2922 = vmatmul.mubr.f32.gmra.mrb[0].mxu0 %v2490
        %v2923 = vpop.f32.mrb[0].mxu0
        %v2924 = vadd.f32 %v2335, %v2923
        %v2925 = vpop.f32.mrb[0].mxu0
        %2926 = vdwg.mxu0
        %2927 = vrot.lane.b32.xlu0 %v203, 116
        %v2928 = vpop.permute.xlu0 %2927
        %2930 = vmatprep.subr.mxu0 0.0
        %2931 = vmatpush1.msra.mxu0 %v2928
        %2932 = vmatprep.subr.mxu0 0.0
        %2933 = vmatpush1.msra.mxu0 0.0
        %2934 = vmatprep.subr.mxu0 0.0
        %2935 = vmatpush1.msra.mxu0 0.0
        %2936 = vmatprep.subr.mxu0 0.0
        %2937 = vmatpush1.msra.mxu0 0.0
        %2938 = vmatprep.subr.mxu0 0.0
        %2939 = vmatpush1.msra.mxu0 0.0
        %2940 = vmatprep.subr.mxu0 0.0
        %2941 = vmatpush1.msra.mxu0 0.0
        %2942 = vmatprep.subr.mxu0 0.0
        %2943 = vmatpush1.msra.mxu0 0.0
        %2944 = vmatprep.subr.mxu0 0.0
        %2945 = vmatpush1.msra.mxu0 0.0
        %2946 = vmatprep.subr.mxu0 0.0
        %2947 = vmatpush1.msra.mxu0 0.0
        %2948 = vmatprep.subr.mxu0 0.0
        %2949 = vmatpush1.msra.mxu0 0.0
        %2950 = vmatprep.subr.mxu0 0.0
        %2951 = vmatpush1.msra.mxu0 0.0
        %2952 = vmatprep.subr.mxu0 0.0
        %2953 = vmatpush1.msra.mxu0 0.0
        %2954 = vmatprep.subr.mxu0 0.0
        %2955 = vmatpush1.msra.mxu0 0.0
        %2956 = vmatprep.subr.mxu0 0.0
        %2957 = vmatpush1.msra.mxu0 0.0
        %2958 = vmatprep.subr.mxu0 0.0
        %2959 = vmatpush1.msra.mxu0 0.0
        %2960 = vmatprep.subr.mxu0 0.0
        %2961 = vmatpush1.msra.mxu0 0.0
        %2962 = vmatprep.subr.mxu0 0.0
        %2963 = vmatpush1.msra.mxu0 0.0
        %2964 = vmatprep.subr.mxu0 0.0
        %2965 = vmatpush1.msra.mxu0 0.0
        %2966 = vmatprep.subr.mxu0 0.0
        %2967 = vmatpush1.msra.mxu0 0.0
        %2968 = vmatprep.subr.mxu0 0.0
        %2969 = vmatpush1.msra.mxu0 0.0
        %2970 = vmatprep.subr.mxu0 0.0
        %2971 = vmatpush1.msra.mxu0 0.0
        %2972 = vmatprep.subr.mxu0 0.0
        %2973 = vmatpush1.msra.mxu0 0.0
        %2974 = vmatprep.subr.mxu0 0.0
        %2975 = vmatpush1.msra.mxu0 0.0
        %2976 = vmatprep.subr.mxu0 0.0
        %2977 = vmatpush1.msra.mxu0 0.0
        %2978 = vmatprep.subr.mxu0 0.0
        %2979 = vmatpush1.msra.mxu0 0.0
        %2980 = vmatprep.subr.mxu0 0.0
        %2981 = vmatpush1.msra.mxu0 0.0
        %2982 = vmatprep.subr.mxu0 0.0
        %2983 = vmatpush1.msra.mxu0 0.0
        %2984 = vmatprep.subr.mxu0 0.0
        %2985 = vmatpush1.msra.mxu0 0.0
        %2986 = vmatprep.subr.mxu0 0.0
        %2987 = vmatpush1.msra.mxu0 0.0
        %2988 = vmatprep.subr.mxu0 0.0
        %2989 = vmatpush1.msra.mxu0 0.0
        %2990 = vmatprep.subr.mxu0 0.0
        %2991 = vmatpush1.msra.mxu0 0.0
        %2992 = vmatprep.subr.mxu0 0.0
        %2993 = vmatpush1.msra.mxu0 0.0
        %2994 = vmatprep.mubr.f32.mxu0 0.0
        %2995 = vmatmul.mubr.f32.gmra.mrb[0].mxu0 %v2490
        %v2996 = vpop.f32.mrb[0].mxu0
        %v2997 = vadd.f32 %v2408, %v2996
        %v2998 = vpop.f32.mrb[0].mxu0
        %2999 = vdwg.mxu0
        %3000 = vrot.lane.b32.xlu0 %v204, 116
        %v3001 = vpop.permute.xlu0 %3000
        %3003 = vmatprep.subr.mxu0 0.0
        %3004 = vmatpush1.msra.mxu0 %v3001
        %3005 = vmatprep.subr.mxu0 0.0
        %3006 = vmatpush1.msra.mxu0 0.0
        %3007 = vmatprep.subr.mxu0 0.0
        %3008 = vmatpush1.msra.mxu0 0.0
        %3009 = vmatprep.subr.mxu0 0.0
        %3010 = vmatpush1.msra.mxu0 0.0
        %3011 = vmatprep.subr.mxu0 0.0
        %3012 = vmatpush1.msra.mxu0 0.0
        %3013 = vmatprep.subr.mxu0 0.0
        %3014 = vmatpush1.msra.mxu0 0.0
        %3015 = vmatprep.subr.mxu0 0.0
        %3016 = vmatpush1.msra.mxu0 0.0
        %3017 = vmatprep.subr.mxu0 0.0
        %3018 = vmatpush1.msra.mxu0 0.0
        %3019 = vmatprep.subr.mxu0 0.0
        %3020 = vmatpush1.msra.mxu0 0.0
        %3021 = vmatprep.subr.mxu0 0.0
        %3022 = vmatpush1.msra.mxu0 0.0
        %3023 = vmatprep.subr.mxu0 0.0
        %3024 = vmatpush1.msra.mxu0 0.0
        %3025 = vmatprep.subr.mxu0 0.0
        %3026 = vmatpush1.msra.mxu0 0.0
        %3027 = vmatprep.subr.mxu0 0.0
        %3028 = vmatpush1.msra.mxu0 0.0
        %3029 = vmatprep.subr.mxu0 0.0
        %3030 = vmatpush1.msra.mxu0 0.0
        %3031 = vmatprep.subr.mxu0 0.0
        %3032 = vmatpush1.msra.mxu0 0.0
        %3033 = vmatprep.subr.mxu0 0.0
        %3034 = vmatpush1.msra.mxu0 0.0
        %3035 = vmatprep.subr.mxu0 0.0
        %3036 = vmatpush1.msra.mxu0 0.0
        %3037 = vmatprep.subr.mxu0 0.0
        %3038 = vmatpush1.msra.mxu0 0.0
        %3039 = vmatprep.subr.mxu0 0.0
        %3040 = vmatpush1.msra.mxu0 0.0
        %3041 = vmatprep.subr.mxu0 0.0
        %3042 = vmatpush1.msra.mxu0 0.0
        %3043 = vmatprep.subr.mxu0 0.0
        %3044 = vmatpush1.msra.mxu0 0.0
        %3045 = vmatprep.subr.mxu0 0.0
        %3046 = vmatpush1.msra.mxu0 0.0
        %3047 = vmatprep.subr.mxu0 0.0
        %3048 = vmatpush1.msra.mxu0 0.0
        %3049 = vmatprep.subr.mxu0 0.0
        %3050 = vmatpush1.msra.mxu0 0.0
        %3051 = vmatprep.subr.mxu0 0.0
        %3052 = vmatpush1.msra.mxu0 0.0
        %3053 = vmatprep.subr.mxu0 0.0
        %3054 = vmatpush1.msra.mxu0 0.0
        %3055 = vmatprep.subr.mxu0 0.0
        %3056 = vmatpush1.msra.mxu0 0.0
        %3057 = vmatprep.subr.mxu0 0.0
        %3058 = vmatpush1.msra.mxu0 0.0
        %3059 = vmatprep.subr.mxu0 0.0
        %3060 = vmatpush1.msra.mxu0 0.0
        %3061 = vmatprep.subr.mxu0 0.0
        %3062 = vmatpush1.msra.mxu0 0.0
        %3063 = vmatprep.subr.mxu0 0.0
        %3064 = vmatpush1.msra.mxu0 0.0
        %3065 = vmatprep.subr.mxu0 0.0
        %3066 = vmatpush1.msra.mxu0 0.0
        %3067 = vmatprep.mubr.f32.mxu0 0.0
        %3068 = vmatmul.mubr.f32.gmra.mrb[0].mxu0 %v2490
        %v3069 = vpop.f32.mrb[0].mxu0
        %v3070 = vadd.f32 %v2481, %v3069
        %v3071 = vpop.f32.mrb[0].mxu0
        %3072 = vdwg.mxu0
        %3073 = vrot.lane.b32.xlu0 %v205, 124
        %v3074 = vpop.permute.xlu0 %3073
        %3075 = vrot.lane.b32.xlu0 %v206, 124
        %v3076 = vpop.permute.xlu0 %3075
        %v3077 = vrot.slane %v357, 4
        %v3078 = vsel %vm365, %v3074, 0
        %v3080 = vsel %vm365, %v3076, 0
        %v3082 = vsel %vm248, %v3077, 0
        %3084 = vmatprep.subr.mxu0 0.0
        %3085 = vmatpush1.msra.mxu0 %v3082
        %3086 = vmatprep.subr.mxu0 0.0
        %3087 = vmatpush1.msra.mxu0 0.0
        %3088 = vmatprep.subr.mxu0 0.0
        %3089 = vmatpush1.msra.mxu0 0.0
        %3090 = vmatprep.subr.mxu0 0.0
        %3091 = vmatpush1.msra.mxu0 0.0
        %3092 = vmatprep.subr.mxu0 0.0
        %3093 = vmatpush1.msra.mxu0 0.0
        %3094 = vmatprep.subr.mxu0 0.0
        %3095 = vmatpush1.msra.mxu0 0.0
        %3096 = vmatprep.subr.mxu0 0.0
        %3097 = vmatpush1.msra.mxu0 0.0
        %3098 = vmatprep.subr.mxu0 0.0
        %3099 = vmatpush1.msra.mxu0 0.0
        %3100 = vmatprep.subr.mxu0 0.0
        %3101 = vmatpush1.msra.mxu0 0.0
        %3102 = vmatprep.subr.mxu0 0.0
        %3103 = vmatpush1.msra.mxu0 0.0
        %3104 = vmatprep.subr.mxu0 0.0
        %3105 = vmatpush1.msra.mxu0 0.0
        %3106 = vmatprep.subr.mxu0 0.0
        %3107 = vmatpush1.msra.mxu0 0.0
        %3108 = vmatprep.subr.mxu0 0.0
        %3109 = vmatpush1.msra.mxu0 0.0
        %3110 = vmatprep.subr.mxu0 0.0
        %3111 = vmatpush1.msra.mxu0 0.0
        %3112 = vmatprep.subr.mxu0 0.0
        %3113 = vmatpush1.msra.mxu0 0.0
        %3114 = vmatprep.subr.mxu0 0.0
        %3115 = vmatpush1.msra.mxu0 0.0
        %3116 = vmatprep.subr.mxu0 0.0
        %3117 = vmatpush1.msra.mxu0 0.0
        %3118 = vmatprep.subr.mxu0 0.0
        %3119 = vmatpush1.msra.mxu0 0.0
        %3120 = vmatprep.subr.mxu0 0.0
        %3121 = vmatpush1.msra.mxu0 0.0
        %3122 = vmatprep.subr.mxu0 0.0
        %3123 = vmatpush1.msra.mxu0 0.0
        %3124 = vmatprep.subr.mxu0 0.0
        %3125 = vmatpush1.msra.mxu0 0.0
        %3126 = vmatprep.subr.mxu0 0.0
        %3127 = vmatpush1.msra.mxu0 0.0
        %3128 = vmatprep.subr.mxu0 0.0
        %3129 = vmatpush1.msra.mxu0 0.0
        %3130 = vmatprep.subr.mxu0 0.0
        %3131 = vmatpush1.msra.mxu0 0.0
        %3132 = vmatprep.subr.mxu0 0.0
        %3133 = vmatpush1.msra.mxu0 0.0
        %3134 = vmatprep.subr.mxu0 0.0
        %3135 = vmatpush1.msra.mxu0 0.0
        %3136 = vmatprep.subr.mxu0 0.0
        %3137 = vmatpush1.msra.mxu0 0.0
        %3138 = vmatprep.subr.mxu0 0.0
        %3139 = vmatpush1.msra.mxu0 0.0
        %3140 = vmatprep.subr.mxu0 0.0
        %3141 = vmatpush1.msra.mxu0 0.0
        %3142 = vmatprep.subr.mxu0 0.0
        %3143 = vmatpush1.msra.mxu0 0.0
        %3144 = vmatprep.subr.mxu0 0.0
        %3145 = vmatpush1.msra.mxu0 0.0
        %3146 = vmatprep.subr.mxu0 0.0
        %3147 = vmatpush1.msra.mxu0 0.0
        %3148 = vmatprep.mubr.f32.mxu0 0.0
        %3149 = vmatmul.mubr.f32.gmra.mrb[0].mxu0 %v3078
        %v3150 = vpop.f32.mrb[0].mxu0
        %v3151 = vadd.f32 0.0, %v3150
        %v3152 = vpop.f32.mrb[0].mxu0
        %3153 = vmatprep.mubr.f32.mxu0 0.0
        %3154 = vmatmul.mubr.f32.gmra.mrb[0].mxu0 %v3080
        %v3155 = vpop.f32.mrb[0].mxu0
        %v3156 = vadd.f32 0.0, %v3155
        %v3157 = vpop.f32.mrb[0].mxu0
        %3158 = vdwg.mxu0
        %3159 = vrot.lane.b32.xlu0 %v207, 124
        %v3160 = vpop.permute.xlu0 %3159
        %3161 = vrot.lane.b32.xlu0 %v208, 124
        %v3162 = vpop.permute.xlu0 %3161
        %v3163 = vrot.slane %v358, 4
        %v3164 = vsel %vm365, %v3160, 0
        %v3166 = vsel %vm365, %v3162, 0
        %v3168 = vsel %vm248, %v3163, 0
        %3170 = vmatprep.subr.mxu0 0.0
        %3171 = vmatpush1.msra.mxu0 %v3168
        %3172 = vmatprep.subr.mxu0 0.0
        %3173 = vmatpush1.msra.mxu0 0.0
        %3174 = vmatprep.subr.mxu0 0.0
        %3175 = vmatpush1.msra.mxu0 0.0
        %3176 = vmatprep.subr.mxu0 0.0
        %3177 = vmatpush1.msra.mxu0 0.0
        %3178 = vmatprep.subr.mxu0 0.0
        %3179 = vmatpush1.msra.mxu0 0.0
        %3180 = vmatprep.subr.mxu0 0.0
        %3181 = vmatpush1.msra.mxu0 0.0
        %3182 = vmatprep.subr.mxu0 0.0
        %3183 = vmatpush1.msra.mxu0 0.0
        %3184 = vmatprep.subr.mxu0 0.0
        %3185 = vmatpush1.msra.mxu0 0.0
        %3186 = vmatprep.subr.mxu0 0.0
        %3187 = vmatpush1.msra.mxu0 0.0
        %3188 = vmatprep.subr.mxu0 0.0
        %3189 = vmatpush1.msra.mxu0 0.0
        %3190 = vmatprep.subr.mxu0 0.0
        %3191 = vmatpush1.msra.mxu0 0.0
        %3192 = vmatprep.subr.mxu0 0.0
        %3193 = vmatpush1.msra.mxu0 0.0
        %3194 = vmatprep.subr.mxu0 0.0
        %3195 = vmatpush1.msra.mxu0 0.0
        %3196 = vmatprep.subr.mxu0 0.0
        %3197 = vmatpush1.msra.mxu0 0.0
        %3198 = vmatprep.subr.mxu0 0.0
        %3199 = vmatpush1.msra.mxu0 0.0
        %3200 = vmatprep.subr.mxu0 0.0
        %3201 = vmatpush1.msra.mxu0 0.0
        %3202 = vmatprep.subr.mxu0 0.0
        %3203 = vmatpush1.msra.mxu0 0.0
        %3204 = vmatprep.subr.mxu0 0.0
        %3205 = vmatpush1.msra.mxu0 0.0
        %3206 = vmatprep.subr.mxu0 0.0
        %3207 = vmatpush1.msra.mxu0 0.0
        %3208 = vmatprep.subr.mxu0 0.0
        %3209 = vmatpush1.msra.mxu0 0.0
        %3210 = vmatprep.subr.mxu0 0.0
        %3211 = vmatpush1.msra.mxu0 0.0
        %3212 = vmatprep.subr.mxu0 0.0
        %3213 = vmatpush1.msra.mxu0 0.0
        %3214 = vmatprep.subr.mxu0 0.0
        %3215 = vmatpush1.msra.mxu0 0.0
        %3216 = vmatprep.subr.mxu0 0.0
        %3217 = vmatpush1.msra.mxu0 0.0
        %3218 = vmatprep.subr.mxu0 0.0
        %3219 = vmatpush1.msra.mxu0 0.0
        %3220 = vmatprep.subr.mxu0 0.0
        %3221 = vmatpush1.msra.mxu0 0.0
        %3222 = vmatprep.subr.mxu0 0.0
        %3223 = vmatpush1.msra.mxu0 0.0
        %3224 = vmatprep.subr.mxu0 0.0
        %3225 = vmatpush1.msra.mxu0 0.0
        %3226 = vmatprep.subr.mxu0 0.0
        %3227 = vmatpush1.msra.mxu0 0.0
        %3228 = vmatprep.subr.mxu0 0.0
        %3229 = vmatpush1.msra.mxu0 0.0
        %3230 = vmatprep.subr.mxu0 0.0
        %3231 = vmatpush1.msra.mxu0 0.0
        %3232 = vmatprep.subr.mxu0 0.0
        %3233 = vmatpush1.msra.mxu0 0.0
        %3234 = vmatprep.mubr.f32.mxu0 0.0
        %3235 = vmatmul.mubr.f32.gmra.mrb[0].mxu0 %v3164
        %v3236 = vpop.f32.mrb[0].mxu0
        %v3237 = vadd.f32 0.0, %v3236
        %v3238 = vpop.f32.mrb[0].mxu0
        %3239 = vmatprep.mubr.f32.mxu0 0.0
        %3240 = vmatmul.mubr.f32.gmra.mrb[0].mxu0 %v3166
        %v3241 = vpop.f32.mrb[0].mxu0
        %v3242 = vadd.f32 0.0, %v3241
        %v3243 = vpop.f32.mrb[0].mxu0
        %3244 = vdwg.mxu0
        %3245 = vrot.lane.b32.xlu0 %v209, 124
        %v3246 = vpop.permute.xlu0 %3245
        %3247 = vrot.lane.b32.xlu0 %v210, 124
        %v3248 = vpop.permute.xlu0 %3247
        %v3249 = vrot.slane %v359, 4
        %v3250 = vsel %vm365, %v3246, 0
        %v3252 = vsel %vm365, %v3248, 0
        %v3254 = vsel %vm248, %v3249, 0
        %3256 = vmatprep.subr.mxu0 0.0
        %3257 = vmatpush1.msra.mxu0 %v3254
        %3258 = vmatprep.subr.mxu0 0.0
        %3259 = vmatpush1.msra.mxu0 0.0
        %3260 = vmatprep.subr.mxu0 0.0
        %3261 = vmatpush1.msra.mxu0 0.0
        %3262 = vmatprep.subr.mxu0 0.0
        %3263 = vmatpush1.msra.mxu0 0.0
        %3264 = vmatprep.subr.mxu0 0.0
        %3265 = vmatpush1.msra.mxu0 0.0
        %3266 = vmatprep.subr.mxu0 0.0
        %3267 = vmatpush1.msra.mxu0 0.0
        %3268 = vmatprep.subr.mxu0 0.0
        %3269 = vmatpush1.msra.mxu0 0.0
        %3270 = vmatprep.subr.mxu0 0.0
        %3271 = vmatpush1.msra.mxu0 0.0
        %3272 = vmatprep.subr.mxu0 0.0
        %3273 = vmatpush1.msra.mxu0 0.0
        %3274 = vmatprep.subr.mxu0 0.0
        %3275 = vmatpush1.msra.mxu0 0.0
        %3276 = vmatprep.subr.mxu0 0.0
        %3277 = vmatpush1.msra.mxu0 0.0
        %3278 = vmatprep.subr.mxu0 0.0
        %3279 = vmatpush1.msra.mxu0 0.0
        %3280 = vmatprep.subr.mxu0 0.0
        %3281 = vmatpush1.msra.mxu0 0.0
        %3282 = vmatprep.subr.mxu0 0.0
        %3283 = vmatpush1.msra.mxu0 0.0
        %3284 = vmatprep.subr.mxu0 0.0
        %3285 = vmatpush1.msra.mxu0 0.0
        %3286 = vmatprep.subr.mxu0 0.0
        %3287 = vmatpush1.msra.mxu0 0.0
        %3288 = vmatprep.subr.mxu0 0.0
        %3289 = vmatpush1.msra.mxu0 0.0
        %3290 = vmatprep.subr.mxu0 0.0
        %3291 = vmatpush1.msra.mxu0 0.0
        %3292 = vmatprep.subr.mxu0 0.0
        %3293 = vmatpush1.msra.mxu0 0.0
        %3294 = vmatprep.subr.mxu0 0.0
        %3295 = vmatpush1.msra.mxu0 0.0
        %3296 = vmatprep.subr.mxu0 0.0
        %3297 = vmatpush1.msra.mxu0 0.0
        %3298 = vmatprep.subr.mxu0 0.0
        %3299 = vmatpush1.msra.mxu0 0.0
        %3300 = vmatprep.subr.mxu0 0.0
        %3301 = vmatpush1.msra.mxu0 0.0
        %3302 = vmatprep.subr.mxu0 0.0
        %3303 = vmatpush1.msra.mxu0 0.0
        %3304 = vmatprep.subr.mxu0 0.0
        %3305 = vmatpush1.msra.mxu0 0.0
        %3306 = vmatprep.subr.mxu0 0.0
        %3307 = vmatpush1.msra.mxu0 0.0
        %3308 = vmatprep.subr.mxu0 0.0
        %3309 = vmatpush1.msra.mxu0 0.0
        %3310 = vmatprep.subr.mxu0 0.0
        %3311 = vmatpush1.msra.mxu0 0.0
        %3312 = vmatprep.subr.mxu0 0.0
        %3313 = vmatpush1.msra.mxu0 0.0
        %3314 = vmatprep.subr.mxu0 0.0
        %3315 = vmatpush1.msra.mxu0 0.0
        %3316 = vmatprep.subr.mxu0 0.0
        %3317 = vmatpush1.msra.mxu0 0.0
        %3318 = vmatprep.subr.mxu0 0.0
        %3319 = vmatpush1.msra.mxu0 0.0
        %3320 = vmatprep.mubr.f32.mxu0 0.0
        %3321 = vmatmul.mubr.f32.gmra.mrb[0].mxu0 %v3250
        %v3322 = vpop.f32.mrb[0].mxu0
        %v3323 = vadd.f32 0.0, %v3322
        %v3324 = vpop.f32.mrb[0].mxu0
        %3325 = vmatprep.mubr.f32.mxu0 0.0
        %3326 = vmatmul.mubr.f32.gmra.mrb[0].mxu0 %v3252
        %v3327 = vpop.f32.mrb[0].mxu0
        %v3328 = vadd.f32 0.0, %v3327
        %v3329 = vpop.f32.mrb[0].mxu0
        %3330 = vdwg.mxu0
        %3331 = vrot.lane.b32.xlu0 %v211, 124
        %v3332 = vpop.permute.xlu0 %3331
        %3333 = vrot.lane.b32.xlu0 %v212, 124
        %v3334 = vpop.permute.xlu0 %3333
        %v3335 = vrot.slane %v360, 4
        %v3336 = vsel %vm365, %v3332, 0
        %v3338 = vsel %vm365, %v3334, 0
        %v3340 = vsel %vm248, %v3335, 0
        %3342 = vmatprep.subr.mxu0 0.0
        %3343 = vmatpush1.msra.mxu0 %v3340
        %3344 = vmatprep.subr.mxu0 0.0
        %3345 = vmatpush1.msra.mxu0 0.0
        %3346 = vmatprep.subr.mxu0 0.0
        %3347 = vmatpush1.msra.mxu0 0.0
        %3348 = vmatprep.subr.mxu0 0.0
        %3349 = vmatpush1.msra.mxu0 0.0
        %3350 = vmatprep.subr.mxu0 0.0
        %3351 = vmatpush1.msra.mxu0 0.0
        %3352 = vmatprep.subr.mxu0 0.0
        %3353 = vmatpush1.msra.mxu0 0.0
        %3354 = vmatprep.subr.mxu0 0.0
        %3355 = vmatpush1.msra.mxu0 0.0
        %3356 = vmatprep.subr.mxu0 0.0
        %3357 = vmatpush1.msra.mxu0 0.0
        %3358 = vmatprep.subr.mxu0 0.0
        %3359 = vmatpush1.msra.mxu0 0.0
        %3360 = vmatprep.subr.mxu0 0.0
        %3361 = vmatpush1.msra.mxu0 0.0
        %3362 = vmatprep.subr.mxu0 0.0
        %3363 = vmatpush1.msra.mxu0 0.0
        %3364 = vmatprep.subr.mxu0 0.0
        %3365 = vmatpush1.msra.mxu0 0.0
        %3366 = vmatprep.subr.mxu0 0.0
        %3367 = vmatpush1.msra.mxu0 0.0
        %3368 = vmatprep.subr.mxu0 0.0
        %3369 = vmatpush1.msra.mxu0 0.0
        %3370 = vmatprep.subr.mxu0 0.0
        %3371 = vmatpush1.msra.mxu0 0.0
        %3372 = vmatprep.subr.mxu0 0.0
        %3373 = vmatpush1.msra.mxu0 0.0
        %3374 = vmatprep.subr.mxu0 0.0
        %3375 = vmatpush1.msra.mxu0 0.0
        %3376 = vmatprep.subr.mxu0 0.0
        %3377 = vmatpush1.msra.mxu0 0.0
        %3378 = vmatprep.subr.mxu0 0.0
        %3379 = vmatpush1.msra.mxu0 0.0
        %3380 = vmatprep.subr.mxu0 0.0
        %3381 = vmatpush1.msra.mxu0 0.0
        %3382 = vmatprep.subr.mxu0 0.0
        %3383 = vmatpush1.msra.mxu0 0.0
        %3384 = vmatprep.subr.mxu0 0.0
        %3385 = vmatpush1.msra.mxu0 0.0
        %3386 = vmatprep.subr.mxu0 0.0
        %3387 = vmatpush1.msra.mxu0 0.0
        %3388 = vmatprep.subr.mxu0 0.0
        %3389 = vmatpush1.msra.mxu0 0.0
        %3390 = vmatprep.subr.mxu0 0.0
        %3391 = vmatpush1.msra.mxu0 0.0
        %3392 = vmatprep.subr.mxu0 0.0
        %3393 = vmatpush1.msra.mxu0 0.0
        %3394 = vmatprep.subr.mxu0 0.0
        %3395 = vmatpush1.msra.mxu0 0.0
        %3396 = vmatprep.subr.mxu0 0.0
        %3397 = vmatpush1.msra.mxu0 0.0
        %3398 = vmatprep.subr.mxu0 0.0
        %3399 = vmatpush1.msra.mxu0 0.0
        %3400 = vmatprep.subr.mxu0 0.0
        %3401 = vmatpush1.msra.mxu0 0.0
        %3402 = vmatprep.subr.mxu0 0.0
        %3403 = vmatpush1.msra.mxu0 0.0
        %3404 = vmatprep.subr.mxu0 0.0
        %3405 = vmatpush1.msra.mxu0 0.0
        %3406 = vmatprep.mubr.f32.mxu0 0.0
        %3407 = vmatmul.mubr.f32.gmra.mrb[0].mxu0 %v3336
        %v3408 = vpop.f32.mrb[0].mxu0
        %v3409 = vadd.f32 0.0, %v3408
        %v3410 = vpop.f32.mrb[0].mxu0
        %3411 = vmatprep.mubr.f32.mxu0 0.0
        %3412 = vmatmul.mubr.f32.gmra.mrb[0].mxu0 %v3338
        %v3413 = vpop.f32.mrb[0].mxu0
        %v3414 = vadd.f32 0.0, %v3413
        %v3415 = vpop.f32.mrb[0].mxu0
        %3416 = vdwg.mxu0
        %3417 = vrot.lane.b32.xlu0 %v213, 124
        %v3418 = vpop.permute.xlu0 %3417
        %3419 = vrot.lane.b32.xlu0 %v214, 124
        %v3420 = vpop.permute.xlu0 %3419
        %v3421 = vrot.slane %v361, 4
        %v3422 = vsel %vm365, %v3418, 0
        %v3424 = vsel %vm365, %v3420, 0
        %v3426 = vsel %vm248, %v3421, 0
        %3428 = vmatprep.subr.mxu0 0.0
        %3429 = vmatpush1.msra.mxu0 %v3426
        %3430 = vmatprep.subr.mxu0 0.0
        %3431 = vmatpush1.msra.mxu0 0.0
        %3432 = vmatprep.subr.mxu0 0.0
        %3433 = vmatpush1.msra.mxu0 0.0
        %3434 = vmatprep.subr.mxu0 0.0
        %3435 = vmatpush1.msra.mxu0 0.0
        %3436 = vmatprep.subr.mxu0 0.0
        %3437 = vmatpush1.msra.mxu0 0.0
        %3438 = vmatprep.subr.mxu0 0.0
        %3439 = vmatpush1.msra.mxu0 0.0
        %3440 = vmatprep.subr.mxu0 0.0
        %3441 = vmatpush1.msra.mxu0 0.0
        %3442 = vmatprep.subr.mxu0 0.0
        %3443 = vmatpush1.msra.mxu0 0.0
        %3444 = vmatprep.subr.mxu0 0.0
        %3445 = vmatpush1.msra.mxu0 0.0
        %3446 = vmatprep.subr.mxu0 0.0
        %3447 = vmatpush1.msra.mxu0 0.0
        %3448 = vmatprep.subr.mxu0 0.0
        %3449 = vmatpush1.msra.mxu0 0.0
        %3450 = vmatprep.subr.mxu0 0.0
        %3451 = vmatpush1.msra.mxu0 0.0
        %3452 = vmatprep.subr.mxu0 0.0
        %3453 = vmatpush1.msra.mxu0 0.0
        %3454 = vmatprep.subr.mxu0 0.0
        %3455 = vmatpush1.msra.mxu0 0.0
        %3456 = vmatprep.subr.mxu0 0.0
        %3457 = vmatpush1.msra.mxu0 0.0
        %3458 = vmatprep.subr.mxu0 0.0
        %3459 = vmatpush1.msra.mxu0 0.0
        %3460 = vmatprep.subr.mxu0 0.0
        %3461 = vmatpush1.msra.mxu0 0.0
        %3462 = vmatprep.subr.mxu0 0.0
        %3463 = vmatpush1.msra.mxu0 0.0
        %3464 = vmatprep.subr.mxu0 0.0
        %3465 = vmatpush1.msra.mxu0 0.0
        %3466 = vmatprep.subr.mxu0 0.0
        %3467 = vmatpush1.msra.mxu0 0.0
        %3468 = vmatprep.subr.mxu0 0.0
        %3469 = vmatpush1.msra.mxu0 0.0
        %3470 = vmatprep.subr.mxu0 0.0
        %3471 = vmatpush1.msra.mxu0 0.0
        %3472 = vmatprep.subr.mxu0 0.0
        %3473 = vmatpush1.msra.mxu0 0.0
        %3474 = vmatprep.subr.mxu0 0.0
        %3475 = vmatpush1.msra.mxu0 0.0
        %3476 = vmatprep.subr.mxu0 0.0
        %3477 = vmatpush1.msra.mxu0 0.0
        %3478 = vmatprep.subr.mxu0 0.0
        %3479 = vmatpush1.msra.mxu0 0.0
        %3480 = vmatprep.subr.mxu0 0.0
        %3481 = vmatpush1.msra.mxu0 0.0
        %3482 = vmatprep.subr.mxu0 0.0
        %3483 = vmatpush1.msra.mxu0 0.0
        %3484 = vmatprep.subr.mxu0 0.0
        %3485 = vmatpush1.msra.mxu0 0.0
        %3486 = vmatprep.subr.mxu0 0.0
        %3487 = vmatpush1.msra.mxu0 0.0
        %3488 = vmatprep.subr.mxu0 0.0
        %3489 = vmatpush1.msra.mxu0 0.0
        %3490 = vmatprep.subr.mxu0 0.0
        %3491 = vmatpush1.msra.mxu0 0.0
        %3492 = vmatprep.mubr.f32.mxu0 0.0
        %3493 = vmatmul.mubr.f32.gmra.mrb[0].mxu0 %v3422
        %v3494 = vpop.f32.mrb[0].mxu0
        %v3495 = vadd.f32 0.0, %v3494
        %v3496 = vpop.f32.mrb[0].mxu0
        %3497 = vmatprep.mubr.f32.mxu0 0.0
        %3498 = vmatmul.mubr.f32.gmra.mrb[0].mxu0 %v3424
        %v3499 = vpop.f32.mrb[0].mxu0
        %v3500 = vadd.f32 0.0, %v3499
        %v3501 = vpop.f32.mrb[0].mxu0
        %3502 = vdwg.mxu0
        %3503 = vrot.lane.b32.xlu0 %v215, 124
        %v3504 = vpop.permute.xlu0 %3503
        %3505 = vrot.lane.b32.xlu0 %v216, 124
        %v3506 = vpop.permute.xlu0 %3505
        %v3507 = vrot.slane %v362, 4
        %v3508 = vsel %vm365, %v3504, 0
        %v3510 = vsel %vm365, %v3506, 0
        %v3512 = vsel %vm248, %v3507, 0
        %3514 = vmatprep.subr.mxu0 0.0
        %3515 = vmatpush1.msra.mxu0 %v3512
        %3516 = vmatprep.subr.mxu0 0.0
        %3517 = vmatpush1.msra.mxu0 0.0
        %3518 = vmatprep.subr.mxu0 0.0
        %3519 = vmatpush1.msra.mxu0 0.0
        %3520 = vmatprep.subr.mxu0 0.0
        %3521 = vmatpush1.msra.mxu0 0.0
        %3522 = vmatprep.subr.mxu0 0.0
        %3523 = vmatpush1.msra.mxu0 0.0
        %3524 = vmatprep.subr.mxu0 0.0
        %3525 = vmatpush1.msra.mxu0 0.0
        %3526 = vmatprep.subr.mxu0 0.0
        %3527 = vmatpush1.msra.mxu0 0.0
        %3528 = vmatprep.subr.mxu0 0.0
        %3529 = vmatpush1.msra.mxu0 0.0
        %3530 = vmatprep.subr.mxu0 0.0
        %3531 = vmatpush1.msra.mxu0 0.0
        %3532 = vmatprep.subr.mxu0 0.0
        %3533 = vmatpush1.msra.mxu0 0.0
        %3534 = vmatprep.subr.mxu0 0.0
        %3535 = vmatpush1.msra.mxu0 0.0
        %3536 = vmatprep.subr.mxu0 0.0
        %3537 = vmatpush1.msra.mxu0 0.0
        %3538 = vmatprep.subr.mxu0 0.0
        %3539 = vmatpush1.msra.mxu0 0.0
        %3540 = vmatprep.subr.mxu0 0.0
        %3541 = vmatpush1.msra.mxu0 0.0
        %3542 = vmatprep.subr.mxu0 0.0
        %3543 = vmatpush1.msra.mxu0 0.0
        %3544 = vmatprep.subr.mxu0 0.0
        %3545 = vmatpush1.msra.mxu0 0.0
        %3546 = vmatprep.subr.mxu0 0.0
        %3547 = vmatpush1.msra.mxu0 0.0
        %3548 = vmatprep.subr.mxu0 0.0
        %3549 = vmatpush1.msra.mxu0 0.0
        %3550 = vmatprep.subr.mxu0 0.0
        %3551 = vmatpush1.msra.mxu0 0.0
        %3552 = vmatprep.subr.mxu0 0.0
        %3553 = vmatpush1.msra.mxu0 0.0
        %3554 = vmatprep.subr.mxu0 0.0
        %3555 = vmatpush1.msra.mxu0 0.0
        %3556 = vmatprep.subr.mxu0 0.0
        %3557 = vmatpush1.msra.mxu0 0.0
        %3558 = vmatprep.subr.mxu0 0.0
        %3559 = vmatpush1.msra.mxu0 0.0
        %3560 = vmatprep.subr.mxu0 0.0
        %3561 = vmatpush1.msra.mxu0 0.0
        %3562 = vmatprep.subr.mxu0 0.0
        %3563 = vmatpush1.msra.mxu0 0.0
        %3564 = vmatprep.subr.mxu0 0.0
        %3565 = vmatpush1.msra.mxu0 0.0
        %3566 = vmatprep.subr.mxu0 0.0
        %3567 = vmatpush1.msra.mxu0 0.0
        %3568 = vmatprep.subr.mxu0 0.0
        %3569 = vmatpush1.msra.mxu0 0.0
        %3570 = vmatprep.subr.mxu0 0.0
        %3571 = vmatpush1.msra.mxu0 0.0
        %3572 = vmatprep.subr.mxu0 0.0
        %3573 = vmatpush1.msra.mxu0 0.0
        %3574 = vmatprep.subr.mxu0 0.0
        %3575 = vmatpush1.msra.mxu0 0.0
        %3576 = vmatprep.subr.mxu0 0.0
        %3577 = vmatpush1.msra.mxu0 0.0
        %3578 = vmatprep.mubr.f32.mxu0 0.0
        %3579 = vmatmul.mubr.f32.gmra.mrb[0].mxu0 %v3508
        %v3580 = vpop.f32.mrb[0].mxu0
        %v3581 = vadd.f32 0.0, %v3580
        %v3582 = vpop.f32.mrb[0].mxu0
        %3583 = vmatprep.mubr.f32.mxu0 0.0
        %3584 = vmatmul.mubr.f32.gmra.mrb[0].mxu0 %v3510
        %v3585 = vpop.f32.mrb[0].mxu0
        %v3586 = vadd.f32 0.0, %v3585
        %v3587 = vpop.f32.mrb[0].mxu0
        %3588 = vdwg.mxu0
        %3589 = vrot.lane.b32.xlu0 %v217, 124
        %v3590 = vpop.permute.xlu0 %3589
        %3591 = vrot.lane.b32.xlu0 %v218, 124
        %v3592 = vpop.permute.xlu0 %3591
        %v3593 = vrot.slane %v363, 4
        %v3594 = vsel %vm365, %v3590, 0
        %v3596 = vsel %vm365, %v3592, 0
        %v3598 = vsel %vm248, %v3593, 0
        %3600 = vmatprep.subr.mxu0 0.0
        %3601 = vmatpush1.msra.mxu0 %v3598
        %3602 = vmatprep.subr.mxu0 0.0
        %3603 = vmatpush1.msra.mxu0 0.0
        %3604 = vmatprep.subr.mxu0 0.0
        %3605 = vmatpush1.msra.mxu0 0.0
        %3606 = vmatprep.subr.mxu0 0.0
        %3607 = vmatpush1.msra.mxu0 0.0
        %3608 = vmatprep.subr.mxu0 0.0
        %3609 = vmatpush1.msra.mxu0 0.0
        %3610 = vmatprep.subr.mxu0 0.0
        %3611 = vmatpush1.msra.mxu0 0.0
        %3612 = vmatprep.subr.mxu0 0.0
        %3613 = vmatpush1.msra.mxu0 0.0
        %3614 = vmatprep.subr.mxu0 0.0
        %3615 = vmatpush1.msra.mxu0 0.0
        %3616 = vmatprep.subr.mxu0 0.0
        %3617 = vmatpush1.msra.mxu0 0.0
        %3618 = vmatprep.subr.mxu0 0.0
        %3619 = vmatpush1.msra.mxu0 0.0
        %3620 = vmatprep.subr.mxu0 0.0
        %3621 = vmatpush1.msra.mxu0 0.0
        %3622 = vmatprep.subr.mxu0 0.0
        %3623 = vmatpush1.msra.mxu0 0.0
        %3624 = vmatprep.subr.mxu0 0.0
        %3625 = vmatpush1.msra.mxu0 0.0
        %3626 = vmatprep.subr.mxu0 0.0
        %3627 = vmatpush1.msra.mxu0 0.0
        %3628 = vmatprep.subr.mxu0 0.0
        %3629 = vmatpush1.msra.mxu0 0.0
        %3630 = vmatprep.subr.mxu0 0.0
        %3631 = vmatpush1.msra.mxu0 0.0
        %3632 = vmatprep.subr.mxu0 0.0
        %3633 = vmatpush1.msra.mxu0 0.0
        %3634 = vmatprep.subr.mxu0 0.0
        %3635 = vmatpush1.msra.mxu0 0.0
        %3636 = vmatprep.subr.mxu0 0.0
        %3637 = vmatpush1.msra.mxu0 0.0
        %3638 = vmatprep.subr.mxu0 0.0
        %3639 = vmatpush1.msra.mxu0 0.0
        %3640 = vmatprep.subr.mxu0 0.0
        %3641 = vmatpush1.msra.mxu0 0.0
        %3642 = vmatprep.subr.mxu0 0.0
        %3643 = vmatpush1.msra.mxu0 0.0
        %3644 = vmatprep.subr.mxu0 0.0
        %3645 = vmatpush1.msra.mxu0 0.0
        %3646 = vmatprep.subr.mxu0 0.0
        %3647 = vmatpush1.msra.mxu0 0.0
        %3648 = vmatprep.subr.mxu0 0.0
        %3649 = vmatpush1.msra.mxu0 0.0
        %3650 = vmatprep.subr.mxu0 0.0
        %3651 = vmatpush1.msra.mxu0 0.0
        %3652 = vmatprep.subr.mxu0 0.0
        %3653 = vmatpush1.msra.mxu0 0.0
        %3654 = vmatprep.subr.mxu0 0.0
        %3655 = vmatpush1.msra.mxu0 0.0
        %3656 = vmatprep.subr.mxu0 0.0
        %3657 = vmatpush1.msra.mxu0 0.0
        %3658 = vmatprep.subr.mxu0 0.0
        %3659 = vmatpush1.msra.mxu0 0.0
        %3660 = vmatprep.subr.mxu0 0.0
        %3661 = vmatpush1.msra.mxu0 0.0
        %3662 = vmatprep.subr.mxu0 0.0
        %3663 = vmatpush1.msra.mxu0 0.0
        %3664 = vmatprep.mubr.f32.mxu0 0.0
        %3665 = vmatmul.mubr.f32.gmra.mrb[0].mxu0 %v3594
        %v3666 = vpop.f32.mrb[0].mxu0
        %v3667 = vadd.f32 0.0, %v3666
        %v3668 = vpop.f32.mrb[0].mxu0
        %3669 = vmatprep.mubr.f32.mxu0 0.0
        %3670 = vmatmul.mubr.f32.gmra.mrb[0].mxu0 %v3596
        %v3671 = vpop.f32.mrb[0].mxu0
        %v3672 = vadd.f32 0.0, %v3671
        %v3673 = vpop.f32.mrb[0].mxu0
        %3674 = vdwg.mxu0
        %3675 = vrot.lane.b32.xlu0 %v219, 124
        %v3676 = vpop.permute.xlu0 %3675
        %3677 = vrot.lane.b32.xlu0 %v220, 124
        %v3678 = vpop.permute.xlu0 %3677
        %v3679 = vrot.slane %v364, 4
        %v3680 = vsel %vm365, %v3676, 0
        %v3682 = vsel %vm365, %v3678, 0
        %v3684 = vsel %vm248, %v3679, 0
        %3686 = vmatprep.subr.mxu0 0.0
        %3687 = vmatpush1.msra.mxu0 %v3684
        %3688 = vmatprep.subr.mxu0 0.0
        %3689 = vmatpush1.msra.mxu0 0.0
        %3690 = vmatprep.subr.mxu0 0.0
        %3691 = vmatpush1.msra.mxu0 0.0
        %3692 = vmatprep.subr.mxu0 0.0
        %3693 = vmatpush1.msra.mxu0 0.0
        %3694 = vmatprep.subr.mxu0 0.0
        %3695 = vmatpush1.msra.mxu0 0.0
        %3696 = vmatprep.subr.mxu0 0.0
        %3697 = vmatpush1.msra.mxu0 0.0
        %3698 = vmatprep.subr.mxu0 0.0
        %3699 = vmatpush1.msra.mxu0 0.0
        %3700 = vmatprep.subr.mxu0 0.0
        %3701 = vmatpush1.msra.mxu0 0.0
        %3702 = vmatprep.subr.mxu0 0.0
        %3703 = vmatpush1.msra.mxu0 0.0
        %3704 = vmatprep.subr.mxu0 0.0
        %3705 = vmatpush1.msra.mxu0 0.0
        %3706 = vmatprep.subr.mxu0 0.0
        %3707 = vmatpush1.msra.mxu0 0.0
        %3708 = vmatprep.subr.mxu0 0.0
        %3709 = vmatpush1.msra.mxu0 0.0
        %3710 = vmatprep.subr.mxu0 0.0
        %3711 = vmatpush1.msra.mxu0 0.0
        %3712 = vmatprep.subr.mxu0 0.0
        %3713 = vmatpush1.msra.mxu0 0.0
        %3714 = vmatprep.subr.mxu0 0.0
        %3715 = vmatpush1.msra.mxu0 0.0
        %3716 = vmatprep.subr.mxu0 0.0
        %3717 = vmatpush1.msra.mxu0 0.0
        %3718 = vmatprep.subr.mxu0 0.0
        %3719 = vmatpush1.msra.mxu0 0.0
        %3720 = vmatprep.subr.mxu0 0.0
        %3721 = vmatpush1.msra.mxu0 0.0
        %3722 = vmatprep.subr.mxu0 0.0
        %3723 = vmatpush1.msra.mxu0 0.0
        %3724 = vmatprep.subr.mxu0 0.0
        %3725 = vmatpush1.msra.mxu0 0.0
        %3726 = vmatprep.subr.mxu0 0.0
        %3727 = vmatpush1.msra.mxu0 0.0
        %3728 = vmatprep.subr.mxu0 0.0
        %3729 = vmatpush1.msra.mxu0 0.0
        %3730 = vmatprep.subr.mxu0 0.0
        %3731 = vmatpush1.msra.mxu0 0.0
        %3732 = vmatprep.subr.mxu0 0.0
        %3733 = vmatpush1.msra.mxu0 0.0
        %3734 = vmatprep.subr.mxu0 0.0
        %3735 = vmatpush1.msra.mxu0 0.0
        %3736 = vmatprep.subr.mxu0 0.0
        %3737 = vmatpush1.msra.mxu0 0.0
        %3738 = vmatprep.subr.mxu0 0.0
        %3739 = vmatpush1.msra.mxu0 0.0
        %3740 = vmatprep.subr.mxu0 0.0
        %3741 = vmatpush1.msra.mxu0 0.0
        %3742 = vmatprep.subr.mxu0 0.0
        %3743 = vmatpush1.msra.mxu0 0.0
        %3744 = vmatprep.subr.mxu0 0.0
        %3745 = vmatpush1.msra.mxu0 0.0
        %3746 = vmatprep.subr.mxu0 0.0
        %3747 = vmatpush1.msra.mxu0 0.0
        %3748 = vmatprep.subr.mxu0 0.0
        %3749 = vmatpush1.msra.mxu0 0.0
        %3750 = vmatprep.mubr.f32.mxu0 0.0
        %3751 = vmatmul.mubr.f32.gmra.mrb[0].mxu0 %v3680
        %v3752 = vpop.f32.mrb[0].mxu0
        %v3753 = vadd.f32 0.0, %v3752
        %v3754 = vpop.f32.mrb[0].mxu0
        %3755 = vmatprep.mubr.f32.mxu0 0.0
        %3756 = vmatmul.mubr.f32.gmra.mrb[0].mxu0 %v3682
        %v3757 = vpop.f32.mrb[0].mxu0
        %v3758 = vadd.f32 0.0, %v3757
        %v3759 = vpop.f32.mrb[0].mxu0
        %3760 = vdwg.mxu0
        %v3761 = vsel %vm1038, %v3151, -inf
        %v3762 = vsel %vm1038, %v3156, -inf
        %v3763 = vmax.f32 %v3761, %v3762
        %v3764 = vrot.slane %v3763, 4
        %v3765 = vmax.f32 %v3763, %v3764
        %v3766 = vrot.slane %v3765, 2
        %v3767 = vmax.f32 %v3765, %v3766
        %v3768 = vrot.slane %v3767, 1
        %v3769 = vmax.f32 %v3767, %v3768
        %v3770 = vsel %vm1038, %v3237, -inf
        %v3771 = vsel %vm1038, %v3242, -inf
        %v3772 = vmax.f32 %v3770, %v3771
        %v3773 = vrot.slane %v3772, 4
        %v3774 = vmax.f32 %v3772, %v3773
        %v3775 = vrot.slane %v3774, 2
        %v3776 = vmax.f32 %v3774, %v3775
        %v3777 = vrot.slane %v3776, 1
        %v3778 = vmax.f32 %v3776, %v3777
        %v3779 = vsel %vm1038, %v3323, -inf
        %v3780 = vsel %vm1038, %v3328, -inf
        %v3781 = vmax.f32 %v3779, %v3780
        %v3782 = vrot.slane %v3781, 4
        %v3783 = vmax.f32 %v3781, %v3782
        %v3784 = vrot.slane %v3783, 2
        %v3785 = vmax.f32 %v3783, %v3784
        %v3786 = vrot.slane %v3785, 1
        %v3787 = vmax.f32 %v3785, %v3786
        %v3788 = vsel %vm1038, %v3409, -inf
        %v3789 = vsel %vm1038, %v3414, -inf
        %v3790 = vmax.f32 %v3788, %v3789
        %v3791 = vrot.slane %v3790, 4
        %v3792 = vmax.f32 %v3790, %v3791
        %v3793 = vrot.slane %v3792, 2
        %v3794 = vmax.f32 %v3792, %v3793
        %v3795 = vrot.slane %v3794, 1
        %v3796 = vmax.f32 %v3794, %v3795
        %v3797 = vsel %vm1038, %v3495, -inf
        %v3798 = vsel %vm1038, %v3500, -inf
        %v3799 = vmax.f32 %v3797, %v3798
        %v3800 = vrot.slane %v3799, 4
        %v3801 = vmax.f32 %v3799, %v3800
        %v3802 = vrot.slane %v3801, 2
        %v3803 = vmax.f32 %v3801, %v3802
        %v3804 = vrot.slane %v3803, 1
        %v3805 = vmax.f32 %v3803, %v3804
        %v3806 = vsel %vm1038, %v3581, -inf
        %v3807 = vsel %vm1038, %v3586, -inf
        %v3808 = vmax.f32 %v3806, %v3807
        %v3809 = vrot.slane %v3808, 4
        %v3810 = vmax.f32 %v3808, %v3809
        %v3811 = vrot.slane %v3810, 2
        %v3812 = vmax.f32 %v3810, %v3811
        %v3813 = vrot.slane %v3812, 1
        %v3814 = vmax.f32 %v3812, %v3813
        %v3815 = vsel %vm1038, %v3667, -inf
        %v3816 = vsel %vm1038, %v3672, -inf
        %v3817 = vmax.f32 %v3815, %v3816
        %v3818 = vrot.slane %v3817, 4
        %v3819 = vmax.f32 %v3817, %v3818
        %v3820 = vrot.slane %v3819, 2
        %v3821 = vmax.f32 %v3819, %v3820
        %v3822 = vrot.slane %v3821, 1
        %v3823 = vmax.f32 %v3821, %v3822
        %v3824 = vsel %vm1038, %v3753, -inf
        %v3825 = vsel %vm1038, %v3758, -inf
        %v3826 = vmax.f32 %v3824, %v3825
        %v3827 = vrot.slane %v3826, 4
        %v3828 = vmax.f32 %v3826, %v3827
        %v3829 = vrot.slane %v3828, 2
        %v3830 = vmax.f32 %v3828, %v3829
        %v3831 = vrot.slane %v3830, 1
        %v3832 = vmax.f32 %v3830, %v3831
        %v3833 = vsub.f32 %v3151, %v3769
        %v3834 = vsub.f32 %v3156, %v3769
        %v3835 = vsub.f32 %v3237, %v3778
        %v3836 = vsub.f32 %v3242, %v3778
        %v3837 = vsub.f32 %v3323, %v3787
        %v3838 = vsub.f32 %v3328, %v3787
        %v3839 = vsub.f32 %v3409, %v3796
        %v3840 = vsub.f32 %v3414, %v3796
        %v3841 = vsub.f32 %v3495, %v3805
        %v3842 = vsub.f32 %v3500, %v3805
        %v3843 = vsub.f32 %v3581, %v3814
        %v3844 = vsub.f32 %v3586, %v3814
        %v3845 = vsub.f32 %v3667, %v3823
        %v3846 = vsub.f32 %v3672, %v3823
        %v3847 = vsub.f32 %v3753, %v3832
        %v3848 = vsub.f32 %v3758, %v3832
        %v3849 = vmul.f32 %v3833, 1.442695
        %v3850 = vpow.pop %v3849
        %v3851 = vmul.f32 %v3834, 1.442695
        %v3852 = vpow.pop %v3851
        %v3853 = vmul.f32 %v3835, 1.442695
        %v3854 = vpow.pop %v3853
        %v3855 = vmul.f32 %v3836, 1.442695
        %v3856 = vpow.pop %v3855
        %v3857 = vmul.f32 %v3837, 1.442695
        %v3858 = vpow.pop %v3857
        %v3859 = vmul.f32 %v3838, 1.442695
        %v3860 = vpow.pop %v3859
        %v3861 = vmul.f32 %v3839, 1.442695
        %v3862 = vpow.pop %v3861
        %v3863 = vmul.f32 %v3840, 1.442695
        %v3864 = vpow.pop %v3863
        %v3865 = vmul.f32 %v3841, 1.442695
        %v3866 = vpow.pop %v3865
        %v3867 = vmul.f32 %v3842, 1.442695
        %v3868 = vpow.pop %v3867
        %v3869 = vmul.f32 %v3843, 1.442695
        %v3870 = vpow.pop %v3869
        %v3871 = vmul.f32 %v3844, 1.442695
        %v3872 = vpow.pop %v3871
        %v3873 = vmul.f32 %v3845, 1.442695
        %v3874 = vpow.pop %v3873
        %v3875 = vmul.f32 %v3846, 1.442695
        %v3876 = vpow.pop %v3875
        %v3877 = vmul.f32 %v3847, 1.442695
        %v3878 = vpow.pop %v3877
        %v3879 = vmul.f32 %v3848, 1.442695
        %v3880 = vpow.pop %v3879
        %v3881 = vsel %vm1038, %v3850, 0.0
        %v3882 = vsel %vm1038, %v3852, 0.0
        %v3883 = vadd.f32 %v3881, %v3882
        %v3884 = vrot.slane %v3883, 4
        %v3885 = vadd.f32 %v3883, %v3884
        %v3886 = vrot.slane %v3885, 2
        %v3887 = vadd.f32 %v3885, %v3886
        %v3888 = vrot.slane %v3887, 1
        %v3889 = vadd.f32 %v3887, %v3888
        %v3890 = vsel %vm1038, %v3854, 0.0
        %v3891 = vsel %vm1038, %v3856, 0.0
        %v3892 = vadd.f32 %v3890, %v3891
        %v3893 = vrot.slane %v3892, 4
        %v3894 = vadd.f32 %v3892, %v3893
        %v3895 = vrot.slane %v3894, 2
        %v3896 = vadd.f32 %v3894, %v3895
        %v3897 = vrot.slane %v3896, 1
        %v3898 = vadd.f32 %v3896, %v3897
        %v3899 = vsel %vm1038, %v3858, 0.0
        %v3900 = vsel %vm1038, %v3860, 0.0
        %v3901 = vadd.f32 %v3899, %v3900
        %v3902 = vrot.slane %v3901, 4
        %v3903 = vadd.f32 %v3901, %v3902
        %v3904 = vrot.slane %v3903, 2
        %v3905 = vadd.f32 %v3903, %v3904
        %v3906 = vrot.slane %v3905, 1
        %v3907 = vadd.f32 %v3905, %v3906
        %v3908 = vsel %vm1038, %v3862, 0.0
        %v3909 = vsel %vm1038, %v3864, 0.0
        %v3910 = vadd.f32 %v3908, %v3909
        %v3911 = vrot.slane %v3910, 4
        %v3912 = vadd.f32 %v3910, %v3911
        %v3913 = vrot.slane %v3912, 2
        %v3914 = vadd.f32 %v3912, %v3913
        %v3915 = vrot.slane %v3914, 1
        %v3916 = vadd.f32 %v3914, %v3915
        %v3917 = vsel %vm1038, %v3866, 0.0
        %v3918 = vsel %vm1038, %v3868, 0.0
        %v3919 = vadd.f32 %v3917, %v3918
        %v3920 = vrot.slane %v3919, 4
        %v3921 = vadd.f32 %v3919, %v3920
        %v3922 = vrot.slane %v3921, 2
        %v3923 = vadd.f32 %v3921, %v3922
        %v3924 = vrot.slane %v3923, 1
        %v3925 = vadd.f32 %v3923, %v3924
        %v3926 = vsel %vm1038, %v3870, 0.0
        %v3927 = vsel %vm1038, %v3872, 0.0
        %v3928 = vadd.f32 %v3926, %v3927
        %v3929 = vrot.slane %v3928, 4
        %v3930 = vadd.f32 %v3928, %v3929
        %v3931 = vrot.slane %v3930, 2
        %v3932 = vadd.f32 %v3930, %v3931
        %v3933 = vrot.slane %v3932, 1
        %v3934 = vadd.f32 %v3932, %v3933
        %v3935 = vsel %vm1038, %v3874, 0.0
        %v3936 = vsel %vm1038, %v3876, 0.0
        %v3937 = vadd.f32 %v3935, %v3936
        %v3938 = vrot.slane %v3937, 4
        %v3939 = vadd.f32 %v3937, %v3938
        %v3940 = vrot.slane %v3939, 2
        %v3941 = vadd.f32 %v3939, %v3940
        %v3942 = vrot.slane %v3941, 1
        %v3943 = vadd.f32 %v3941, %v3942
        %v3944 = vsel %vm1038, %v3878, 0.0
        %v3945 = vsel %vm1038, %v3880, 0.0
        %v3946 = vadd.f32 %v3944, %v3945
        %v3947 = vrot.slane %v3946, 4
        %v3948 = vadd.f32 %v3946, %v3947
        %v3949 = vrot.slane %v3948, 2
        %v3950 = vadd.f32 %v3948, %v3949
        %v3951 = vrot.slane %v3950, 1
        %v3952 = vadd.f32 %v3950, %v3951
        %v3953 = vlog2.pop %v3889
        %v3954 = vmul.f32 %v3953, 0.6931472
        %v3955 = vlog2.pop %v3898
        %v3956 = vmul.f32 %v3955, 0.6931472
        %v3957 = vlog2.pop %v3907
        %v3958 = vmul.f32 %v3957, 0.6931472
        %v3959 = vlog2.pop %v3916
        %v3960 = vmul.f32 %v3959, 0.6931472
        %v3961 = vlog2.pop %v3925
        %v3962 = vmul.f32 %v3961, 0.6931472
        %v3963 = vlog2.pop %v3934
        %v3964 = vmul.f32 %v3963, 0.6931472
        %v3965 = vlog2.pop %v3943
        %v3966 = vmul.f32 %v3965, 0.6931472
        %v3967 = vlog2.pop %v3952
        %v3968 = vmul.f32 %v3967, 0.6931472
        %v3969 = vadd.f32 %v3954, %v3769
        %v3970 = vadd.f32 %v3956, %v3778
        %v3971 = vadd.f32 %v3958, %v3787
        %v3972 = vadd.f32 %v3960, %v3796
        %v3973 = vadd.f32 %v3962, %v3805
        %v3974 = vadd.f32 %v3964, %v3814
        %v3975 = vadd.f32 %v3966, %v3823
        %v3976 = vadd.f32 %v3968, %v3832
        %v3977 = vsub.f32 %v3151, %v3969
        %v3978 = vsub.f32 %v3156, %v3969
        %v3979 = vsub.f32 %v3237, %v3970
        %v3980 = vsub.f32 %v3242, %v3970
        %v3981 = vsub.f32 %v3323, %v3971
        %v3982 = vsub.f32 %v3328, %v3971
        %v3983 = vsub.f32 %v3409, %v3972
        %v3984 = vsub.f32 %v3414, %v3972
        %v3985 = vsub.f32 %v3495, %v3973
        %v3986 = vsub.f32 %v3500, %v3973
        %v3987 = vsub.f32 %v3581, %v3974
        %v3988 = vsub.f32 %v3586, %v3974
        %v3989 = vsub.f32 %v3667, %v3975
        %v3990 = vsub.f32 %v3672, %v3975
        %v3991 = vsub.f32 %v3753, %v3976
        %v3992 = vsub.f32 %v3758, %v3976
        %v3993 = vsel %vm1038, %v3077, 0
        %v3996 = vsel %vm1038, %v3977, 0
        %v3999 = vsel %vm1038, %v3978, 0
        %4001 = vmatprep.subr.mxu0 0.0
        %4002 = vmatpush1.xpose.msra.mxu0 %v3996
        %4003 = vmatprep.subr.mxu0 0.0
        %4004 = vmatpush1.xpose.msra.mxu0 %v3999
        %4005 = vmatprep.subr.mxu0 0.0
        %4006 = vmatpush1.xpose.msra.mxu0 0.0
        %4007 = vmatprep.subr.mxu0 0.0
        %4008 = vmatpush1.xpose.msra.mxu0 0.0
        %4009 = vmatprep.subr.mxu0 0.0
        %4010 = vmatpush1.xpose.msra.mxu0 0.0
        %4011 = vmatprep.subr.mxu0 0.0
        %4012 = vmatpush1.xpose.msra.mxu0 0.0
        %4013 = vmatprep.subr.mxu0 0.0
        %4014 = vmatpush1.xpose.msra.mxu0 0.0
        %4015 = vmatprep.subr.mxu0 0.0
        %4016 = vmatpush1.xpose.msra.mxu0 0.0
        %4017 = vmatprep.subr.mxu0 0.0
        %4018 = vmatpush1.xpose.msra.mxu0 0.0
        %4019 = vmatprep.subr.mxu0 0.0
        %4020 = vmatpush1.xpose.msra.mxu0 0.0
        %4021 = vmatprep.subr.mxu0 0.0
        %4022 = vmatpush1.xpose.msra.mxu0 0.0
        %4023 = vmatprep.subr.mxu0 0.0
        %4024 = vmatpush1.xpose.msra.mxu0 0.0
        %4025 = vmatprep.subr.mxu0 0.0
        %4026 = vmatpush1.xpose.msra.mxu0 0.0
        %4027 = vmatprep.subr.mxu0 0.0
        %4028 = vmatpush1.xpose.msra.mxu0 0.0
        %4029 = vmatprep.subr.mxu0 0.0
        %4030 = vmatpush1.xpose.msra.mxu0 0.0
        %4031 = vmatprep.subr.mxu0 0.0
        %4032 = vmatpush1.xpose.msra.mxu0 0.0
        %4033 = vmatprep.subr.mxu0 0.0
        %4034 = vmatpush1.xpose.msra.mxu0 0.0
        %4035 = vmatprep.subr.mxu0 0.0
        %4036 = vmatpush1.xpose.msra.mxu0 0.0
        %4037 = vmatprep.subr.mxu0 0.0
        %4038 = vmatpush1.xpose.msra.mxu0 0.0
        %4039 = vmatprep.subr.mxu0 0.0
        %4040 = vmatpush1.xpose.msra.mxu0 0.0
        %4041 = vmatprep.subr.mxu0 0.0
        %4042 = vmatpush1.xpose.msra.mxu0 0.0
        %4043 = vmatprep.subr.mxu0 0.0
        %4044 = vmatpush1.xpose.msra.mxu0 0.0
        %4045 = vmatprep.subr.mxu0 0.0
        %4046 = vmatpush1.xpose.msra.mxu0 0.0
        %4047 = vmatprep.subr.mxu0 0.0
        %4048 = vmatpush1.xpose.msra.mxu0 0.0
        %4049 = vmatprep.subr.mxu0 0.0
        %4050 = vmatpush1.xpose.msra.mxu0 0.0
        %4051 = vmatprep.subr.mxu0 0.0
        %4052 = vmatpush1.xpose.msra.mxu0 0.0
        %4053 = vmatprep.subr.mxu0 0.0
        %4054 = vmatpush1.xpose.msra.mxu0 0.0
        %4055 = vmatprep.subr.mxu0 0.0
        %4056 = vmatpush1.xpose.msra.mxu0 0.0
        %4057 = vmatprep.subr.mxu0 0.0
        %4058 = vmatpush1.xpose.msra.mxu0 0.0
        %4059 = vmatprep.subr.mxu0 0.0
        %4060 = vmatpush1.xpose.msra.mxu0 0.0
        %4061 = vmatprep.subr.mxu0 0.0
        %4062 = vmatpush1.xpose.msra.mxu0 0.0
        %4063 = vmatprep.subr.mxu0 0.0
        %4064 = vmatpush1.xpose.msra.mxu0 0.0
        %4065 = vmatprep.mubr.f32.mxu0 0.0
        %4066 = vmatmul.mubr.f32.gmra.mrb[0].mxu0 %v3993
        %v4067 = vpop.f32.mrb[0].mxu0
        %v4068 = vadd.f32 0.0, %v4067
        %v4069 = vpop.f32.mrb[0].mxu0
        %4070 = vdwg.mxu0
        %v4071 = vsel %vm1038, %v3163, 0
        %v4074 = vsel %vm1038, %v3979, 0
        %v4077 = vsel %vm1038, %v3980, 0
        %4079 = vmatprep.subr.mxu0 0.0
        %4080 = vmatpush1.xpose.msra.mxu0 %v4074
        %4081 = vmatprep.subr.mxu0 0.0
        %4082 = vmatpush1.xpose.msra.mxu0 %v4077
        %4083 = vmatprep.subr.mxu0 0.0
        %4084 = vmatpush1.xpose.msra.mxu0 0.0
        %4085 = vmatprep.subr.mxu0 0.0
        %4086 = vmatpush1.xpose.msra.mxu0 0.0
        %4087 = vmatprep.subr.mxu0 0.0
        %4088 = vmatpush1.xpose.msra.mxu0 0.0
        %4089 = vmatprep.subr.mxu0 0.0
        %4090 = vmatpush1.xpose.msra.mxu0 0.0
        %4091 = vmatprep.subr.mxu0 0.0
        %4092 = vmatpush1.xpose.msra.mxu0 0.0
        %4093 = vmatprep.subr.mxu0 0.0
        %4094 = vmatpush1.xpose.msra.mxu0 0.0
        %4095 = vmatprep.subr.mxu0 0.0
        %4096 = vmatpush1.xpose.msra.mxu0 0.0
        %4097 = vmatprep.subr.mxu0 0.0
        %4098 = vmatpush1.xpose.msra.mxu0 0.0
        %4099 = vmatprep.subr.mxu0 0.0
        %4100 = vmatpush1.xpose.msra.mxu0 0.0
        %4101 = vmatprep.subr.mxu0 0.0
        %4102 = vmatpush1.xpose.msra.mxu0 0.0
        %4103 = vmatprep.subr.mxu0 0.0
        %4104 = vmatpush1.xpose.msra.mxu0 0.0
        %4105 = vmatprep.subr.mxu0 0.0
        %4106 = vmatpush1.xpose.msra.mxu0 0.0
        %4107 = vmatprep.subr.mxu0 0.0
        %4108 = vmatpush1.xpose.msra.mxu0 0.0
        %4109 = vmatprep.subr.mxu0 0.0
        %4110 = vmatpush1.xpose.msra.mxu0 0.0
        %4111 = vmatprep.subr.mxu0 0.0
        %4112 = vmatpush1.xpose.msra.mxu0 0.0
        %4113 = vmatprep.subr.mxu0 0.0
        %4114 = vmatpush1.xpose.msra.mxu0 0.0
        %4115 = vmatprep.subr.mxu0 0.0
        %4116 = vmatpush1.xpose.msra.mxu0 0.0
        %4117 = vmatprep.subr.mxu0 0.0
        %4118 = vmatpush1.xpose.msra.mxu0 0.0
        %4119 = vmatprep.subr.mxu0 0.0
        %4120 = vmatpush1.xpose.msra.mxu0 0.0
        %4121 = vmatprep.subr.mxu0 0.0
        %4122 = vmatpush1.xpose.msra.mxu0 0.0
        %4123 = vmatprep.subr.mxu0 0.0
        %4124 = vmatpush1.xpose.msra.mxu0 0.0
        %4125 = vmatprep.subr.mxu0 0.0
        %4126 = vmatpush1.xpose.msra.mxu0 0.0
        %4127 = vmatprep.subr.mxu0 0.0
        %4128 = vmatpush1.xpose.msra.mxu0 0.0
        %4129 = vmatprep.subr.mxu0 0.0
        %4130 = vmatpush1.xpose.msra.mxu0 0.0
        %4131 = vmatprep.subr.mxu0 0.0
        %4132 = vmatpush1.xpose.msra.mxu0 0.0
        %4133 = vmatprep.subr.mxu0 0.0
        %4134 = vmatpush1.xpose.msra.mxu0 0.0
        %4135 = vmatprep.subr.mxu0 0.0
        %4136 = vmatpush1.xpose.msra.mxu0 0.0
        %4137 = vmatprep.subr.mxu0 0.0
        %4138 = vmatpush1.xpose.msra.mxu0 0.0
        %4139 = vmatprep.subr.mxu0 0.0
        %4140 = vmatpush1.xpose.msra.mxu0 0.0
        %4141 = vmatprep.subr.mxu0 0.0
        %4142 = vmatpush1.xpose.msra.mxu0 0.0
        %4143 = vmatprep.mubr.f32.mxu0 0.0
        %4144 = vmatmul.mubr.f32.gmra.mrb[0].mxu0 %v4071
        %v4145 = vpop.f32.mrb[0].mxu0
        %v4146 = vadd.f32 0.0, %v4145
        %v4147 = vpop.f32.mrb[0].mxu0
        %4148 = vdwg.mxu0
        %v4149 = vsel %vm1038, %v3249, 0
        %v4152 = vsel %vm1038, %v3981, 0
        %v4155 = vsel %vm1038, %v3982, 0
        %4157 = vmatprep.subr.mxu0 0.0
        %4158 = vmatpush1.xpose.msra.mxu0 %v4152
        %4159 = vmatprep.subr.mxu0 0.0
        %4160 = vmatpush1.xpose.msra.mxu0 %v4155
        %4161 = vmatprep.subr.mxu0 0.0
        %4162 = vmatpush1.xpose.msra.mxu0 0.0
        %4163 = vmatprep.subr.mxu0 0.0
        %4164 = vmatpush1.xpose.msra.mxu0 0.0
        %4165 = vmatprep.subr.mxu0 0.0
        %4166 = vmatpush1.xpose.msra.mxu0 0.0
        %4167 = vmatprep.subr.mxu0 0.0
        %4168 = vmatpush1.xpose.msra.mxu0 0.0
        %4169 = vmatprep.subr.mxu0 0.0
        %4170 = vmatpush1.xpose.msra.mxu0 0.0
        %4171 = vmatprep.subr.mxu0 0.0
        %4172 = vmatpush1.xpose.msra.mxu0 0.0
        %4173 = vmatprep.subr.mxu0 0.0
        %4174 = vmatpush1.xpose.msra.mxu0 0.0
        %4175 = vmatprep.subr.mxu0 0.0
        %4176 = vmatpush1.xpose.msra.mxu0 0.0
        %4177 = vmatprep.subr.mxu0 0.0
        %4178 = vmatpush1.xpose.msra.mxu0 0.0
        %4179 = vmatprep.subr.mxu0 0.0
        %4180 = vmatpush1.xpose.msra.mxu0 0.0
        %4181 = vmatprep.subr.mxu0 0.0
        %4182 = vmatpush1.xpose.msra.mxu0 0.0
        %4183 = vmatprep.subr.mxu0 0.0
        %4184 = vmatpush1.xpose.msra.mxu0 0.0
        %4185 = vmatprep.subr.mxu0 0.0
        %4186 = vmatpush1.xpose.msra.mxu0 0.0
        %4187 = vmatprep.subr.mxu0 0.0
        %4188 = vmatpush1.xpose.msra.mxu0 0.0
        %4189 = vmatprep.subr.mxu0 0.0
        %4190 = vmatpush1.xpose.msra.mxu0 0.0
        %4191 = vmatprep.subr.mxu0 0.0
        %4192 = vmatpush1.xpose.msra.mxu0 0.0
        %4193 = vmatprep.subr.mxu0 0.0
        %4194 = vmatpush1.xpose.msra.mxu0 0.0
        %4195 = vmatprep.subr.mxu0 0.0
        %4196 = vmatpush1.xpose.msra.mxu0 0.0
        %4197 = vmatprep.subr.mxu0 0.0
        %4198 = vmatpush1.xpose.msra.mxu0 0.0
        %4199 = vmatprep.subr.mxu0 0.0
        %4200 = vmatpush1.xpose.msra.mxu0 0.0
        %4201 = vmatprep.subr.mxu0 0.0
        %4202 = vmatpush1.xpose.msra.mxu0 0.0
        %4203 = vmatprep.subr.mxu0 0.0
        %4204 = vmatpush1.xpose.msra.mxu0 0.0
        %4205 = vmatprep.subr.mxu0 0.0
        %4206 = vmatpush1.xpose.msra.mxu0 0.0
        %4207 = vmatprep.subr.mxu0 0.0
        %4208 = vmatpush1.xpose.msra.mxu0 0.0
        %4209 = vmatprep.subr.mxu0 0.0
        %4210 = vmatpush1.xpose.msra.mxu0 0.0
        %4211 = vmatprep.subr.mxu0 0.0
        %4212 = vmatpush1.xpose.msra.mxu0 0.0
        %4213 = vmatprep.subr.mxu0 0.0
        %4214 = vmatpush1.xpose.msra.mxu0 0.0
        %4215 = vmatprep.subr.mxu0 0.0
        %4216 = vmatpush1.xpose.msra.mxu0 0.0
        %4217 = vmatprep.subr.mxu0 0.0
        %4218 = vmatpush1.xpose.msra.mxu0 0.0
        %4219 = vmatprep.subr.mxu0 0.0
        %4220 = vmatpush1.xpose.msra.mxu0 0.0
        %4221 = vmatprep.mubr.f32.mxu0 0.0
        %4222 = vmatmul.mubr.f32.gmra.mrb[0].mxu0 %v4149
        %v4223 = vpop.f32.mrb[0].mxu0
        %v4224 = vadd.f32 0.0, %v4223
        %v4225 = vpop.f32.mrb[0].mxu0
        %4226 = vdwg.mxu0
        %v4227 = vsel %vm1038, %v3335, 0
        %v4230 = vsel %vm1038, %v3983, 0
        %v4233 = vsel %vm1038, %v3984, 0
        %4235 = vmatprep.subr.mxu0 0.0
        %4236 = vmatpush1.xpose.msra.mxu0 %v4230
        %4237 = vmatprep.subr.mxu0 0.0
        %4238 = vmatpush1.xpose.msra.mxu0 %v4233
        %4239 = vmatprep.subr.mxu0 0.0
        %4240 = vmatpush1.xpose.msra.mxu0 0.0
        %4241 = vmatprep.subr.mxu0 0.0
        %4242 = vmatpush1.xpose.msra.mxu0 0.0
        %4243 = vmatprep.subr.mxu0 0.0
        %4244 = vmatpush1.xpose.msra.mxu0 0.0
        %4245 = vmatprep.subr.mxu0 0.0
        %4246 = vmatpush1.xpose.msra.mxu0 0.0
        %4247 = vmatprep.subr.mxu0 0.0
        %4248 = vmatpush1.xpose.msra.mxu0 0.0
        %4249 = vmatprep.subr.mxu0 0.0
        %4250 = vmatpush1.xpose.msra.mxu0 0.0
        %4251 = vmatprep.subr.mxu0 0.0
        %4252 = vmatpush1.xpose.msra.mxu0 0.0
        %4253 = vmatprep.subr.mxu0 0.0
        %4254 = vmatpush1.xpose.msra.mxu0 0.0
        %4255 = vmatprep.subr.mxu0 0.0
        %4256 = vmatpush1.xpose.msra.mxu0 0.0
        %4257 = vmatprep.subr.mxu0 0.0
        %4258 = vmatpush1.xpose.msra.mxu0 0.0
        %4259 = vmatprep.subr.mxu0 0.0
        %4260 = vmatpush1.xpose.msra.mxu0 0.0
        %4261 = vmatprep.subr.mxu0 0.0
        %4262 = vmatpush1.xpose.msra.mxu0 0.0
        %4263 = vmatprep.subr.mxu0 0.0
        %4264 = vmatpush1.xpose.msra.mxu0 0.0
        %4265 = vmatprep.subr.mxu0 0.0
        %4266 = vmatpush1.xpose.msra.mxu0 0.0
        %4267 = vmatprep.subr.mxu0 0.0
        %4268 = vmatpush1.xpose.msra.mxu0 0.0
        %4269 = vmatprep.subr.mxu0 0.0
        %4270 = vmatpush1.xpose.msra.mxu0 0.0
        %4271 = vmatprep.subr.mxu0 0.0
        %4272 = vmatpush1.xpose.msra.mxu0 0.0
        %4273 = vmatprep.subr.mxu0 0.0
        %4274 = vmatpush1.xpose.msra.mxu0 0.0
        %4275 = vmatprep.subr.mxu0 0.0
        %4276 = vmatpush1.xpose.msra.mxu0 0.0
        %4277 = vmatprep.subr.mxu0 0.0
        %4278 = vmatpush1.xpose.msra.mxu0 0.0
        %4279 = vmatprep.subr.mxu0 0.0
        %4280 = vmatpush1.xpose.msra.mxu0 0.0
        %4281 = vmatprep.subr.mxu0 0.0
        %4282 = vmatpush1.xpose.msra.mxu0 0.0
        %4283 = vmatprep.subr.mxu0 0.0
        %4284 = vmatpush1.xpose.msra.mxu0 0.0
        %4285 = vmatprep.subr.mxu0 0.0
        %4286 = vmatpush1.xpose.msra.mxu0 0.0
        %4287 = vmatprep.subr.mxu0 0.0
        %4288 = vmatpush1.xpose.msra.mxu0 0.0
        %4289 = vmatprep.subr.mxu0 0.0
        %4290 = vmatpush1.xpose.msra.mxu0 0.0
        %4291 = vmatprep.subr.mxu0 0.0
        %4292 = vmatpush1.xpose.msra.mxu0 0.0
        %4293 = vmatprep.subr.mxu0 0.0
        %4294 = vmatpush1.xpose.msra.mxu0 0.0
        %4295 = vmatprep.subr.mxu0 0.0
        %4296 = vmatpush1.xpose.msra.mxu0 0.0
        %4297 = vmatprep.subr.mxu0 0.0
        %4298 = vmatpush1.xpose.msra.mxu0 0.0
        %4299 = vmatprep.mubr.f32.mxu0 0.0
        %4300 = vmatmul.mubr.f32.gmra.mrb[0].mxu0 %v4227
        %v4301 = vpop.f32.mrb[0].mxu0
        %v4302 = vadd.f32 0.0, %v4301
        %v4303 = vpop.f32.mrb[0].mxu0
        %4304 = vdwg.mxu0
        %v4305 = vsel %vm1038, %v3421, 0
        %v4308 = vsel %vm1038, %v3985, 0
        %v4311 = vsel %vm1038, %v3986, 0
        %4313 = vmatprep.subr.mxu0 0.0
        %4314 = vmatpush1.xpose.msra.mxu0 %v4308
        %4315 = vmatprep.subr.mxu0 0.0
        %4316 = vmatpush1.xpose.msra.mxu0 %v4311
        %4317 = vmatprep.subr.mxu0 0.0
        %4318 = vmatpush1.xpose.msra.mxu0 0.0
        %4319 = vmatprep.subr.mxu0 0.0
        %4320 = vmatpush1.xpose.msra.mxu0 0.0
        %4321 = vmatprep.subr.mxu0 0.0
        %4322 = vmatpush1.xpose.msra.mxu0 0.0
        %4323 = vmatprep.subr.mxu0 0.0
        %4324 = vmatpush1.xpose.msra.mxu0 0.0
        %4325 = vmatprep.subr.mxu0 0.0
        %4326 = vmatpush1.xpose.msra.mxu0 0.0
        %4327 = vmatprep.subr.mxu0 0.0
        %4328 = vmatpush1.xpose.msra.mxu0 0.0
        %4329 = vmatprep.subr.mxu0 0.0
        %4330 = vmatpush1.xpose.msra.mxu0 0.0
        %4331 = vmatprep.subr.mxu0 0.0
        %4332 = vmatpush1.xpose.msra.mxu0 0.0
        %4333 = vmatprep.subr.mxu0 0.0
        %4334 = vmatpush1.xpose.msra.mxu0 0.0
        %4335 = vmatprep.subr.mxu0 0.0
        %4336 = vmatpush1.xpose.msra.mxu0 0.0
        %4337 = vmatprep.subr.mxu0 0.0
        %4338 = vmatpush1.xpose.msra.mxu0 0.0
        %4339 = vmatprep.subr.mxu0 0.0
        %4340 = vmatpush1.xpose.msra.mxu0 0.0
        %4341 = vmatprep.subr.mxu0 0.0
        %4342 = vmatpush1.xpose.msra.mxu0 0.0
        %4343 = vmatprep.subr.mxu0 0.0
        %4344 = vmatpush1.xpose.msra.mxu0 0.0
        %4345 = vmatprep.subr.mxu0 0.0
        %4346 = vmatpush1.xpose.msra.mxu0 0.0
        %4347 = vmatprep.subr.mxu0 0.0
        %4348 = vmatpush1.xpose.msra.mxu0 0.0
        %4349 = vmatprep.subr.mxu0 0.0
        %4350 = vmatpush1.xpose.msra.mxu0 0.0
        %4351 = vmatprep.subr.mxu0 0.0
        %4352 = vmatpush1.xpose.msra.mxu0 0.0
        %4353 = vmatprep.subr.mxu0 0.0
        %4354 = vmatpush1.xpose.msra.mxu0 0.0
        %4355 = vmatprep.subr.mxu0 0.0
        %4356 = vmatpush1.xpose.msra.mxu0 0.0
        %4357 = vmatprep.subr.mxu0 0.0
        %4358 = vmatpush1.xpose.msra.mxu0 0.0
        %4359 = vmatprep.subr.mxu0 0.0
        %4360 = vmatpush1.xpose.msra.mxu0 0.0
        %4361 = vmatprep.subr.mxu0 0.0
        %4362 = vmatpush1.xpose.msra.mxu0 0.0
        %4363 = vmatprep.subr.mxu0 0.0
        %4364 = vmatpush1.xpose.msra.mxu0 0.0
        %4365 = vmatprep.subr.mxu0 0.0
        %4366 = vmatpush1.xpose.msra.mxu0 0.0
        %4367 = vmatprep.subr.mxu0 0.0
        %4368 = vmatpush1.xpose.msra.mxu0 0.0
        %4369 = vmatprep.subr.mxu0 0.0
        %4370 = vmatpush1.xpose.msra.mxu0 0.0
        %4371 = vmatprep.subr.mxu0 0.0
        %4372 = vmatpush1.xpose.msra.mxu0 0.0
        %4373 = vmatprep.subr.mxu0 0.0
        %4374 = vmatpush1.xpose.msra.mxu0 0.0
        %4375 = vmatprep.subr.mxu0 0.0
        %4376 = vmatpush1.xpose.msra.mxu0 0.0
        %4377 = vmatprep.mubr.f32.mxu0 0.0
        %4378 = vmatmul.mubr.f32.gmra.mrb[0].mxu0 %v4305
        %v4379 = vpop.f32.mrb[0].mxu0
        %v4380 = vadd.f32 0.0, %v4379
        %v4381 = vpop.f32.mrb[0].mxu0
        %4382 = vdwg.mxu0
        %v4383 = vsel %vm1038, %v3507, 0
        %v4386 = vsel %vm1038, %v3987, 0
        %v4389 = vsel %vm1038, %v3988, 0
        %4391 = vmatprep.subr.mxu0 0.0
        %4392 = vmatpush1.xpose.msra.mxu0 %v4386
        %4393 = vmatprep.subr.mxu0 0.0
        %4394 = vmatpush1.xpose.msra.mxu0 %v4389
        %4395 = vmatprep.subr.mxu0 0.0
        %4396 = vmatpush1.xpose.msra.mxu0 0.0
        %4397 = vmatprep.subr.mxu0 0.0
        %4398 = vmatpush1.xpose.msra.mxu0 0.0
        %4399 = vmatprep.subr.mxu0 0.0
        %4400 = vmatpush1.xpose.msra.mxu0 0.0
        %4401 = vmatprep.subr.mxu0 0.0
        %4402 = vmatpush1.xpose.msra.mxu0 0.0
        %4403 = vmatprep.subr.mxu0 0.0
        %4404 = vmatpush1.xpose.msra.mxu0 0.0
        %4405 = vmatprep.subr.mxu0 0.0
        %4406 = vmatpush1.xpose.msra.mxu0 0.0
        %4407 = vmatprep.subr.mxu0 0.0
        %4408 = vmatpush1.xpose.msra.mxu0 0.0
        %4409 = vmatprep.subr.mxu0 0.0
        %4410 = vmatpush1.xpose.msra.mxu0 0.0
        %4411 = vmatprep.subr.mxu0 0.0
        %4412 = vmatpush1.xpose.msra.mxu0 0.0
        %4413 = vmatprep.subr.mxu0 0.0
        %4414 = vmatpush1.xpose.msra.mxu0 0.0
        %4415 = vmatprep.subr.mxu0 0.0
        %4416 = vmatpush1.xpose.msra.mxu0 0.0
        %4417 = vmatprep.subr.mxu0 0.0
        %4418 = vmatpush1.xpose.msra.mxu0 0.0
        %4419 = vmatprep.subr.mxu0 0.0
        %4420 = vmatpush1.xpose.msra.mxu0 0.0
        %4421 = vmatprep.subr.mxu0 0.0
        %4422 = vmatpush1.xpose.msra.mxu0 0.0
        %4423 = vmatprep.subr.mxu0 0.0
        %4424 = vmatpush1.xpose.msra.mxu0 0.0
        %4425 = vmatprep.subr.mxu0 0.0
        %4426 = vmatpush1.xpose.msra.mxu0 0.0
        %4427 = vmatprep.subr.mxu0 0.0
        %4428 = vmatpush1.xpose.msra.mxu0 0.0
        %4429 = vmatprep.subr.mxu0 0.0
        %4430 = vmatpush1.xpose.msra.mxu0 0.0
        %4431 = vmatprep.subr.mxu0 0.0
        %4432 = vmatpush1.xpose.msra.mxu0 0.0
        %4433 = vmatprep.subr.mxu0 0.0
        %4434 = vmatpush1.xpose.msra.mxu0 0.0
        %4435 = vmatprep.subr.mxu0 0.0
        %4436 = vmatpush1.xpose.msra.mxu0 0.0
        %4437 = vmatprep.subr.mxu0 0.0
        %4438 = vmatpush1.xpose.msra.mxu0 0.0
        %4439 = vmatprep.subr.mxu0 0.0
        %4440 = vmatpush1.xpose.msra.mxu0 0.0
        %4441 = vmatprep.subr.mxu0 0.0
        %4442 = vmatpush1.xpose.msra.mxu0 0.0
        %4443 = vmatprep.subr.mxu0 0.0
        %4444 = vmatpush1.xpose.msra.mxu0 0.0
        %4445 = vmatprep.subr.mxu0 0.0
        %4446 = vmatpush1.xpose.msra.mxu0 0.0
        %4447 = vmatprep.subr.mxu0 0.0
        %4448 = vmatpush1.xpose.msra.mxu0 0.0
        %4449 = vmatprep.subr.mxu0 0.0
        %4450 = vmatpush1.xpose.msra.mxu0 0.0
        %4451 = vmatprep.subr.mxu0 0.0
        %4452 = vmatpush1.xpose.msra.mxu0 0.0
        %4453 = vmatprep.subr.mxu0 0.0
        %4454 = vmatpush1.xpose.msra.mxu0 0.0
        %4455 = vmatprep.mubr.f32.mxu0 0.0
        %4456 = vmatmul.mubr.f32.gmra.mrb[0].mxu0 %v4383
        %v4457 = vpop.f32.mrb[0].mxu0
        %v4458 = vadd.f32 0.0, %v4457
        %v4459 = vpop.f32.mrb[0].mxu0
        %4460 = vdwg.mxu0
        %v4461 = vsel %vm1038, %v3593, 0
        %v4464 = vsel %vm1038, %v3989, 0
        %v4467 = vsel %vm1038, %v3990, 0
        %4469 = vmatprep.subr.mxu0 0.0
        %4470 = vmatpush1.xpose.msra.mxu0 %v4464
        %4471 = vmatprep.subr.mxu0 0.0
        %4472 = vmatpush1.xpose.msra.mxu0 %v4467
        %4473 = vmatprep.subr.mxu0 0.0
        %4474 = vmatpush1.xpose.msra.mxu0 0.0
        %4475 = vmatprep.subr.mxu0 0.0
        %4476 = vmatpush1.xpose.msra.mxu0 0.0
        %4477 = vmatprep.subr.mxu0 0.0
        %4478 = vmatpush1.xpose.msra.mxu0 0.0
        %4479 = vmatprep.subr.mxu0 0.0
        %4480 = vmatpush1.xpose.msra.mxu0 0.0
        %4481 = vmatprep.subr.mxu0 0.0
        %4482 = vmatpush1.xpose.msra.mxu0 0.0
        %4483 = vmatprep.subr.mxu0 0.0
        %4484 = vmatpush1.xpose.msra.mxu0 0.0
        %4485 = vmatprep.subr.mxu0 0.0
        %4486 = vmatpush1.xpose.msra.mxu0 0.0
        %4487 = vmatprep.subr.mxu0 0.0
        %4488 = vmatpush1.xpose.msra.mxu0 0.0
        %4489 = vmatprep.subr.mxu0 0.0
        %4490 = vmatpush1.xpose.msra.mxu0 0.0
        %4491 = vmatprep.subr.mxu0 0.0
        %4492 = vmatpush1.xpose.msra.mxu0 0.0
        %4493 = vmatprep.subr.mxu0 0.0
        %4494 = vmatpush1.xpose.msra.mxu0 0.0
        %4495 = vmatprep.subr.mxu0 0.0
        %4496 = vmatpush1.xpose.msra.mxu0 0.0
        %4497 = vmatprep.subr.mxu0 0.0
        %4498 = vmatpush1.xpose.msra.mxu0 0.0
        %4499 = vmatprep.subr.mxu0 0.0
        %4500 = vmatpush1.xpose.msra.mxu0 0.0
        %4501 = vmatprep.subr.mxu0 0.0
        %4502 = vmatpush1.xpose.msra.mxu0 0.0
        %4503 = vmatprep.subr.mxu0 0.0
        %4504 = vmatpush1.xpose.msra.mxu0 0.0
        %4505 = vmatprep.subr.mxu0 0.0
        %4506 = vmatpush1.xpose.msra.mxu0 0.0
        %4507 = vmatprep.subr.mxu0 0.0
        %4508 = vmatpush1.xpose.msra.mxu0 0.0
        %4509 = vmatprep.subr.mxu0 0.0
        %4510 = vmatpush1.xpose.msra.mxu0 0.0
        %4511 = vmatprep.subr.mxu0 0.0
        %4512 = vmatpush1.xpose.msra.mxu0 0.0
        %4513 = vmatprep.subr.mxu0 0.0
        %4514 = vmatpush1.xpose.msra.mxu0 0.0
        %4515 = vmatprep.subr.mxu0 0.0
        %4516 = vmatpush1.xpose.msra.mxu0 0.0
        %4517 = vmatprep.subr.mxu0 0.0
        %4518 = vmatpush1.xpose.msra.mxu0 0.0
        %4519 = vmatprep.subr.mxu0 0.0
        %4520 = vmatpush1.xpose.msra.mxu0 0.0
        %4521 = vmatprep.subr.mxu0 0.0
        %4522 = vmatpush1.xpose.msra.mxu0 0.0
        %4523 = vmatprep.subr.mxu0 0.0
        %4524 = vmatpush1.xpose.msra.mxu0 0.0
        %4525 = vmatprep.subr.mxu0 0.0
        %4526 = vmatpush1.xpose.msra.mxu0 0.0
        %4527 = vmatprep.subr.mxu0 0.0
        %4528 = vmatpush1.xpose.msra.mxu0 0.0
        %4529 = vmatprep.subr.mxu0 0.0
        %4530 = vmatpush1.xpose.msra.mxu0 0.0
        %4531 = vmatprep.subr.mxu0 0.0
        %4532 = vmatpush1.xpose.msra.mxu0 0.0
        %4533 = vmatprep.mubr.f32.mxu0 0.0
        %4534 = vmatmul.mubr.f32.gmra.mrb[0].mxu0 %v4461
        %v4535 = vpop.f32.mrb[0].mxu0
        %v4536 = vadd.f32 0.0, %v4535
        %v4537 = vpop.f32.mrb[0].mxu0
        %4538 = vdwg.mxu0
        %v4539 = vsel %vm1038, %v3679, 0
        %v4542 = vsel %vm1038, %v3991, 0
        %v4545 = vsel %vm1038, %v3992, 0
        %4547 = vmatprep.subr.mxu0 0.0
        %4548 = vmatpush1.xpose.msra.mxu0 %v4542
        %4549 = vmatprep.subr.mxu0 0.0
        %4550 = vmatpush1.xpose.msra.mxu0 %v4545
        %4551 = vmatprep.subr.mxu0 0.0
        %4552 = vmatpush1.xpose.msra.mxu0 0.0
        %4553 = vmatprep.subr.mxu0 0.0
        %4554 = vmatpush1.xpose.msra.mxu0 0.0
        %4555 = vmatprep.subr.mxu0 0.0
        %4556 = vmatpush1.xpose.msra.mxu0 0.0
        %4557 = vmatprep.subr.mxu0 0.0
        %4558 = vmatpush1.xpose.msra.mxu0 0.0
        %4559 = vmatprep.subr.mxu0 0.0
        %4560 = vmatpush1.xpose.msra.mxu0 0.0
        %4561 = vmatprep.subr.mxu0 0.0
        %4562 = vmatpush1.xpose.msra.mxu0 0.0
        %4563 = vmatprep.subr.mxu0 0.0
        %4564 = vmatpush1.xpose.msra.mxu0 0.0
        %4565 = vmatprep.subr.mxu0 0.0
        %4566 = vmatpush1.xpose.msra.mxu0 0.0
        %4567 = vmatprep.subr.mxu0 0.0
        %4568 = vmatpush1.xpose.msra.mxu0 0.0
        %4569 = vmatprep.subr.mxu0 0.0
        %4570 = vmatpush1.xpose.msra.mxu0 0.0
        %4571 = vmatprep.subr.mxu0 0.0
        %4572 = vmatpush1.xpose.msra.mxu0 0.0
        %4573 = vmatprep.subr.mxu0 0.0
        %4574 = vmatpush1.xpose.msra.mxu0 0.0
        %4575 = vmatprep.subr.mxu0 0.0
        %4576 = vmatpush1.xpose.msra.mxu0 0.0
        %4577 = vmatprep.subr.mxu0 0.0
        %4578 = vmatpush1.xpose.msra.mxu0 0.0
        %4579 = vmatprep.subr.mxu0 0.0
        %4580 = vmatpush1.xpose.msra.mxu0 0.0
        %4581 = vmatprep.subr.mxu0 0.0
        %4582 = vmatpush1.xpose.msra.mxu0 0.0
        %4583 = vmatprep.subr.mxu0 0.0
        %4584 = vmatpush1.xpose.msra.mxu0 0.0
        %4585 = vmatprep.subr.mxu0 0.0
        %4586 = vmatpush1.xpose.msra.mxu0 0.0
        %4587 = vmatprep.subr.mxu0 0.0
        %4588 = vmatpush1.xpose.msra.mxu0 0.0
        %4589 = vmatprep.subr.mxu0 0.0
        %4590 = vmatpush1.xpose.msra.mxu0 0.0
        %4591 = vmatprep.subr.mxu0 0.0
        %4592 = vmatpush1.xpose.msra.mxu0 0.0
        %4593 = vmatprep.subr.mxu0 0.0
        %4594 = vmatpush1.xpose.msra.mxu0 0.0
        %4595 = vmatprep.subr.mxu0 0.0
        %4596 = vmatpush1.xpose.msra.mxu0 0.0
        %4597 = vmatprep.subr.mxu0 0.0
        %4598 = vmatpush1.xpose.msra.mxu0 0.0
        %4599 = vmatprep.subr.mxu0 0.0
        %4600 = vmatpush1.xpose.msra.mxu0 0.0
        %4601 = vmatprep.subr.mxu0 0.0
        %4602 = vmatpush1.xpose.msra.mxu0 0.0
        %4603 = vmatprep.subr.mxu0 0.0
        %4604 = vmatpush1.xpose.msra.mxu0 0.0
        %4605 = vmatprep.subr.mxu0 0.0
        %4606 = vmatpush1.xpose.msra.mxu0 0.0
        %4607 = vmatprep.subr.mxu0 0.0
        %4608 = vmatpush1.xpose.msra.mxu0 0.0
        %4609 = vmatprep.subr.mxu0 0.0
        %4610 = vmatpush1.xpose.msra.mxu0 0.0
        %4611 = vmatprep.mubr.f32.mxu0 0.0
        %4612 = vmatmul.mubr.f32.gmra.mrb[0].mxu0 %v4539
        %v4613 = vpop.f32.mrb[0].mxu0
        %v4614 = vadd.f32 0.0, %v4613
        %v4615 = vpop.f32.mrb[0].mxu0
        %4616 = vdwg.mxu0
        %4617 = vrot.lane.b32.xlu0 %v221, 92
        %v4618 = vpop.permute.xlu0 %4617
        %v4619 = vsel %vm365, %v4618, 0
        %v4622 = vsel %vm248, %v4068, 0
        %4624 = vmatprep.subr.mxu0 0.0
        %4625 = vmatpush1.msra.mxu0 %v4622
        %4626 = vmatprep.subr.mxu0 0.0
        %4627 = vmatpush1.msra.mxu0 0.0
        %4628 = vmatprep.subr.mxu0 0.0
        %4629 = vmatpush1.msra.mxu0 0.0
        %4630 = vmatprep.subr.mxu0 0.0
        %4631 = vmatpush1.msra.mxu0 0.0
        %4632 = vmatprep.subr.mxu0 0.0
        %4633 = vmatpush1.msra.mxu0 0.0
        %4634 = vmatprep.subr.mxu0 0.0
        %4635 = vmatpush1.msra.mxu0 0.0
        %4636 = vmatprep.subr.mxu0 0.0
        %4637 = vmatpush1.msra.mxu0 0.0
        %4638 = vmatprep.subr.mxu0 0.0
        %4639 = vmatpush1.msra.mxu0 0.0
        %4640 = vmatprep.subr.mxu0 0.0
        %4641 = vmatpush1.msra.mxu0 0.0
        %4642 = vmatprep.subr.mxu0 0.0
        %4643 = vmatpush1.msra.mxu0 0.0
        %4644 = vmatprep.subr.mxu0 0.0
        %4645 = vmatpush1.msra.mxu0 0.0
        %4646 = vmatprep.subr.mxu0 0.0
        %4647 = vmatpush1.msra.mxu0 0.0
        %4648 = vmatprep.subr.mxu0 0.0
        %4649 = vmatpush1.msra.mxu0 0.0
        %4650 = vmatprep.subr.mxu0 0.0
        %4651 = vmatpush1.msra.mxu0 0.0
        %4652 = vmatprep.subr.mxu0 0.0
        %4653 = vmatpush1.msra.mxu0 0.0
        %4654 = vmatprep.subr.mxu0 0.0
        %4655 = vmatpush1.msra.mxu0 0.0
        %4656 = vmatprep.subr.mxu0 0.0
        %4657 = vmatpush1.msra.mxu0 0.0
        %4658 = vmatprep.subr.mxu0 0.0
        %4659 = vmatpush1.msra.mxu0 0.0
        %4660 = vmatprep.subr.mxu0 0.0
        %4661 = vmatpush1.msra.mxu0 0.0
        %4662 = vmatprep.subr.mxu0 0.0
        %4663 = vmatpush1.msra.mxu0 0.0
        %4664 = vmatprep.subr.mxu0 0.0
        %4665 = vmatpush1.msra.mxu0 0.0
        %4666 = vmatprep.subr.mxu0 0.0
        %4667 = vmatpush1.msra.mxu0 0.0
        %4668 = vmatprep.subr.mxu0 0.0
        %4669 = vmatpush1.msra.mxu0 0.0
        %4670 = vmatprep.subr.mxu0 0.0
        %4671 = vmatpush1.msra.mxu0 0.0
        %4672 = vmatprep.subr.mxu0 0.0
        %4673 = vmatpush1.msra.mxu0 0.0
        %4674 = vmatprep.subr.mxu0 0.0
        %4675 = vmatpush1.msra.mxu0 0.0
        %4676 = vmatprep.subr.mxu0 0.0
        %4677 = vmatpush1.msra.mxu0 0.0
        %4678 = vmatprep.subr.mxu0 0.0
        %4679 = vmatpush1.msra.mxu0 0.0
        %4680 = vmatprep.subr.mxu0 0.0
        %4681 = vmatpush1.msra.mxu0 0.0
        %4682 = vmatprep.subr.mxu0 0.0
        %4683 = vmatpush1.msra.mxu0 0.0
        %4684 = vmatprep.subr.mxu0 0.0
        %4685 = vmatpush1.msra.mxu0 0.0
        %4686 = vmatprep.subr.mxu0 0.0
        %4687 = vmatpush1.msra.mxu0 0.0
        %4688 = vmatprep.mubr.f32.mxu0 0.0
        %4689 = vmatmul.mubr.f32.gmra.mrb[0].mxu0 %v4619
        %v4690 = vpop.f32.mrb[0].mxu0
        %v4691 = vadd.f32 0.0, %v4690
        %v4692 = vpop.f32.mrb[0].mxu0
        %4693 = vdwg.mxu0
        %v4695 = vsel %vm248, %v4146, 0
        %4697 = vmatprep.subr.mxu0 0.0
        %4698 = vmatpush1.msra.mxu0 %v4695
        %4699 = vmatprep.subr.mxu0 0.0
        %4700 = vmatpush1.msra.mxu0 0.0
        %4701 = vmatprep.subr.mxu0 0.0
        %4702 = vmatpush1.msra.mxu0 0.0
        %4703 = vmatprep.subr.mxu0 0.0
        %4704 = vmatpush1.msra.mxu0 0.0
        %4705 = vmatprep.subr.mxu0 0.0
        %4706 = vmatpush1.msra.mxu0 0.0
        %4707 = vmatprep.subr.mxu0 0.0
        %4708 = vmatpush1.msra.mxu0 0.0
        %4709 = vmatprep.subr.mxu0 0.0
        %4710 = vmatpush1.msra.mxu0 0.0
        %4711 = vmatprep.subr.mxu0 0.0
        %4712 = vmatpush1.msra.mxu0 0.0
        %4713 = vmatprep.subr.mxu0 0.0
        %4714 = vmatpush1.msra.mxu0 0.0
        %4715 = vmatprep.subr.mxu0 0.0
        %4716 = vmatpush1.msra.mxu0 0.0
        %4717 = vmatprep.subr.mxu0 0.0
        %4718 = vmatpush1.msra.mxu0 0.0
        %4719 = vmatprep.subr.mxu0 0.0
        %4720 = vmatpush1.msra.mxu0 0.0
        %4721 = vmatprep.subr.mxu0 0.0
        %4722 = vmatpush1.msra.mxu0 0.0
        %4723 = vmatprep.subr.mxu0 0.0
        %4724 = vmatpush1.msra.mxu0 0.0
        %4725 = vmatprep.subr.mxu0 0.0
        %4726 = vmatpush1.msra.mxu0 0.0
        %4727 = vmatprep.subr.mxu0 0.0
        %4728 = vmatpush1.msra.mxu0 0.0
        %4729 = vmatprep.subr.mxu0 0.0
        %4730 = vmatpush1.msra.mxu0 0.0
        %4731 = vmatprep.subr.mxu0 0.0
        %4732 = vmatpush1.msra.mxu0 0.0
        %4733 = vmatprep.subr.mxu0 0.0
        %4734 = vmatpush1.msra.mxu0 0.0
        %4735 = vmatprep.subr.mxu0 0.0
        %4736 = vmatpush1.msra.mxu0 0.0
        %4737 = vmatprep.subr.mxu0 0.0
        %4738 = vmatpush1.msra.mxu0 0.0
        %4739 = vmatprep.subr.mxu0 0.0
        %4740 = vmatpush1.msra.mxu0 0.0
        %4741 = vmatprep.subr.mxu0 0.0
        %4742 = vmatpush1.msra.mxu0 0.0
        %4743 = vmatprep.subr.mxu0 0.0
        %4744 = vmatpush1.msra.mxu0 0.0
        %4745 = vmatprep.subr.mxu0 0.0
        %4746 = vmatpush1.msra.mxu0 0.0
        %4747 = vmatprep.subr.mxu0 0.0
        %4748 = vmatpush1.msra.mxu0 0.0
        %4749 = vmatprep.subr.mxu0 0.0
        %4750 = vmatpush1.msra.mxu0 0.0
        %4751 = vmatprep.subr.mxu0 0.0
        %4752 = vmatpush1.msra.mxu0 0.0
        %4753 = vmatprep.subr.mxu0 0.0
        %4754 = vmatpush1.msra.mxu0 0.0
        %4755 = vmatprep.subr.mxu0 0.0
        %4756 = vmatpush1.msra.mxu0 0.0
        %4757 = vmatprep.subr.mxu0 0.0
        %4758 = vmatpush1.msra.mxu0 0.0
        %4759 = vmatprep.subr.mxu0 0.0
        %4760 = vmatpush1.msra.mxu0 0.0
        %4761 = vmatprep.mubr.f32.mxu0 0.0
        %4762 = vmatmul.mubr.f32.gmra.mrb[0].mxu0 %v4619
        %v4763 = vpop.f32.mrb[0].mxu0
        %v4764 = vadd.f32 0.0, %v4763
        %v4765 = vpop.f32.mrb[0].mxu0
        %4766 = vdwg.mxu0
        %v4768 = vsel %vm248, %v4224, 0
        %4770 = vmatprep.subr.mxu0 0.0
        %4771 = vmatpush1.msra.mxu0 %v4768
        %4772 = vmatprep.subr.mxu0 0.0
        %4773 = vmatpush1.msra.mxu0 0.0
        %4774 = vmatprep.subr.mxu0 0.0
        %4775 = vmatpush1.msra.mxu0 0.0
        %4776 = vmatprep.subr.mxu0 0.0
        %4777 = vmatpush1.msra.mxu0 0.0
        %4778 = vmatprep.subr.mxu0 0.0
        %4779 = vmatpush1.msra.mxu0 0.0
        %4780 = vmatprep.subr.mxu0 0.0
        %4781 = vmatpush1.msra.mxu0 0.0
        %4782 = vmatprep.subr.mxu0 0.0
        %4783 = vmatpush1.msra.mxu0 0.0
        %4784 = vmatprep.subr.mxu0 0.0
        %4785 = vmatpush1.msra.mxu0 0.0
        %4786 = vmatprep.subr.mxu0 0.0
        %4787 = vmatpush1.msra.mxu0 0.0
        %4788 = vmatprep.subr.mxu0 0.0
        %4789 = vmatpush1.msra.mxu0 0.0
        %4790 = vmatprep.subr.mxu0 0.0
        %4791 = vmatpush1.msra.mxu0 0.0
        %4792 = vmatprep.subr.mxu0 0.0
        %4793 = vmatpush1.msra.mxu0 0.0
        %4794 = vmatprep.subr.mxu0 0.0
        %4795 = vmatpush1.msra.mxu0 0.0
        %4796 = vmatprep.subr.mxu0 0.0
        %4797 = vmatpush1.msra.mxu0 0.0
        %4798 = vmatprep.subr.mxu0 0.0
        %4799 = vmatpush1.msra.mxu0 0.0
        %4800 = vmatprep.subr.mxu0 0.0
        %4801 = vmatpush1.msra.mxu0 0.0
        %4802 = vmatprep.subr.mxu0 0.0
        %4803 = vmatpush1.msra.mxu0 0.0
        %4804 = vmatprep.subr.mxu0 0.0
        %4805 = vmatpush1.msra.mxu0 0.0
        %4806 = vmatprep.subr.mxu0 0.0
        %4807 = vmatpush1.msra.mxu0 0.0
        %4808 = vmatprep.subr.mxu0 0.0
        %4809 = vmatpush1.msra.mxu0 0.0
        %4810 = vmatprep.subr.mxu0 0.0
        %4811 = vmatpush1.msra.mxu0 0.0
        %4812 = vmatprep.subr.mxu0 0.0
        %4813 = vmatpush1.msra.mxu0 0.0
        %4814 = vmatprep.subr.mxu0 0.0
        %4815 = vmatpush1.msra.mxu0 0.0
        %4816 = vmatprep.subr.mxu0 0.0
        %4817 = vmatpush1.msra.mxu0 0.0
        %4818 = vmatprep.subr.mxu0 0.0
        %4819 = vmatpush1.msra.mxu0 0.0
        %4820 = vmatprep.subr.mxu0 0.0
        %4821 = vmatpush1.msra.mxu0 0.0
        %4822 = vmatprep.subr.mxu0 0.0
        %4823 = vmatpush1.msra.mxu0 0.0
        %4824 = vmatprep.subr.mxu0 0.0
        %4825 = vmatpush1.msra.mxu0 0.0
        %4826 = vmatprep.subr.mxu0 0.0
        %4827 = vmatpush1.msra.mxu0 0.0
        %4828 = vmatprep.subr.mxu0 0.0
        %4829 = vmatpush1.msra.mxu0 0.0
        %4830 = vmatprep.subr.mxu0 0.0
        %4831 = vmatpush1.msra.mxu0 0.0
        %4832 = vmatprep.subr.mxu0 0.0
        %4833 = vmatpush1.msra.mxu0 0.0
        %4834 = vmatprep.mubr.f32.mxu0 0.0
        %4835 = vmatmul.mubr.f32.gmra.mrb[0].mxu0 %v4619
        %v4836 = vpop.f32.mrb[0].mxu0
        %v4837 = vadd.f32 0.0, %v4836
        %v4838 = vpop.f32.mrb[0].mxu0
        %4839 = vdwg.mxu0
        %v4841 = vsel %vm248, %v4302, 0
        %4843 = vmatprep.subr.mxu0 0.0
        %4844 = vmatpush1.msra.mxu0 %v4841
        %4845 = vmatprep.subr.mxu0 0.0
        %4846 = vmatpush1.msra.mxu0 0.0
        %4847 = vmatprep.subr.mxu0 0.0
        %4848 = vmatpush1.msra.mxu0 0.0
        %4849 = vmatprep.subr.mxu0 0.0
        %4850 = vmatpush1.msra.mxu0 0.0
        %4851 = vmatprep.subr.mxu0 0.0
        %4852 = vmatpush1.msra.mxu0 0.0
        %4853 = vmatprep.subr.mxu0 0.0
        %4854 = vmatpush1.msra.mxu0 0.0
        %4855 = vmatprep.subr.mxu0 0.0
        %4856 = vmatpush1.msra.mxu0 0.0
        %4857 = vmatprep.subr.mxu0 0.0
        %4858 = vmatpush1.msra.mxu0 0.0
        %4859 = vmatprep.subr.mxu0 0.0
        %4860 = vmatpush1.msra.mxu0 0.0
        %4861 = vmatprep.subr.mxu0 0.0
        %4862 = vmatpush1.msra.mxu0 0.0
        %4863 = vmatprep.subr.mxu0 0.0
        %4864 = vmatpush1.msra.mxu0 0.0
        %4865 = vmatprep.subr.mxu0 0.0
        %4866 = vmatpush1.msra.mxu0 0.0
        %4867 = vmatprep.subr.mxu0 0.0
        %4868 = vmatpush1.msra.mxu0 0.0
        %4869 = vmatprep.subr.mxu0 0.0
        %4870 = vmatpush1.msra.mxu0 0.0
        %4871 = vmatprep.subr.mxu0 0.0
        %4872 = vmatpush1.msra.mxu0 0.0
        %4873 = vmatprep.subr.mxu0 0.0
        %4874 = vmatpush1.msra.mxu0 0.0
        %4875 = vmatprep.subr.mxu0 0.0
        %4876 = vmatpush1.msra.mxu0 0.0
        %4877 = vmatprep.subr.mxu0 0.0
        %4878 = vmatpush1.msra.mxu0 0.0
        %4879 = vmatprep.subr.mxu0 0.0
        %4880 = vmatpush1.msra.mxu0 0.0
        %4881 = vmatprep.subr.mxu0 0.0
        %4882 = vmatpush1.msra.mxu0 0.0
        %4883 = vmatprep.subr.mxu0 0.0
        %4884 = vmatpush1.msra.mxu0 0.0
        %4885 = vmatprep.subr.mxu0 0.0
        %4886 = vmatpush1.msra.mxu0 0.0
        %4887 = vmatprep.subr.mxu0 0.0
        %4888 = vmatpush1.msra.mxu0 0.0
        %4889 = vmatprep.subr.mxu0 0.0
        %4890 = vmatpush1.msra.mxu0 0.0
        %4891 = vmatprep.subr.mxu0 0.0
        %4892 = vmatpush1.msra.mxu0 0.0
        %4893 = vmatprep.subr.mxu0 0.0
        %4894 = vmatpush1.msra.mxu0 0.0
        %4895 = vmatprep.subr.mxu0 0.0
        %4896 = vmatpush1.msra.mxu0 0.0
        %4897 = vmatprep.subr.mxu0 0.0
        %4898 = vmatpush1.msra.mxu0 0.0
        %4899 = vmatprep.subr.mxu0 0.0
        %4900 = vmatpush1.msra.mxu0 0.0
        %4901 = vmatprep.subr.mxu0 0.0
        %4902 = vmatpush1.msra.mxu0 0.0
        %4903 = vmatprep.subr.mxu0 0.0
        %4904 = vmatpush1.msra.mxu0 0.0
        %4905 = vmatprep.subr.mxu0 0.0
        %4906 = vmatpush1.msra.mxu0 0.0
        %4907 = vmatprep.mubr.f32.mxu0 0.0
        %4908 = vmatmul.mubr.f32.gmra.mrb[0].mxu0 %v4619
        %v4909 = vpop.f32.mrb[0].mxu0
        %v4910 = vadd.f32 0.0, %v4909
        %v4911 = vpop.f32.mrb[0].mxu0
        %4912 = vdwg.mxu0
        %v4914 = vsel %vm248, %v4380, 0
        %4916 = vmatprep.subr.mxu0 0.0
        %4917 = vmatpush1.msra.mxu0 %v4914
        %4918 = vmatprep.subr.mxu0 0.0
        %4919 = vmatpush1.msra.mxu0 0.0
        %4920 = vmatprep.subr.mxu0 0.0
        %4921 = vmatpush1.msra.mxu0 0.0
        %4922 = vmatprep.subr.mxu0 0.0
        %4923 = vmatpush1.msra.mxu0 0.0
        %4924 = vmatprep.subr.mxu0 0.0
        %4925 = vmatpush1.msra.mxu0 0.0
        %4926 = vmatprep.subr.mxu0 0.0
        %4927 = vmatpush1.msra.mxu0 0.0
        %4928 = vmatprep.subr.mxu0 0.0
        %4929 = vmatpush1.msra.mxu0 0.0
        %4930 = vmatprep.subr.mxu0 0.0
        %4931 = vmatpush1.msra.mxu0 0.0
        %4932 = vmatprep.subr.mxu0 0.0
        %4933 = vmatpush1.msra.mxu0 0.0
        %4934 = vmatprep.subr.mxu0 0.0
        %4935 = vmatpush1.msra.mxu0 0.0
        %4936 = vmatprep.subr.mxu0 0.0
        %4937 = vmatpush1.msra.mxu0 0.0
        %4938 = vmatprep.subr.mxu0 0.0
        %4939 = vmatpush1.msra.mxu0 0.0
        %4940 = vmatprep.subr.mxu0 0.0
        %4941 = vmatpush1.msra.mxu0 0.0
        %4942 = vmatprep.subr.mxu0 0.0
        %4943 = vmatpush1.msra.mxu0 0.0
        %4944 = vmatprep.subr.mxu0 0.0
        %4945 = vmatpush1.msra.mxu0 0.0
        %4946 = vmatprep.subr.mxu0 0.0
        %4947 = vmatpush1.msra.mxu0 0.0
        %4948 = vmatprep.subr.mxu0 0.0
        %4949 = vmatpush1.msra.mxu0 0.0
        %4950 = vmatprep.subr.mxu0 0.0
        %4951 = vmatpush1.msra.mxu0 0.0
        %4952 = vmatprep.subr.mxu0 0.0
        %4953 = vmatpush1.msra.mxu0 0.0
        %4954 = vmatprep.subr.mxu0 0.0
        %4955 = vmatpush1.msra.mxu0 0.0
        %4956 = vmatprep.subr.mxu0 0.0
        %4957 = vmatpush1.msra.mxu0 0.0
        %4958 = vmatprep.subr.mxu0 0.0
        %4959 = vmatpush1.msra.mxu0 0.0
        %4960 = vmatprep.subr.mxu0 0.0
        %4961 = vmatpush1.msra.mxu0 0.0
        %4962 = vmatprep.subr.mxu0 0.0
        %4963 = vmatpush1.msra.mxu0 0.0
        %4964 = vmatprep.subr.mxu0 0.0
        %4965 = vmatpush1.msra.mxu0 0.0
        %4966 = vmatprep.subr.mxu0 0.0
        %4967 = vmatpush1.msra.mxu0 0.0
        %4968 = vmatprep.subr.mxu0 0.0
        %4969 = vmatpush1.msra.mxu0 0.0
        %4970 = vmatprep.subr.mxu0 0.0
        %4971 = vmatpush1.msra.mxu0 0.0
        %4972 = vmatprep.subr.mxu0 0.0
        %4973 = vmatpush1.msra.mxu0 0.0
        %4974 = vmatprep.subr.mxu0 0.0
        %4975 = vmatpush1.msra.mxu0 0.0
        %4976 = vmatprep.subr.mxu0 0.0
        %4977 = vmatpush1.msra.mxu0 0.0
        %4978 = vmatprep.subr.mxu0 0.0
        %4979 = vmatpush1.msra.mxu0 0.0
        %4980 = vmatprep.mubr.f32.mxu0 0.0
        %4981 = vmatmul.mubr.f32.gmra.mrb[0].mxu0 %v4619
        %v4982 = vpop.f32.mrb[0].mxu0
        %v4983 = vadd.f32 0.0, %v4982
        %v4984 = vpop.f32.mrb[0].mxu0
        %4985 = vdwg.mxu0
        %v4987 = vsel %vm248, %v4458, 0
        %4989 = vmatprep.subr.mxu0 0.0
        %4990 = vmatpush1.msra.mxu0 %v4987
        %4991 = vmatprep.subr.mxu0 0.0
        %4992 = vmatpush1.msra.mxu0 0.0
        %4993 = vmatprep.subr.mxu0 0.0
        %4994 = vmatpush1.msra.mxu0 0.0
        %4995 = vmatprep.subr.mxu0 0.0
        %4996 = vmatpush1.msra.mxu0 0.0
        %4997 = vmatprep.subr.mxu0 0.0
        %4998 = vmatpush1.msra.mxu0 0.0
        %4999 = vmatprep.subr.mxu0 0.0
        %5000 = vmatpush1.msra.mxu0 0.0
        %5001 = vmatprep.subr.mxu0 0.0
        %5002 = vmatpush1.msra.mxu0 0.0
        %5003 = vmatprep.subr.mxu0 0.0
        %5004 = vmatpush1.msra.mxu0 0.0
        %5005 = vmatprep.subr.mxu0 0.0
        %5006 = vmatpush1.msra.mxu0 0.0
        %5007 = vmatprep.subr.mxu0 0.0
        %5008 = vmatpush1.msra.mxu0 0.0
        %5009 = vmatprep.subr.mxu0 0.0
        %5010 = vmatpush1.msra.mxu0 0.0
        %5011 = vmatprep.subr.mxu0 0.0
        %5012 = vmatpush1.msra.mxu0 0.0
        %5013 = vmatprep.subr.mxu0 0.0
        %5014 = vmatpush1.msra.mxu0 0.0
        %5015 = vmatprep.subr.mxu0 0.0
        %5016 = vmatpush1.msra.mxu0 0.0
        %5017 = vmatprep.subr.mxu0 0.0
        %5018 = vmatpush1.msra.mxu0 0.0
        %5019 = vmatprep.subr.mxu0 0.0
        %5020 = vmatpush1.msra.mxu0 0.0
        %5021 = vmatprep.subr.mxu0 0.0
        %5022 = vmatpush1.msra.mxu0 0.0
        %5023 = vmatprep.subr.mxu0 0.0
        %5024 = vmatpush1.msra.mxu0 0.0
        %5025 = vmatprep.subr.mxu0 0.0
        %5026 = vmatpush1.msra.mxu0 0.0
        %5027 = vmatprep.subr.mxu0 0.0
        %5028 = vmatpush1.msra.mxu0 0.0
        %5029 = vmatprep.subr.mxu0 0.0
        %5030 = vmatpush1.msra.mxu0 0.0
        %5031 = vmatprep.subr.mxu0 0.0
        %5032 = vmatpush1.msra.mxu0 0.0
        %5033 = vmatprep.subr.mxu0 0.0
        %5034 = vmatpush1.msra.mxu0 0.0
        %5035 = vmatprep.subr.mxu0 0.0
        %5036 = vmatpush1.msra.mxu0 0.0
        %5037 = vmatprep.subr.mxu0 0.0
        %5038 = vmatpush1.msra.mxu0 0.0
        %5039 = vmatprep.subr.mxu0 0.0
        %5040 = vmatpush1.msra.mxu0 0.0
        %5041 = vmatprep.subr.mxu0 0.0
        %5042 = vmatpush1.msra.mxu0 0.0
        %5043 = vmatprep.subr.mxu0 0.0
        %5044 = vmatpush1.msra.mxu0 0.0
        %5045 = vmatprep.subr.mxu0 0.0
        %5046 = vmatpush1.msra.mxu0 0.0
        %5047 = vmatprep.subr.mxu0 0.0
        %5048 = vmatpush1.msra.mxu0 0.0
        %5049 = vmatprep.subr.mxu0 0.0
        %5050 = vmatpush1.msra.mxu0 0.0
        %5051 = vmatprep.subr.mxu0 0.0
        %5052 = vmatpush1.msra.mxu0 0.0
        %5053 = vmatprep.mubr.f32.mxu0 0.0
        %5054 = vmatmul.mubr.f32.gmra.mrb[0].mxu0 %v4619
        %v5055 = vpop.f32.mrb[0].mxu0
        %v5056 = vadd.f32 0.0, %v5055
        %v5057 = vpop.f32.mrb[0].mxu0
        %5058 = vdwg.mxu0
        %v5060 = vsel %vm248, %v4536, 0
        %5062 = vmatprep.subr.mxu0 0.0
        %5063 = vmatpush1.msra.mxu0 %v5060
        %5064 = vmatprep.subr.mxu0 0.0
        %5065 = vmatpush1.msra.mxu0 0.0
        %5066 = vmatprep.subr.mxu0 0.0
        %5067 = vmatpush1.msra.mxu0 0.0
        %5068 = vmatprep.subr.mxu0 0.0
        %5069 = vmatpush1.msra.mxu0 0.0
        %5070 = vmatprep.subr.mxu0 0.0
        %5071 = vmatpush1.msra.mxu0 0.0
        %5072 = vmatprep.subr.mxu0 0.0
        %5073 = vmatpush1.msra.mxu0 0.0
        %5074 = vmatprep.subr.mxu0 0.0
        %5075 = vmatpush1.msra.mxu0 0.0
        %5076 = vmatprep.subr.mxu0 0.0
        %5077 = vmatpush1.msra.mxu0 0.0
        %5078 = vmatprep.subr.mxu0 0.0
        %5079 = vmatpush1.msra.mxu0 0.0
        %5080 = vmatprep.subr.mxu0 0.0
        %5081 = vmatpush1.msra.mxu0 0.0
        %5082 = vmatprep.subr.mxu0 0.0
        %5083 = vmatpush1.msra.mxu0 0.0
        %5084 = vmatprep.subr.mxu0 0.0
        %5085 = vmatpush1.msra.mxu0 0.0
        %5086 = vmatprep.subr.mxu0 0.0
        %5087 = vmatpush1.msra.mxu0 0.0
        %5088 = vmatprep.subr.mxu0 0.0
        %5089 = vmatpush1.msra.mxu0 0.0
        %5090 = vmatprep.subr.mxu0 0.0
        %5091 = vmatpush1.msra.mxu0 0.0
        %5092 = vmatprep.subr.mxu0 0.0
        %5093 = vmatpush1.msra.mxu0 0.0
        %5094 = vmatprep.subr.mxu0 0.0
        %5095 = vmatpush1.msra.mxu0 0.0
        %5096 = vmatprep.subr.mxu0 0.0
        %5097 = vmatpush1.msra.mxu0 0.0
        %5098 = vmatprep.subr.mxu0 0.0
        %5099 = vmatpush1.msra.mxu0 0.0
        %5100 = vmatprep.subr.mxu0 0.0
        %5101 = vmatpush1.msra.mxu0 0.0
        %5102 = vmatprep.subr.mxu0 0.0
        %5103 = vmatpush1.msra.mxu0 0.0
        %5104 = vmatprep.subr.mxu0 0.0
        %5105 = vmatpush1.msra.mxu0 0.0
        %5106 = vmatprep.subr.mxu0 0.0
        %5107 = vmatpush1.msra.mxu0 0.0
        %5108 = vmatprep.subr.mxu0 0.0
        %5109 = vmatpush1.msra.mxu0 0.0
        %5110 = vmatprep.subr.mxu0 0.0
        %5111 = vmatpush1.msra.mxu0 0.0
        %5112 = vmatprep.subr.mxu0 0.0
        %5113 = vmatpush1.msra.mxu0 0.0
        %5114 = vmatprep.subr.mxu0 0.0
        %5115 = vmatpush1.msra.mxu0 0.0
        %5116 = vmatprep.subr.mxu0 0.0
        %5117 = vmatpush1.msra.mxu0 0.0
        %5118 = vmatprep.subr.mxu0 0.0
        %5119 = vmatpush1.msra.mxu0 0.0
        %5120 = vmatprep.subr.mxu0 0.0
        %5121 = vmatpush1.msra.mxu0 0.0
        %5122 = vmatprep.subr.mxu0 0.0
        %5123 = vmatpush1.msra.mxu0 0.0
        %5124 = vmatprep.subr.mxu0 0.0
        %5125 = vmatpush1.msra.mxu0 0.0
        %5126 = vmatprep.mubr.f32.mxu0 0.0
        %5127 = vmatmul.mubr.f32.gmra.mrb[0].mxu0 %v4619
        %v5128 = vpop.f32.mrb[0].mxu0
        %v5129 = vadd.f32 0.0, %v5128
        %v5130 = vpop.f32.mrb[0].mxu0
        %5131 = vdwg.mxu0
        %v5133 = vsel %vm248, %v4614, 0
        %5135 = vmatprep.subr.mxu0 0.0
        %5136 = vmatpush1.msra.mxu0 %v5133
        %5137 = vmatprep.subr.mxu0 0.0
        %5138 = vmatpush1.msra.mxu0 0.0
        %5139 = vmatprep.subr.mxu0 0.0
        %5140 = vmatpush1.msra.mxu0 0.0
        %5141 = vmatprep.subr.mxu0 0.0
        %5142 = vmatpush1.msra.mxu0 0.0
        %5143 = vmatprep.subr.mxu0 0.0
        %5144 = vmatpush1.msra.mxu0 0.0
        %5145 = vmatprep.subr.mxu0 0.0
        %5146 = vmatpush1.msra.mxu0 0.0
        %5147 = vmatprep.subr.mxu0 0.0
        %5148 = vmatpush1.msra.mxu0 0.0
        %5149 = vmatprep.subr.mxu0 0.0
        %5150 = vmatpush1.msra.mxu0 0.0
        %5151 = vmatprep.subr.mxu0 0.0
        %5152 = vmatpush1.msra.mxu0 0.0
        %5153 = vmatprep.subr.mxu0 0.0
        %5154 = vmatpush1.msra.mxu0 0.0
        %5155 = vmatprep.subr.mxu0 0.0
        %5156 = vmatpush1.msra.mxu0 0.0
        %5157 = vmatprep.subr.mxu0 0.0
        %5158 = vmatpush1.msra.mxu0 0.0
        %5159 = vmatprep.subr.mxu0 0.0
        %5160 = vmatpush1.msra.mxu0 0.0
        %5161 = vmatprep.subr.mxu0 0.0
        %5162 = vmatpush1.msra.mxu0 0.0
        %5163 = vmatprep.subr.mxu0 0.0
        %5164 = vmatpush1.msra.mxu0 0.0
        %5165 = vmatprep.subr.mxu0 0.0
        %5166 = vmatpush1.msra.mxu0 0.0
        %5167 = vmatprep.subr.mxu0 0.0
        %5168 = vmatpush1.msra.mxu0 0.0
        %5169 = vmatprep.subr.mxu0 0.0
        %5170 = vmatpush1.msra.mxu0 0.0
        %5171 = vmatprep.subr.mxu0 0.0
        %5172 = vmatpush1.msra.mxu0 0.0
        %5173 = vmatprep.subr.mxu0 0.0
        %5174 = vmatpush1.msra.mxu0 0.0
        %5175 = vmatprep.subr.mxu0 0.0
        %5176 = vmatpush1.msra.mxu0 0.0
        %5177 = vmatprep.subr.mxu0 0.0
        %5178 = vmatpush1.msra.mxu0 0.0
        %5179 = vmatprep.subr.mxu0 0.0
        %5180 = vmatpush1.msra.mxu0 0.0
        %5181 = vmatprep.subr.mxu0 0.0
        %5182 = vmatpush1.msra.mxu0 0.0
        %5183 = vmatprep.subr.mxu0 0.0
        %5184 = vmatpush1.msra.mxu0 0.0
        %5185 = vmatprep.subr.mxu0 0.0
        %5186 = vmatpush1.msra.mxu0 0.0
        %5187 = vmatprep.subr.mxu0 0.0
        %5188 = vmatpush1.msra.mxu0 0.0
        %5189 = vmatprep.subr.mxu0 0.0
        %5190 = vmatpush1.msra.mxu0 0.0
        %5191 = vmatprep.subr.mxu0 0.0
        %5192 = vmatpush1.msra.mxu0 0.0
        %5193 = vmatprep.subr.mxu0 0.0
        %5194 = vmatpush1.msra.mxu0 0.0
        %5195 = vmatprep.subr.mxu0 0.0
        %5196 = vmatpush1.msra.mxu0 0.0
        %5197 = vmatprep.subr.mxu0 0.0
        %5198 = vmatpush1.msra.mxu0 0.0
        %5199 = vmatprep.mubr.f32.mxu0 0.0
        %5200 = vmatmul.mubr.f32.gmra.mrb[0].mxu0 %v4619
        %v5201 = vpop.f32.mrb[0].mxu0
        %v5202 = vadd.f32 0.0, %v5201
        %v5203 = vpop.f32.mrb[0].mxu0
        %5204 = vdwg.mxu0
        %v5205 = vadd.f32 %v2559, %v4691
        %v5206 = vadd.f32 %v2632, %v4764
        %v5207 = vadd.f32 %v2705, %v4837
        %v5208 = vadd.f32 %v2778, %v4910
        %v5209 = vadd.f32 %v2851, %v4983
        %v5210 = vadd.f32 %v2924, %v5056
        %v5211 = vadd.f32 %v2997, %v5129
        %v5212 = vadd.f32 %v3070, %v5202
        %5213 = vset.pattern.permute.xlu0 48
        %5214 = vperm.xlu0 %5213, %v221
        %v5215 = vpop.permute.xlu0 %5214
        %v5217 = vadd.f32 %v5205, %v5215
        %v5218 = vadd.f32 %v5206, %v5215
        %v5219 = vadd.f32 %v5207, %v5215
        %v5220 = vadd.f32 %v5208, %v5215
        %v5221 = vadd.f32 %v5209, %v5215
        %v5222 = vadd.f32 %v5210, %v5215
        %v5223 = vadd.f32 %v5211, %v5215
        %v5224 = vadd.f32 %v5212, %v5215
        %v5225 = vxor.u32 %v5217, 2147483648
        %v5226 = vxor.u32 %v5218, 2147483648
        %v5227 = vxor.u32 %v5219, 2147483648
        %v5228 = vxor.u32 %v5220, 2147483648
        %v5229 = vxor.u32 %v5221, 2147483648
        %v5230 = vxor.u32 %v5222, 2147483648
        %v5231 = vxor.u32 %v5223, 2147483648
        %v5232 = vxor.u32 %v5224, 2147483648
        %v5233 = vmul.f32 %v5225, 1.442695
        %v5234 = vpow.pop %v5233
        %v5235 = vmul.f32 %v5226, 1.442695
        %v5236 = vpow.pop %v5235
        %v5237 = vmul.f32 %v5227, 1.442695
        %v5238 = vpow.pop %v5237
        %v5239 = vmul.f32 %v5228, 1.442695
        %v5240 = vpow.pop %v5239
        %v5241 = vmul.f32 %v5229, 1.442695
        %v5242 = vpow.pop %v5241
        %v5243 = vmul.f32 %v5230, 1.442695
        %v5244 = vpow.pop %v5243
        %v5245 = vmul.f32 %v5231, 1.442695
        %v5246 = vpow.pop %v5245
        %v5247 = vmul.f32 %v5232, 1.442695
        %v5248 = vpow.pop %v5247
        %v5249 = vadd.f32 %v5234, 1.0
        %v5250 = vadd.f32 %v5236, 1.0
        %v5251 = vadd.f32 %v5238, 1.0
        %v5252 = vadd.f32 %v5240, 1.0
        %v5253 = vadd.f32 %v5242, 1.0
        %v5254 = vadd.f32 %v5244, 1.0
        %v5255 = vadd.f32 %v5246, 1.0
        %v5256 = vadd.f32 %v5248, 1.0
        %v5257 = vrcp.pop %v5249
        %v5258 = vmul.f32 1.0, %v5257
        %v5259 = vrcp.pop %v5250
        %v5260 = vmul.f32 1.0, %v5259
        %v5261 = vrcp.pop %v5251
        %v5262 = vmul.f32 1.0, %v5261
        %v5263 = vrcp.pop %v5252
        %v5264 = vmul.f32 1.0, %v5263
        %v5265 = vrcp.pop %v5253
        %v5266 = vmul.f32 1.0, %v5265
        %v5267 = vrcp.pop %v5254
        %v5268 = vmul.f32 1.0, %v5267
        %v5269 = vrcp.pop %v5255
        %v5270 = vmul.f32 1.0, %v5269
        %v5271 = vrcp.pop %v5256
        %v5272 = vmul.f32 1.0, %v5271
        %v5273 = vmul.f32 %v5258, %v2487
        %v5274 = vmul.f32 %v5260, %v2563
        %v5275 = vmul.f32 %v5262, %v2636
        %v5276 = vmul.f32 %v5264, %v2709
        %v5277 = vmul.f32 %v5266, %v2782
        %v5278 = vmul.f32 %v5268, %v2855
        %v5279 = vmul.f32 %v5270, %v2928
        %v5280 = vmul.f32 %v5272, %v3001
        %v5281 = vmul.f32 %v5273, 2.0
        %v5282 = vmul.f32 %v5274, 2.0
        %v5283 = vmul.f32 %v5275, 2.0
        %v5284 = vmul.f32 %v5276, 2.0
        %v5285 = vmul.f32 %v5277, 2.0
        %v5286 = vmul.f32 %v5278, 2.0
        %v5287 = vmul.f32 %v5279, 2.0
        %v5288 = vmul.f32 %v5280, 2.0
        %vm5289 = vcmask 130048
        %5290 = vst.msk [vmem:[%s182] sm:$0xff] %vm5289, %v5281
        %5291 = vst.msk [vmem:[%s182 + $0x8] sm:$0xff] %vm5289, %v5282
        %5292 = vst.msk [vmem:[%s182 + $0x10] sm:$0xff] %vm5289, %v5283
        %5293 = vst.msk [vmem:[%s182 + $0x18] sm:$0xff] %vm5289, %v5284
        %5294 = vst.msk [vmem:[%s182 + $0x20] sm:$0xff] %vm5289, %v5285
        %5295 = vst.msk [vmem:[%s182 + $0x28] sm:$0xff] %vm5289, %v5286
        %5296 = vst.msk [vmem:[%s182 + $0x30] sm:$0xff] %vm5289, %v5287
        %5297 = vst.msk [vmem:[%s182 + $0x38] sm:$0xff] %vm5289, %v5288
        %s5298 = sand.u32 %s98, 1
        %s5299 = scalar_lea.sflag [#allocation3], %s5298
        %s5300 = sand.u32 %s98, 1
        %s5301 = smul.addr %s5300, 64
        %s5302 = scalar_lea.vmem [#allocation2], %s5301
        // Predicated region
        $region33: #{simulation_attention_batched.1} parent=31 // pred_check
          %p5303 = pneg %p108
        $region34: #{simulation_attention_batched.1} parent=31 // pred_check_branch
          %5305 = sbr.rel (%p5303) target = $region36
        $region35: #{simulation_attention_batched.1} parent=31 // pred_region
          %s5306 = smul.u32 8, %s17
          %s5308 = ssub.s32 1024, 1024
          %5309 = vsyncadd %s5299, %s5308
          %s5310 = smul.addr %s5306, 128
          %s5311 = scalar_lea.hbm %s3, %s5310
          %s5312 = sshll.u32 %s5302, 4
          %s5313 = int_to_ptr.vmem [resolvable:$true] %s5312
          %5318 = dma.vmem_to_hbm [thread:$0]  %s5313, 1024, %s5311, %s5299, 128, 128, 8
        $region36: #{simulation_attention_batched.1} parent=31 // pred_fallthru
          _
      $region32: #{simulation_attention_batched.1} parent=5 // pred_fallthru
        _
      %p5319 = scmp.le.s32.totalorder 2, %s12
      // Predicated region
      $region37: #{simulation_attention_batched.1} parent=5 // pred_check
        %p5320 = pneg %p5319
      $region38: #{simulation_attention_batched.1} parent=5 // pred_check_branch
        %5322 = sbr.rel (%p5320) target = $region40
      $region39: #{simulation_attention_batched.1} parent=5 // pred_region
        %s5323 = ssub.s32 %s12, 2
        // Predicated region
        $region41: #{simulation_attention_batched.1} parent=39 // pred_check
          %p5324 = pneg %p114
        $region42: #{simulation_attention_batched.1} parent=39 // pred_check_branch
          %5326 = sbr.rel (%p5324) target = $region44
        $region43: #{simulation_attention_batched.1} parent=39 // pred_region
          %s5327 = sand.u32 %s99, 1
          %s5328 = scalar_lea.sflag [#allocation3], %s5327
          %s5329 = sand.u32 %s99, 1
          %s5330 = smul.addr %s5329, 64
          %s5331 = scalar_lea.vmem [#allocation2], %s5330
          %5332 = dma.done %s5328, 1024
        $region44: #{simulation_attention_batched.1} parent=39 // pred_fallthru
          _
      $region40: #{simulation_attention_batched.1} parent=5 // pred_fallthru
        _
    $region6: #{simulation_attention_batched.1} parent=1 // loop_footer
      %s16 = sadd.s32 1, %s12
    $region7: #{simulation_attention_batched.1} parent=1 // loop_footer_branch
      %11 = sbr.rel target = $region3
    $region8: #{simulation_attention_batched.1} parent=1 // loop_exit
      _
    %5333 = vsyncpa [#allocation3], 1
    %s5334 = scalar_lea.sflag [#allocation3], 1
    %5335 = vsyncpa %s5334, 1

</llo_original>
